<compile_context>
chip_gen: v7x
topology: tpu7x:2x2x1
jax: 0.10.0
libtpu: 0.0.40
codegen_flags: <defaults>
</compile_context>

<pallas_src>
import functools

import jax
import jax.numpy as jnp
import numpy as np
from jax.experimental import pallas as pl
from jax.experimental.pallas import tpu as pltpu

# ---------------- config (Decoder defaults) ----------------
HIDDEN = 128
NUM_LAYERS = 8
NUM_LAYERS_VIEW = 1
SKIPS = (4,)
L_POS = 10                 # max_freq_pos_enc
L_VIEW = 4                 # max_freq_pos_enc_vd
Z_DIM = 64
OUT_FEAT = 128
DOWNSCALE = 2.0
EMB = 3 * L_POS * 2        # 60
EMB_V = 3 * L_VIEW * 2     # 24
PACK = 128                 # lane-dense packed input width (60 + 24 + pad)


# ---------------- plain-JAX glue: positional encoding ----------------
def pos_encode(p, L, downscale):
    """gamma(p) = cat_i [sin(2^i*pi*p), cos(2^i*pi*p)] (matches the torch order)."""
    # TODO(synk): 'gauss' positional-encoding variant not implemented (default is 'normal').
    p = p / downscale
    feats = []
    for i in range(L):
        a = (2.0 ** i) * jnp.pi * p
        feats.append(jnp.concatenate([jnp.sin(a), jnp.cos(a)], axis=-1))
    return jnp.concatenate(feats, axis=-1)


# ---------------- Pallas kernel: the full decoder MLP ----------------
def decoder_kernel(x_ref, bias0_ref, skipb_ref, viewb_ref,
                   w_big_ref, w_lay_ref, b_lay_ref,
                   w_fv_ref, w_sig_t_ref, b_sig_ref,
                   w_fo_ref, b_fo_ref,
                   feat_ref, sig_ref):
    f32 = jnp.float32
    bf16 = jnp.bfloat16

    x = x_ref[0]                                                 # (TN, 128) bf16

    # fused [fc_in | fc_p_skip | fc_view] matmul -> (TN, 384) f32
    r = jnp.dot(x, w_big_ref[...], preferred_element_type=f32)
    h = jnp.maximum(r[:, :HIDDEN] + bias0_ref[0], 0.0)           # relu(fc_in(p)+fc_z(z_s))
    p_skip = r[:, HIDDEN:2 * HIDDEN] + skipb_ref[0]              # fc_p_skip(p)+fc_z_skip(z_s)
    d_view = r[:, 2 * HIDDEN:]                                   # fc_view(gamma(d)) (bias folded)

    # hidden MLP: per-layer weight slabs streamed from VMEM (no full-stack load)
    for i in range(NUM_LAYERS - 1):
        h = jnp.maximum(
            jnp.dot(h.astype(bf16), w_lay_ref[i], preferred_element_type=f32)
            + b_lay_ref[i], 0.0)
        if (i + 1) in SKIPS and i < NUM_LAYERS - 2:
            h = h + p_skip

    h_b = h.astype(bf16)

    # sigma head: lane-dense (1, TN) row via trans_b matmul (w_sig^T @ h^T)
    sig_row = jax.lax.dot_general(
        w_sig_t_ref[...], h_b,
        dimension_numbers=(((1,), (1,)), ((), ())),
        preferred_element_type=f32)                              # (1, TN)
    sig_ref[...] = (sig_row + b_sig_ref[...])[None]              # (1, 1, TN)

    # feature head: feat_view(h) + fc_z_view(z_a) + fc_view(gamma(d)), relu, feat_out
    # TODO(synk): num_layers_view > 1 view-MLP branch not emitted (default has 1 layer).
    dec = jnp.dot(h_b, w_fv_ref[...], preferred_element_type=f32) + d_view + viewb_ref[0]
    dec = jnp.maximum(dec, 0.0)
    feat = jnp.dot(dec.astype(bf16), w_fo_ref[...], preferred_element_type=f32) + b_fo_ref[...]
    feat_ref[...] = feat[None]                                   # (1, TN, OUT_FEAT)


# ---------------- wrapper ----------------
def decoder_forward(params, p_in, ray_d, z_s, z_a, tn=512):
    B, N, _ = p_in.shape
    tn = min(tn, N)
    assert N % tn == 0
    assert tn % 128 == 0 or tn == N
    f32 = jnp.float32
    bf16 = jnp.bfloat16

    # positional encodings, packed lane-dense into one (B, N, 128) bf16 array
    p_enc = pos_encode(p_in, L_POS, DOWNSCALE)                            # (B,N,60)
    rd = ray_d / jnp.linalg.norm(ray_d, axis=-1, keepdims=True)
    d_enc = pos_encode(rd, L_VIEW, DOWNSCALE)                             # (B,N,24)
    pad = PACK - EMB - EMB_V
    x = jnp.concatenate([p_enc, d_enc, jnp.zeros((B, N, pad), f32)],
                        axis=-1).astype(bf16)                             # (B,N,128)

    # per-batch latent terms hoisted out of the kernel (M=1 matmuls)
    bias0 = (params["b_in"] + z_s @ params["w_z"] + params["b_z"]
             ).reshape(B, 1, HIDDEN).astype(f32)
    skipb = (z_s @ params["w_zs"] + params["b_zs"] + params["b_ps"]
             ).reshape(B, 1, HIDDEN).astype(f32)
    viewb = (params["b_fv"] + params["b_v"] + z_a @ params["w_zv"] + params["b_zv"]
             ).reshape(B, 1, HIDDEN).astype(f32)

    # fused [fc_in | fc_p_skip | fc_view] weight, zero-padded to (128, 384)
    w_big = jnp.zeros((PACK, 3 * HIDDEN), f32)
    w_big = w_big.at[:EMB, :HIDDEN].set(params["w_in"])
    w_big = w_big.at[:EMB, HIDDEN:2 * HIDDEN].set(params["w_ps"])
    w_big = w_big.at[EMB:EMB + EMB_V, 2 * HIDDEN:].set(params["w_v"])
    w_big = w_big.astype(bf16)

    w_lay = params["w_lay"].astype(bf16)                                  # (7,128,128)
    b_lay = params["b_lay"].reshape(NUM_LAYERS - 1, 1, HIDDEN).astype(f32)
    w_fv = params["w_fv"].astype(bf16)
    w_sig_t = params["w_sig"].T.astype(bf16)                              # (1,128)
    b_sig = params["b_sig"].reshape(1, 1).astype(f32)
    w_fo = params["w_fo"].astype(bf16)
    b_fo = params["b_fo"].reshape(1, OUT_FEAT).astype(f32)

    weights = [w_big, w_lay, b_lay, w_fv, w_sig_t, b_sig, w_fo, b_fo]

    def full_spec(arr):
        nd = arr.ndim
        return pl.BlockSpec(arr.shape, lambda b, n, _nd=nd: (0,) * _nd)

    in_specs = [
        pl.BlockSpec((1, tn, PACK), lambda b, n: (b, n, 0)),
        pl.BlockSpec((1, 1, HIDDEN), lambda b, n: (b, 0, 0)),
        pl.BlockSpec((1, 1, HIDDEN), lambda b, n: (b, 0, 0)),
        pl.BlockSpec((1, 1, HIDDEN), lambda b, n: (b, 0, 0)),
    ] + [full_spec(w) for w in weights]

    out_specs = [
        pl.BlockSpec((1, tn, OUT_FEAT), lambda b, n: (b, n, 0)),
        pl.BlockSpec((1, 1, tn), lambda b, n: (b, 0, n)),
    ]
    out_shape = (jax.ShapeDtypeStruct((B, N, OUT_FEAT), f32),
                 jax.ShapeDtypeStruct((B, 1, N), f32))

    feat, sigma = pl.pallas_call(
        decoder_kernel,
        grid=(B, N // tn),
        in_specs=in_specs,
        out_specs=out_specs,
        out_shape=out_shape,
        compiler_params=pltpu.CompilerParams(
            dimension_semantics=("parallel", "parallel")),
    )(x, bias0, skipb, viewb, *weights)
    return feat, sigma[:, 0, :]


# ---------------- pure-JAX reference (for correctness check) ----------------
def decoder_ref(params, p_in, ray_d, z_s, z_a):
    p = pos_encode(p_in, L_POS, DOWNSCALE)
    h = p @ params["w_in"] + params["b_in"]
    h = h + (z_s @ params["w_z"] + params["b_z"])[:, None, :]
    h = jnp.maximum(h, 0.0)
    zskip = (z_s @ params["w_zs"] + params["b_zs"])[:, None, :]
    pskip = p @ params["w_ps"] + params["b_ps"]
    for i in range(NUM_LAYERS - 1):
        h = jnp.maximum(h @ params["w_lay"][i] + params["b_lay"][i], 0.0)
        if (i + 1) in SKIPS and i < NUM_LAYERS - 2:
            h = h + zskip + pskip
    sigma = (h @ params["w_sig"] + params["b_sig"])[..., 0]
    dec = h @ params["w_fv"] + params["b_fv"]
    dec = dec + (z_a @ params["w_zv"] + params["b_zv"])[:, None, :]
    rd = ray_d / jnp.linalg.norm(ray_d, axis=-1, keepdims=True)
    d = pos_encode(rd, L_VIEW, DOWNSCALE)
    dec = jnp.maximum(dec + d @ params["w_v"] + params["b_v"], 0.0)
    feat = dec @ params["w_fo"] + params["b_fo"]
    return feat, sigma


# ---------------- deterministic parameter init ----------------
def init_params(key):
    def lin(k, fin, fout):
        kw, kb = jax.random.split(k)
        bound = float(1.0 / np.sqrt(fin))
        w = jax.random.uniform(kw, (fin, fout), jnp.float32, -bound, bound)
        b = jax.random.uniform(kb, (1, fout), jnp.float32, -bound, bound)
        return w, b

    keys = jax.random.split(key, 10)
    params = {}
    params["w_in"], params["b_in"] = lin(keys[0], EMB, HIDDEN)
    params["w_z"], params["b_z"] = lin(keys[1], Z_DIM, HIDDEN)
    wl, bl = [], []
    for i in range(NUM_LAYERS - 1):
        w, b = lin(jax.random.fold_in(keys[2], i), HIDDEN, HIDDEN)
        wl.append(w)
        bl.append(b[0])
    params["w_lay"] = jnp.stack(wl)     # (7, 128, 128)
    params["b_lay"] = jnp.stack(bl)     # (7, 128)
    params["w_zs"], params["b_zs"] = lin(keys[3], Z_DIM, HIDDEN)
    params["w_ps"], params["b_ps"] = lin(keys[4], EMB, HIDDEN)
    params["w_sig"], params["b_sig"] = lin(keys[5], HIDDEN, 1)
    params["w_fv"], params["b_fv"] = lin(keys[6], HIDDEN, HIDDEN)
    params["w_zv"], params["b_zv"] = lin(keys[7], Z_DIM, HIDDEN)
    params["w_v"], params["b_v"] = lin(keys[8], EMB_V, HIDDEN)
    params["w_fo"], params["b_fo"] = lin(keys[9], HIDDEN, OUT_FEAT)
    return params


if __name__ == "__main__":
    key = jax.random.PRNGKey(0)
    kp, kd, kzs, kza, kparam = jax.random.split(key, 5)

    B, N = 2, 512
    p_in = jax.random.normal(kp, (B, N, 3), jnp.float32)
    ray_d = jax.random.normal(kd, (B, N, 3), jnp.float32)
    z_s = jax.random.normal(kzs, (B, Z_DIM), jnp.float32)
    z_a = jax.random.normal(kza, (B, Z_DIM), jnp.float32)
    params = init_params(kparam)

    fwd = jax.jit(functools.partial(decoder_forward, tn=256))
    out_feat, out_sigma = fwd(params, p_in, ray_d, z_s, z_a)
    jax.block_until_ready((out_feat, out_sigma))

    ref_feat, ref_sigma = decoder_ref(params, p_in, ray_d, z_s, z_a)
    # tolerance accounts for bf16 matmul operands (f32 accumulation)
    np.testing.assert_allclose(np.asarray(out_feat), np.asarray(ref_feat),
                               rtol=2e-2, atol=2e-2)
    np.testing.assert_allclose(np.asarray(out_sigma), np.asarray(ref_sigma),
                               rtol=2e-2, atol=2e-2)
    assert out_feat.shape == (B, N, OUT_FEAT)
    assert out_sigma.shape == (B, N)
    print("KERNEL_OK")
</pallas_src>

<mosaic_0001>
module attributes {stable_mosaic.version = 11 : i64} {
  func.func @decoder_kernel(%arg0: i32, %arg1: i32, %arg2: memref<1x256x128xbf16, #tpu.memory_space<vmem>>, %arg3: memref<1x1x128xf32, #tpu.memory_space<vmem>>, %arg4: memref<1x1x128xf32, #tpu.memory_space<vmem>>, %arg5: memref<1x1x128xf32, #tpu.memory_space<vmem>>, %arg6: memref<128x384xbf16, #tpu.memory_space<vmem>>, %arg7: memref<7x128x128xbf16, #tpu.memory_space<vmem>>, %arg8: memref<7x1x128xf32, #tpu.memory_space<vmem>>, %arg9: memref<128x128xbf16, #tpu.memory_space<vmem>>, %arg10: memref<1x128xbf16, #tpu.memory_space<vmem>>, %arg11: memref<1x1xf32, #tpu.memory_space<vmem>>, %arg12: memref<128x128xbf16, #tpu.memory_space<vmem>>, %arg13: memref<1x128xf32, #tpu.memory_space<vmem>>, %arg14: memref<1x256x128xf32, #tpu.memory_space<vmem>>, %arg15: memref<1x1x256xf32, #tpu.memory_space<vmem>>) attributes {dimension_semantics = [#tpu.dimension_semantics<parallel>, #tpu.dimension_semantics<parallel>], iteration_bounds = array<i64: 2, 2>, scalar_prefetch = 0 : i64, scratch_operands = 0 : i64, tpu.core_type = #tpu.core_type<tc>, window_params = [{transform_indices = @transform_0, window_bounds = array<i64: 1, 256, 128>}, {transform_indices = @transform_1, window_bounds = array<i64: 1, 1, 128>}, {transform_indices = @transform_2, window_bounds = array<i64: 1, 1, 128>}, {transform_indices = @transform_3, window_bounds = array<i64: 1, 1, 128>}, {pipeline_mode = #tpu.pipeline_mode<synchronous>, transform_indices = @transform_4, window_bounds = array<i64: 128, 384>}, {pipeline_mode = #tpu.pipeline_mode<synchronous>, transform_indices = @transform_5, window_bounds = array<i64: 7, 128, 128>}, {pipeline_mode = #tpu.pipeline_mode<synchronous>, transform_indices = @transform_6, window_bounds = array<i64: 7, 1, 128>}, {pipeline_mode = #tpu.pipeline_mode<synchronous>, transform_indices = @transform_7, window_bounds = array<i64: 128, 128>}, {pipeline_mode = #tpu.pipeline_mode<synchronous>, transform_indices = @transform_8, window_bounds = array<i64: 1, 128>}, {pipeline_mode = #tpu.pipeline_mode<synchronous>, transform_indices = @transform_9, window_bounds = array<i64: 1, 1>}, {pipeline_mode = #tpu.pipeline_mode<synchronous>, transform_indices = @transform_10, window_bounds = array<i64: 128, 128>}, {pipeline_mode = #tpu.pipeline_mode<synchronous>, transform_indices = @transform_11, window_bounds = array<i64: 1, 128>}, {transform_indices = @transform_12, window_bounds = array<i64: 1, 256, 128>}, {transform_indices = @transform_13, window_bounds = array<i64: 1, 1, 256>}]} {
    %c0 = arith.constant 0 : index
    %c0_0 = arith.constant 0 : index
    %c0_1 = arith.constant 0 : index
    %0 = vector.load %arg2[%c0, %c0_0, %c0_1] : memref<1x256x128xbf16, #tpu.memory_space<vmem>>, vector<1x256x128xbf16>
    %1 = vector.shape_cast %0 : vector<1x256x128xbf16> to vector<256x128xbf16>
    %c0_2 = arith.constant 0 : index
    %c0_3 = arith.constant 0 : index
    %2 = vector.load %arg6[%c0_2, %c0_3] : memref<128x384xbf16, #tpu.memory_space<vmem>>, vector<128x384xbf16>
    %cst = arith.constant dense<0.000000e+00> : vector<256x384xf32>
    %3 = tpu.matmul %1, %2, %cst {dimension_numbers = #tpu.dot_dimension_numbers<[1], [0], [0], [1], [0, 0, 1, 1], [], []>} : vector<256x128xbf16>, vector<128x384xbf16>, vector<256x384xf32> -> vector<256x384xf32>
    %4 = vector.extract_strided_slice %3 {offsets = [0, 0], sizes = [256, 128], strides = [1, 1]} : vector<256x384xf32> to vector<256x128xf32>
    %c0_4 = arith.constant 0 : index
    %c0_5 = arith.constant 0 : index
    %c0_6 = arith.constant 0 : index
    %5 = vector.load %arg3[%c0_4, %c0_5, %c0_6] : memref<1x1x128xf32, #tpu.memory_space<vmem>>, vector<1x1x128xf32>
    %6 = vector.shape_cast %5 : vector<1x1x128xf32> to vector<1x128xf32>
    %7 = vector.broadcast %6 : vector<1x128xf32> to vector<256x128xf32>
    %8 = arith.addf %4, %7 : vector<256x128xf32>
    %cst_7 = arith.constant 0.000000e+00 : f32
    %9 = vector.broadcast %cst_7 : f32 to vector<256x128xf32>
    %10 = arith.maximumf %8, %9 : vector<256x128xf32>
    %11 = vector.extract_strided_slice %3 {offsets = [0, 128], sizes = [256, 128], strides = [1, 1]} : vector<256x384xf32> to vector<256x128xf32>
    %c0_8 = arith.constant 0 : index
    %c0_9 = arith.constant 0 : index
    %c0_10 = arith.constant 0 : index
    %12 = vector.load %arg4[%c0_8, %c0_9, %c0_10] : memref<1x1x128xf32, #tpu.memory_space<vmem>>, vector<1x1x128xf32>
    %13 = vector.shape_cast %12 : vector<1x1x128xf32> to vector<1x128xf32>
    %14 = vector.broadcast %13 : vector<1x128xf32> to vector<256x128xf32>
    %15 = arith.addf %11, %14 : vector<256x128xf32>
    %16 = vector.extract_strided_slice %3 {offsets = [0, 256], sizes = [256, 128], strides = [1, 1]} : vector<256x384xf32> to vector<256x128xf32>
    %17 = arith.truncf %10 : vector<256x128xf32> to vector<256x128xbf16>
    %c0_11 = arith.constant 0 : index
    %c0_12 = arith.constant 0 : index
    %c0_13 = arith.constant 0 : index
    %18 = vector.load %arg7[%c0_11, %c0_12, %c0_13] : memref<7x128x128xbf16, #tpu.memory_space<vmem>>, vector<1x128x128xbf16>
    %19 = vector.shape_cast %18 : vector<1x128x128xbf16> to vector<128x128xbf16>
    %cst_14 = arith.constant dense<0.000000e+00> : vector<256x128xf32>
    %20 = tpu.matmul %17, %19, %cst_14 {dimension_numbers = #tpu.dot_dimension_numbers<[1], [0], [0], [1], [0, 0, 1, 1], [], []>} : vector<256x128xbf16>, vector<128x128xbf16>, vector<256x128xf32> -> vector<256x128xf32>
    %c0_15 = arith.constant 0 : index
    %c0_16 = arith.constant 0 : index
    %c0_17 = arith.constant 0 : index
    %21 = vector.load %arg8[%c0_15, %c0_16, %c0_17] : memref<7x1x128xf32, #tpu.memory_space<vmem>>, vector<1x1x128xf32>
    %22 = vector.shape_cast %21 : vector<1x1x128xf32> to vector<1x128xf32>
    %23 = vector.broadcast %22 : vector<1x128xf32> to vector<256x128xf32>
    %24 = arith.addf %20, %23 : vector<256x128xf32>
    %cst_18 = arith.constant 0.000000e+00 : f32
    %25 = vector.broadcast %cst_18 : f32 to vector<256x128xf32>
    %26 = arith.maximumf %24, %25 : vector<256x128xf32>
    %27 = arith.truncf %26 : vector<256x128xf32> to vector<256x128xbf16>
    %c1 = arith.constant 1 : index
    %c0_19 = arith.constant 0 : index
    %c0_20 = arith.constant 0 : index
    %28 = vector.load %arg7[%c1, %c0_19, %c0_20] : memref<7x128x128xbf16, #tpu.memory_space<vmem>>, vector<1x128x128xbf16>
    %29 = vector.shape_cast %28 : vector<1x128x128xbf16> to vector<128x128xbf16>
    %cst_21 = arith.constant dense<0.000000e+00> : vector<256x128xf32>
    %30 = tpu.matmul %27, %29, %cst_21 {dimension_numbers = #tpu.dot_dimension_numbers<[1], [0], [0], [1], [0, 0, 1, 1], [], []>} : vector<256x128xbf16>, vector<128x128xbf16>, vector<256x128xf32> -> vector<256x128xf32>
    %c1_22 = arith.constant 1 : index
    %c0_23 = arith.constant 0 : index
    %c0_24 = arith.constant 0 : index
    %31 = vector.load %arg8[%c1_22, %c0_23, %c0_24] : memref<7x1x128xf32, #tpu.memory_space<vmem>>, vector<1x1x128xf32>
    %32 = vector.shape_cast %31 : vector<1x1x128xf32> to vector<1x128xf32>
    %33 = vector.broadcast %32 : vector<1x128xf32> to vector<256x128xf32>
    %34 = arith.addf %30, %33 : vector<256x128xf32>
    %cst_25 = arith.constant 0.000000e+00 : f32
    %35 = vector.broadcast %cst_25 : f32 to vector<256x128xf32>
    %36 = arith.maximumf %34, %35 : vector<256x128xf32>
    %37 = arith.truncf %36 : vector<256x128xf32> to vector<256x128xbf16>
    %c2 = arith.constant 2 : index
    %c0_26 = arith.constant 0 : index
    %c0_27 = arith.constant 0 : index
    %38 = vector.load %arg7[%c2, %c0_26, %c0_27] : memref<7x128x128xbf16, #tpu.memory_space<vmem>>, vector<1x128x128xbf16>
    %39 = vector.shape_cast %38 : vector<1x128x128xbf16> to vector<128x128xbf16>
    %cst_28 = arith.constant dense<0.000000e+00> : vector<256x128xf32>
    %40 = tpu.matmul %37, %39, %cst_28 {dimension_numbers = #tpu.dot_dimension_numbers<[1], [0], [0], [1], [0, 0, 1, 1], [], []>} : vector<256x128xbf16>, vector<128x128xbf16>, vector<256x128xf32> -> vector<256x128xf32>
    %c2_29 = arith.constant 2 : index
    %c0_30 = arith.constant 0 : index
    %c0_31 = arith.constant 0 : index
    %41 = vector.load %arg8[%c2_29, %c0_30, %c0_31] : memref<7x1x128xf32, #tpu.memory_space<vmem>>, vector<1x1x128xf32>
    %42 = vector.shape_cast %41 : vector<1x1x128xf32> to vector<1x128xf32>
    %43 = vector.broadcast %42 : vector<1x128xf32> to vector<256x128xf32>
    %44 = arith.addf %40, %43 : vector<256x128xf32>
    %cst_32 = arith.constant 0.000000e+00 : f32
    %45 = vector.broadcast %cst_32 : f32 to vector<256x128xf32>
    %46 = arith.maximumf %44, %45 : vector<256x128xf32>
    %47 = arith.truncf %46 : vector<256x128xf32> to vector<256x128xbf16>
    %c3 = arith.constant 3 : index
    %c0_33 = arith.constant 0 : index
    %c0_34 = arith.constant 0 : index
    %48 = vector.load %arg7[%c3, %c0_33, %c0_34] : memref<7x128x128xbf16, #tpu.memory_space<vmem>>, vector<1x128x128xbf16>
    %49 = vector.shape_cast %48 : vector<1x128x128xbf16> to vector<128x128xbf16>
    %cst_35 = arith.constant dense<0.000000e+00> : vector<256x128xf32>
    %50 = tpu.matmul %47, %49, %cst_35 {dimension_numbers = #tpu.dot_dimension_numbers<[1], [0], [0], [1], [0, 0, 1, 1], [], []>} : vector<256x128xbf16>, vector<128x128xbf16>, vector<256x128xf32> -> vector<256x128xf32>
    %c3_36 = arith.constant 3 : index
    %c0_37 = arith.constant 0 : index
    %c0_38 = arith.constant 0 : index
    %51 = vector.load %arg8[%c3_36, %c0_37, %c0_38] : memref<7x1x128xf32, #tpu.memory_space<vmem>>, vector<1x1x128xf32>
    %52 = vector.shape_cast %51 : vector<1x1x128xf32> to vector<1x128xf32>
    %53 = vector.broadcast %52 : vector<1x128xf32> to vector<256x128xf32>
    %54 = arith.addf %50, %53 : vector<256x128xf32>
    %cst_39 = arith.constant 0.000000e+00 : f32
    %55 = vector.broadcast %cst_39 : f32 to vector<256x128xf32>
    %56 = arith.maximumf %54, %55 : vector<256x128xf32>
    %57 = arith.addf %56, %15 : vector<256x128xf32>
    %58 = arith.truncf %57 : vector<256x128xf32> to vector<256x128xbf16>
    %c4 = arith.constant 4 : index
    %c0_40 = arith.constant 0 : index
    %c0_41 = arith.constant 0 : index
    %59 = vector.load %arg7[%c4, %c0_40, %c0_41] : memref<7x128x128xbf16, #tpu.memory_space<vmem>>, vector<1x128x128xbf16>
    %60 = vector.shape_cast %59 : vector<1x128x128xbf16> to vector<128x128xbf16>
    %cst_42 = arith.constant dense<0.000000e+00> : vector<256x128xf32>
    %61 = tpu.matmul %58, %60, %cst_42 {dimension_numbers = #tpu.dot_dimension_numbers<[1], [0], [0], [1], [0, 0, 1, 1], [], []>} : vector<256x128xbf16>, vector<128x128xbf16>, vector<256x128xf32> -> vector<256x128xf32>
    %c4_43 = arith.constant 4 : index
    %c0_44 = arith.constant 0 : index
    %c0_45 = arith.constant 0 : index
    %62 = vector.load %arg8[%c4_43, %c0_44, %c0_45] : memref<7x1x128xf32, #tpu.memory_space<vmem>>, vector<1x1x128xf32>
    %63 = vector.shape_cast %62 : vector<1x1x128xf32> to vector<1x128xf32>
    %64 = vector.broadcast %63 : vector<1x128xf32> to vector<256x128xf32>
    %65 = arith.addf %61, %64 : vector<256x128xf32>
    %cst_46 = arith.constant 0.000000e+00 : f32
    %66 = vector.broadcast %cst_46 : f32 to vector<256x128xf32>
    %67 = arith.maximumf %65, %66 : vector<256x128xf32>
    %68 = arith.truncf %67 : vector<256x128xf32> to vector<256x128xbf16>
    %c5 = arith.constant 5 : index
    %c0_47 = arith.constant 0 : index
    %c0_48 = arith.constant 0 : index
    %69 = vector.load %arg7[%c5, %c0_47, %c0_48] : memref<7x128x128xbf16, #tpu.memory_space<vmem>>, vector<1x128x128xbf16>
    %70 = vector.shape_cast %69 : vector<1x128x128xbf16> to vector<128x128xbf16>
    %cst_49 = arith.constant dense<0.000000e+00> : vector<256x128xf32>
    %71 = tpu.matmul %68, %70, %cst_49 {dimension_numbers = #tpu.dot_dimension_numbers<[1], [0], [0], [1], [0, 0, 1, 1], [], []>} : vector<256x128xbf16>, vector<128x128xbf16>, vector<256x128xf32> -> vector<256x128xf32>
    %c5_50 = arith.constant 5 : index
    %c0_51 = arith.constant 0 : index
    %c0_52 = arith.constant 0 : index
    %72 = vector.load %arg8[%c5_50, %c0_51, %c0_52] : memref<7x1x128xf32, #tpu.memory_space<vmem>>, vector<1x1x128xf32>
    %73 = vector.shape_cast %72 : vector<1x1x128xf32> to vector<1x128xf32>
    %74 = vector.broadcast %73 : vector<1x128xf32> to vector<256x128xf32>
    %75 = arith.addf %71, %74 : vector<256x128xf32>
    %cst_53 = arith.constant 0.000000e+00 : f32
    %76 = vector.broadcast %cst_53 : f32 to vector<256x128xf32>
    %77 = arith.maximumf %75, %76 : vector<256x128xf32>
    %78 = arith.truncf %77 : vector<256x128xf32> to vector<256x128xbf16>
    %c6 = arith.constant 6 : index
    %c0_54 = arith.constant 0 : index
    %c0_55 = arith.constant 0 : index
    %79 = vector.load %arg7[%c6, %c0_54, %c0_55] : memref<7x128x128xbf16, #tpu.memory_space<vmem>>, vector<1x128x128xbf16>
    %80 = vector.shape_cast %79 : vector<1x128x128xbf16> to vector<128x128xbf16>
    %cst_56 = arith.constant dense<0.000000e+00> : vector<256x128xf32>
    %81 = tpu.matmul %78, %80, %cst_56 {dimension_numbers = #tpu.dot_dimension_numbers<[1], [0], [0], [1], [0, 0, 1, 1], [], []>} : vector<256x128xbf16>, vector<128x128xbf16>, vector<256x128xf32> -> vector<256x128xf32>
    %c6_57 = arith.constant 6 : index
    %c0_58 = arith.constant 0 : index
    %c0_59 = arith.constant 0 : index
    %82 = vector.load %arg8[%c6_57, %c0_58, %c0_59] : memref<7x1x128xf32, #tpu.memory_space<vmem>>, vector<1x1x128xf32>
    %83 = vector.shape_cast %82 : vector<1x1x128xf32> to vector<1x128xf32>
    %84 = vector.broadcast %83 : vector<1x128xf32> to vector<256x128xf32>
    %85 = arith.addf %81, %84 : vector<256x128xf32>
    %cst_60 = arith.constant 0.000000e+00 : f32
    %86 = vector.broadcast %cst_60 : f32 to vector<256x128xf32>
    %87 = arith.maximumf %85, %86 : vector<256x128xf32>
    %88 = arith.truncf %87 : vector<256x128xf32> to vector<256x128xbf16>
    %c0_61 = arith.constant 0 : index
    %c0_62 = arith.constant 0 : index
    %89 = vector.load %arg10[%c0_61, %c0_62] : memref<1x128xbf16, #tpu.memory_space<vmem>>, vector<1x128xbf16>
    %cst_63 = arith.constant dense<0.000000e+00> : vector<1x256xf32>
    %90 = tpu.matmul %89, %88, %cst_63 {dimension_numbers = #tpu.dot_dimension_numbers<[1], [1], [0], [0], [0, 0, 1, 0], [], []>} : vector<1x128xbf16>, vector<256x128xbf16>, vector<1x256xf32> -> vector<1x256xf32>
    %c0_64 = arith.constant 0 : index
    %c0_65 = arith.constant 0 : index
    %91 = vector.load %arg11[%c0_64, %c0_65] : memref<1x1xf32, #tpu.memory_space<vmem>>, vector<1x1xf32>
    %92 = vector.broadcast %91 : vector<1x1xf32> to vector<1x256xf32>
    %93 = arith.addf %90, %92 : vector<1x256xf32>
    %94 = vector.shape_cast %93 : vector<1x256xf32> to vector<1x1x256xf32>
    %c0_66 = arith.constant 0 : index
    %c0_67 = arith.constant 0 : index
    %c0_68 = arith.constant 0 : index
    %95 = vector.load %arg15[%c0_66, %c0_67, %c0_68] : memref<1x1x256xf32, #tpu.memory_space<vmem>>, vector<1x1x256xf32>
    tpu.vector_store %arg15[%c0_66, %c0_67, %c0_68], %94 {strides = array<i32>} : memref<1x1x256xf32, #tpu.memory_space<vmem>>, vector<1x1x256xf32>,
    %c0_69 = arith.constant 0 : index
    %c0_70 = arith.constant 0 : index
    %96 = vector.load %arg9[%c0_69, %c0_70] : memref<128x128xbf16, #tpu.memory_space<vmem>>, vector<128x128xbf16>
    %cst_71 = arith.constant dense<0.000000e+00> : vector<256x128xf32>
    %97 = tpu.matmul %88, %96, %cst_71 {dimension_numbers = #tpu.dot_dimension_numbers<[1], [0], [0], [1], [0, 0, 1, 1], [], []>} : vector<256x128xbf16>, vector<128x128xbf16>, vector<256x128xf32> -> vector<256x128xf32>
    %98 = arith.addf %97, %16 : vector<256x128xf32>
    %c0_72 = arith.constant 0 : index
    %c0_73 = arith.constant 0 : index
    %c0_74 = arith.constant 0 : index
    %99 = vector.load %arg5[%c0_72, %c0_73, %c0_74] : memref<1x1x128xf32, #tpu.memory_space<vmem>>, vector<1x1x128xf32>
    %100 = vector.shape_cast %99 : vector<1x1x128xf32> to vector<1x128xf32>
    %101 = vector.broadcast %100 : vector<1x128xf32> to vector<256x128xf32>
    %102 = arith.addf %98, %101 : vector<256x128xf32>
    %cst_75 = arith.constant 0.000000e+00 : f32
    %103 = vector.broadcast %cst_75 : f32 to vector<256x128xf32>
    %104 = arith.maximumf %102, %103 : vector<256x128xf32>
    %105 = arith.truncf %104 : vector<256x128xf32> to vector<256x128xbf16>
    %c0_76 = arith.constant 0 : index
    %c0_77 = arith.constant 0 : index
    %106 = vector.load %arg12[%c0_76, %c0_77] : memref<128x128xbf16, #tpu.memory_space<vmem>>, vector<128x128xbf16>
    %cst_78 = arith.constant dense<0.000000e+00> : vector<256x128xf32>
    %107 = tpu.matmul %105, %106, %cst_78 {dimension_numbers = #tpu.dot_dimension_numbers<[1], [0], [0], [1], [0, 0, 1, 1], [], []>} : vector<256x128xbf16>, vector<128x128xbf16>, vector<256x128xf32> -> vector<256x128xf32>
    %c0_79 = arith.constant 0 : index
    %c0_80 = arith.constant 0 : index
    %108 = vector.load %arg13[%c0_79, %c0_80] : memref<1x128xf32, #tpu.memory_space<vmem>>, vector<1x128xf32>
    %109 = vector.broadcast %108 : vector<1x128xf32> to vector<256x128xf32>
    %110 = arith.addf %107, %109 : vector<256x128xf32>
    %111 = vector.shape_cast %110 : vector<256x128xf32> to vector<1x256x128xf32>
    %c0_81 = arith.constant 0 : index
    %c0_82 = arith.constant 0 : index
    %c0_83 = arith.constant 0 : index
    %112 = vector.load %arg14[%c0_81, %c0_82, %c0_83] : memref<1x256x128xf32, #tpu.memory_space<vmem>>, vector<1x256x128xf32>
    tpu.vector_store %arg14[%c0_81, %c0_82, %c0_83], %111 {strides = array<i32>} : memref<1x256x128xf32, #tpu.memory_space<vmem>>, vector<1x256x128xf32>,
    return
  }
  func.func @transform_0(%arg0: i32, %arg1: i32) -> (i32, i32, i32) {
    %c0_i32 = arith.constant 0 : i32
    %c0_i32_0 = arith.constant 0 : i32
    return %arg0, %arg1, %c0_i32 : i32, i32, i32
  }
  func.func @transform_1(%arg0: i32, %arg1: i32) -> (i32, i32, i32) {
    %c0_i32 = arith.constant 0 : i32
    %c0_i32_0 = arith.constant 0 : i32
    %c0_i32_1 = arith.constant 0 : i32
    return %arg0, %c0_i32, %c0_i32_0 : i32, i32, i32
  }
  func.func @transform_2(%arg0: i32, %arg1: i32) -> (i32, i32, i32) {
    %c0_i32 = arith.constant 0 : i32
    %c0_i32_0 = arith.constant 0 : i32
    %c0_i32_1 = arith.constant 0 : i32
    return %arg0, %c0_i32, %c0_i32_0 : i32, i32, i32
  }
  func.func @transform_3(%arg0: i32, %arg1: i32) -> (i32, i32, i32) {
    %c0_i32 = arith.constant 0 : i32
    %c0_i32_0 = arith.constant 0 : i32
    %c0_i32_1 = arith.constant 0 : i32
    return %arg0, %c0_i32, %c0_i32_0 : i32, i32, i32
  }
  func.func @transform_4(%arg0: i32, %arg1: i32) -> (i32, i32) {
    %c0_i32 = arith.constant 0 : i32
    %c0_i32_0 = arith.constant 0 : i32
    %c0_i32_1 = arith.constant 0 : i32
    return %c0_i32, %c0_i32_0 : i32, i32
  }
  func.func @transform_5(%arg0: i32, %arg1: i32) -> (i32, i32, i32) {
    %c0_i32 = arith.constant 0 : i32
    %c0_i32_0 = arith.constant 0 : i32
    %c0_i32_1 = arith.constant 0 : i32
    %c0_i32_2 = arith.constant 0 : i32
    return %c0_i32, %c0_i32_0, %c0_i32_1 : i32, i32, i32
  }
  func.func @transform_6(%arg0: i32, %arg1: i32) -> (i32, i32, i32) {
    %c0_i32 = arith.constant 0 : i32
    %c0_i32_0 = arith.constant 0 : i32
    %c0_i32_1 = arith.constant 0 : i32
    %c0_i32_2 = arith.constant 0 : i32
    return %c0_i32, %c0_i32_0, %c0_i32_1 : i32, i32, i32
  }
  func.func @transform_7(%arg0: i32, %arg1: i32) -> (i32, i32) {
    %c0_i32 = arith.constant 0 : i32
    %c0_i32_0 = arith.constant 0 : i32
    %c0_i32_1 = arith.constant 0 : i32
    return %c0_i32, %c0_i32_0 : i32, i32
  }
  func.func @transform_8(%arg0: i32, %arg1: i32) -> (i32, i32) {
    %c0_i32 = arith.constant 0 : i32
    %c0_i32_0 = arith.constant 0 : i32
    %c0_i32_1 = arith.constant 0 : i32
    return %c0_i32, %c0_i32_0 : i32, i32
  }
  func.func @transform_9(%arg0: i32, %arg1: i32) -> (i32, i32) {
    %c0_i32 = arith.constant 0 : i32
    %c0_i32_0 = arith.constant 0 : i32
    %c0_i32_1 = arith.constant 0 : i32
    return %c0_i32, %c0_i32_0 : i32, i32
  }
  func.func @transform_10(%arg0: i32, %arg1: i32) -> (i32, i32) {
    %c0_i32 = arith.constant 0 : i32
    %c0_i32_0 = arith.constant 0 : i32
    %c0_i32_1 = arith.constant 0 : i32
    return %c0_i32, %c0_i32_0 : i32, i32
  }
  func.func @transform_11(%arg0: i32, %arg1: i32) -> (i32, i32) {
    %c0_i32 = arith.constant 0 : i32
    %c0_i32_0 = arith.constant 0 : i32
    %c0_i32_1 = arith.constant 0 : i32
    return %c0_i32, %c0_i32_0 : i32, i32
  }
  func.func @transform_12(%arg0: i32, %arg1: i32) -> (i32, i32, i32) {
    %c0_i32 = arith.constant 0 : i32
    %c0_i32_0 = arith.constant 0 : i32
    return %arg0, %arg1, %c0_i32 : i32, i32, i32
  }
  func.func @transform_13(%arg0: i32, %arg1: i32) -> (i32, i32, i32) {
    %c0_i32 = arith.constant 0 : i32
    %c0_i32_0 = arith.constant 0 : i32
    return %arg0, %c0_i32, %arg1 : i32, i32, i32
  }
}

</mosaic_0001>

<llo_original>
// kernel: decoder_forward.1
$region0: #{decoder_forward.1}
  #allocation0 [shape = 'u32[]', space=smem, size = 0x4, offset = 0x4, fixed_abs, tag = 'smem constant byte address 0x4 - core index']
  #allocation1 [shape = 'u32[144,128]{1,0:T(1,128)}', space=vmem, size = 0x12000, scoped, tag = 'internal scratch']
  #allocation2 [shape = 'f32[1,1]{1,0:T(1,128)S(1)}', space=vmem, size = 0x200, scoped, tag = 'scoped memory for decoder_forward.1']
  %s0 = inlined_call_operand.vmem [shape: bf16[2,512,128], index: 0, kind: input, shape index: {}]
  %s1 = inlined_call_operand.vmem [shape: f32[2,1,128], index: 1, kind: input, shape index: {}]
  %s2 = inlined_call_operand.vmem [shape: f32[2,1,128], index: 2, kind: input, shape index: {}]
  %s3 = inlined_call_operand.vmem [shape: f32[2,1,128], index: 3, kind: input, shape index: {}]
  %s4 = inlined_call_operand.vmem [shape: bf16[128,384], index: 4, kind: input, shape index: {}]
  %s5 = inlined_call_operand.vmem [shape: bf16[7,128,128], index: 5, kind: input, shape index: {}]
  %s6 = inlined_call_operand.vmem [shape: f32[7,1,128], index: 6, kind: input, shape index: {}]
  %s7 = inlined_call_operand.vmem [shape: bf16[128,128], index: 7, kind: input, shape index: {}]
  %s8 = inlined_call_operand.vmem [shape: bf16[1,128], index: 8, kind: input, shape index: {}]
  %s9 = inlined_call_operand.<no memory space> [shape: f32[1,1], index: 9, kind: input, shape index: {}]
  %s10 = inlined_call_operand.vmem [shape: bf16[128,128], index: 10, kind: input, shape index: {}]
  %s11 = inlined_call_operand.vmem [shape: f32[1,128], index: 11, kind: input, shape index: {}]
  %s12 = inlined_call_operand.hbm [shape: f32[2,512,128], index: 12, kind: output, shape index: {0}]
  %s13 = inlined_call_operand.vmem [shape: f32[2,1,512], index: 13, kind: output, shape index: {1}]
  %14 = xla_tuple %s12, %s13
  %s15 = sld [smem:[#allocation0]]
  $region89: #{decoder_forward.1} parent=0
    _
  %s17 = ssub.s32 1, %s15
  %s18 = scalar_select 0, %s17, %s15
  %v19 = vstv %s9
  %20 = vst [vmem:[#allocation2] sm:$0x1] %v19
  $region1: #{decoder_forward.1} parent=0
    #allocation3 [shape = 'u8[262144]{0}', space=vmem, size = 0x40000, scoped, tag = 'output window, operand 0']
    #allocation4 [shape = 's32[2]{0}', space=sflag, size = 0x8, scoped, tag = 'scoped memory for decoder_forward.1']
    %21 = vsyncpa [#allocation4], 0
    %s22 = scalar_lea.sflag [#allocation4], 1
    %23 = vsyncpa %s22, 0
    loop: start=0, step=1, limit=6
    $region2: #{decoder_forward.1} parent=1 // loop_pre_header
      _
    $region3: #{decoder_forward.1} parent=1 // loop_header
      %s25 = sphi 0, %s29
      %p26 = scmp.ge.s32.totalorder %s25, 6
      %s32 = sphi 0, %s44
      %s33 = sphi 0, %s40
      %s34 = sphi 0, %s32
      %s35 = sphi 0, %s33
      %s36 = sphi 0, %s34
      %s37 = sphi 0, %s35
      %s49 = sphi 0, %s51
      %s52 = sphi 0, %s49
      %s53 = sphi 0, %s52
      %s69 = sphi 0, %s53
      %s75 = sphi 0, %s77
      %s78 = sphi 0, %s75
      %s79 = sphi 0, %s78
      %s95 = sphi 0, %s79
      %s101 = sphi 0, %s103
      %s104 = sphi 0, %s101
      %s105 = sphi 0, %s104
      %s121 = sphi 0, %s105
      %s127 = sphi 0, %s129
      %s130 = sphi 0, %s127
      %s131 = sphi 0, %s130
      %s147 = sphi 0, %s131
      %s151 = sphi 0, %s151
      %s153 = sphi 0, %s151
      %s154 = sphi 0, %s153
      %s168 = sphi 0, %s154
      %s172 = sphi 0, %s172
      %s174 = sphi 0, %s172
      %s175 = sphi 0, %s174
      %s189 = sphi 0, %s175
      %s193 = sphi 0, %s193
      %s195 = sphi 0, %s193
      %s196 = sphi 0, %s195
      %s210 = sphi 0, %s196
      %s214 = sphi 0, %s214
      %s216 = sphi 0, %s214
      %s217 = sphi 0, %s216
      %s231 = sphi 0, %s217
      %s235 = sphi 0, %s235
      %s237 = sphi 0, %s235
      %s238 = sphi 0, %s237
      %s252 = sphi 0, %s238
      %s256 = sphi 0, %s256
      %s258 = sphi 0, %s256
      %s259 = sphi 0, %s258
      %s273 = sphi 0, %s259
      %s277 = sphi 0, %s277
      %s279 = sphi 0, %s277
      %s280 = sphi 0, %s279
      %s294 = sphi 0, %s280
      %s298 = sphi 0, %s298
      %s300 = sphi 0, %s298
      %s301 = sphi 0, %s300
      %s315 = sphi 0, %s301
      %s323 = sphi 0, %s325
      %s326 = sphi 0, %s323
      %s327 = sphi 0, %s326
      %s343 = sphi 0, %s327
      %s351 = sphi 0, %s353
      %s354 = sphi 0, %s351
      %s355 = sphi 0, %s354
      %s371 = sphi 0, %s355
    $region4: #{decoder_forward.1} parent=1 // loop_header_branch
      %28 = sbr.rel (%p26) target = $region8
    $region5: #{decoder_forward.1} parent=1 // loop_body
      %s30 = ssub.s32 %s25, 1
      %s31 = ssub.s32 %s25, 2
      %s38 = sadd.s32 1, %s33
      %p39 = scmp.ge.s32.totalorder %s38, 2
      %s40 = scalar_select %p39, 0, %s38
      %s41 = sadd.s32 1, %s32
      %s42 = scalar_select %p39, %s41, %s32
      %p43 = scmp.ge.s32.totalorder %s42, 2
      %s44 = scalar_select %p43, 0, %s42
      %s45 = ssub.s32 %s32, %s44
      %s46 = ssub.s32 %s33, %s40
      %s47 = sor.u32 %s45, %s46
      %p48 = scmp.eq.s32.totalorder %s47, 0
      %s50 = sadd.s32 %s49, 1
      %s51 = scalar_select %p48, %s49, %s50
      %p54 = pneg %p48
      %p55 = scmp.eq.s32.totalorder %s25, 3
      %p56 = por %p54, %p55
      %p57 = scmp.ne.s32.totalorder %s49, %s52
      %p58 = scmp.eq.s32.totalorder %s25, 0
      %p59 = por %p57, %p58
      %p60 = scmp.ne.s32.totalorder %s49, %s52
      %p61 = scmp.eq.s32.totalorder %s30, 3
      %p62 = por %p60, %p61
      %p63 = scmp.ne.s32.totalorder %s52, %s53
      %p64 = scmp.eq.s32.totalorder %s30, 0
      %p65 = por %p63, %p64
      %p66 = scmp.ne.s32.totalorder %s52, %s53
      %p67 = scmp.eq.s32.totalorder %s31, 3
      %p68 = por %p66, %p67
      %p70 = scmp.ne.s32.totalorder %s53, %s69
      %p71 = scmp.eq.s32.totalorder %s31, 0
      %p72 = por %p70, %p71
      %s73 = ssub.s32 %s32, %s44
      %p74 = scmp.eq.s32.totalorder %s73, 0
      %s76 = sadd.s32 %s75, 1
      %s77 = scalar_select %p74, %s75, %s76
      %p80 = pneg %p74
      %p81 = scmp.eq.s32.totalorder %s25, 3
      %p82 = por %p80, %p81
      %p83 = scmp.ne.s32.totalorder %s75, %s78
      %p84 = scmp.eq.s32.totalorder %s25, 0
      %p85 = por %p83, %p84
      %p86 = scmp.ne.s32.totalorder %s75, %s78
      %p87 = scmp.eq.s32.totalorder %s30, 3
      %p88 = por %p86, %p87
      %p89 = scmp.ne.s32.totalorder %s78, %s79
      %p90 = scmp.eq.s32.totalorder %s30, 0
      %p91 = por %p89, %p90
      %p92 = scmp.ne.s32.totalorder %s78, %s79
      %p93 = scmp.eq.s32.totalorder %s31, 3
      %p94 = por %p92, %p93
      %p96 = scmp.ne.s32.totalorder %s79, %s95
      %p97 = scmp.eq.s32.totalorder %s31, 0
      %p98 = por %p96, %p97
      %s99 = ssub.s32 %s32, %s44
      %p100 = scmp.eq.s32.totalorder %s99, 0
      %s102 = sadd.s32 %s101, 1
      %s103 = scalar_select %p100, %s101, %s102
      %p106 = pneg %p100
      %p107 = scmp.eq.s32.totalorder %s25, 3
      %p108 = por %p106, %p107
      %p109 = scmp.ne.s32.totalorder %s101, %s104
      %p110 = scmp.eq.s32.totalorder %s25, 0
      %p111 = por %p109, %p110
      %p112 = scmp.ne.s32.totalorder %s101, %s104
      %p113 = scmp.eq.s32.totalorder %s30, 3
      %p114 = por %p112, %p113
      %p115 = scmp.ne.s32.totalorder %s104, %s105
      %p116 = scmp.eq.s32.totalorder %s30, 0
      %p117 = por %p115, %p116
      %p118 = scmp.ne.s32.totalorder %s104, %s105
      %p119 = scmp.eq.s32.totalorder %s31, 3
      %p120 = por %p118, %p119
      %p122 = scmp.ne.s32.totalorder %s105, %s121
      %p123 = scmp.eq.s32.totalorder %s31, 0
      %p124 = por %p122, %p123
      %s125 = ssub.s32 %s32, %s44
      %p126 = scmp.eq.s32.totalorder %s125, 0
      %s128 = sadd.s32 %s127, 1
      %s129 = scalar_select %p126, %s127, %s128
      %p132 = pneg %p126
      %p133 = scmp.eq.s32.totalorder %s25, 3
      %p134 = por %p132, %p133
      %p135 = scmp.ne.s32.totalorder %s127, %s130
      %p136 = scmp.eq.s32.totalorder %s25, 0
      %p137 = por %p135, %p136
      %p138 = scmp.ne.s32.totalorder %s127, %s130
      %p139 = scmp.eq.s32.totalorder %s30, 3
      %p140 = por %p138, %p139
      %p141 = scmp.ne.s32.totalorder %s130, %s131
      %p142 = scmp.eq.s32.totalorder %s30, 0
      %p143 = por %p141, %p142
      %p144 = scmp.ne.s32.totalorder %s130, %s131
      %p145 = scmp.eq.s32.totalorder %s31, 3
      %p146 = por %p144, %p145
      %p148 = scmp.ne.s32.totalorder %s131, %s147
      %p149 = scmp.eq.s32.totalorder %s31, 0
      %p150 = por %p148, %p149
      %s152 = sadd.s32 %s151, 1
      %p155 = scmp.eq.s32.totalorder %s25, 3
      %p156 = scmp.ne.s32.totalorder %s151, %s153
      %p157 = scmp.eq.s32.totalorder %s25, 0
      %p158 = por %p156, %p157
      %p159 = scmp.ne.s32.totalorder %s151, %s153
      %p160 = scmp.eq.s32.totalorder %s30, 3
      %p161 = por %p159, %p160
      %p162 = scmp.ne.s32.totalorder %s153, %s154
      %p163 = scmp.eq.s32.totalorder %s30, 0
      %p164 = por %p162, %p163
      %p165 = scmp.ne.s32.totalorder %s153, %s154
      %p166 = scmp.eq.s32.totalorder %s31, 3
      %p167 = por %p165, %p166
      %p169 = scmp.ne.s32.totalorder %s154, %s168
      %p170 = scmp.eq.s32.totalorder %s31, 0
      %p171 = por %p169, %p170
      %s173 = sadd.s32 %s172, 1
      %p176 = scmp.eq.s32.totalorder %s25, 3
      %p177 = scmp.ne.s32.totalorder %s172, %s174
      %p178 = scmp.eq.s32.totalorder %s25, 0
      %p179 = por %p177, %p178
      %p180 = scmp.ne.s32.totalorder %s172, %s174
      %p181 = scmp.eq.s32.totalorder %s30, 3
      %p182 = por %p180, %p181
      %p183 = scmp.ne.s32.totalorder %s174, %s175
      %p184 = scmp.eq.s32.totalorder %s30, 0
      %p185 = por %p183, %p184
      %p186 = scmp.ne.s32.totalorder %s174, %s175
      %p187 = scmp.eq.s32.totalorder %s31, 3
      %p188 = por %p186, %p187
      %p190 = scmp.ne.s32.totalorder %s175, %s189
      %p191 = scmp.eq.s32.totalorder %s31, 0
      %p192 = por %p190, %p191
      %s194 = sadd.s32 %s193, 1
      %p197 = scmp.eq.s32.totalorder %s25, 3
      %p198 = scmp.ne.s32.totalorder %s193, %s195
      %p199 = scmp.eq.s32.totalorder %s25, 0
      %p200 = por %p198, %p199
      %p201 = scmp.ne.s32.totalorder %s193, %s195
      %p202 = scmp.eq.s32.totalorder %s30, 3
      %p203 = por %p201, %p202
      %p204 = scmp.ne.s32.totalorder %s195, %s196
      %p205 = scmp.eq.s32.totalorder %s30, 0
      %p206 = por %p204, %p205
      %p207 = scmp.ne.s32.totalorder %s195, %s196
      %p208 = scmp.eq.s32.totalorder %s31, 3
      %p209 = por %p207, %p208
      %p211 = scmp.ne.s32.totalorder %s196, %s210
      %p212 = scmp.eq.s32.totalorder %s31, 0
      %p213 = por %p211, %p212
      %s215 = sadd.s32 %s214, 1
      %p218 = scmp.eq.s32.totalorder %s25, 3
      %p219 = scmp.ne.s32.totalorder %s214, %s216
      %p220 = scmp.eq.s32.totalorder %s25, 0
      %p221 = por %p219, %p220
      %p222 = scmp.ne.s32.totalorder %s214, %s216
      %p223 = scmp.eq.s32.totalorder %s30, 3
      %p224 = por %p222, %p223
      %p225 = scmp.ne.s32.totalorder %s216, %s217
      %p226 = scmp.eq.s32.totalorder %s30, 0
      %p227 = por %p225, %p226
      %p228 = scmp.ne.s32.totalorder %s216, %s217
      %p229 = scmp.eq.s32.totalorder %s31, 3
      %p230 = por %p228, %p229
      %p232 = scmp.ne.s32.totalorder %s217, %s231
      %p233 = scmp.eq.s32.totalorder %s31, 0
      %p234 = por %p232, %p233
      %s236 = sadd.s32 %s235, 1
      %p239 = scmp.eq.s32.totalorder %s25, 3
      %p240 = scmp.ne.s32.totalorder %s235, %s237
      %p241 = scmp.eq.s32.totalorder %s25, 0
      %p242 = por %p240, %p241
      %p243 = scmp.ne.s32.totalorder %s235, %s237
      %p244 = scmp.eq.s32.totalorder %s30, 3
      %p245 = por %p243, %p244
      %p246 = scmp.ne.s32.totalorder %s237, %s238
      %p247 = scmp.eq.s32.totalorder %s30, 0
      %p248 = por %p246, %p247
      %p249 = scmp.ne.s32.totalorder %s237, %s238
      %p250 = scmp.eq.s32.totalorder %s31, 3
      %p251 = por %p249, %p250
      %p253 = scmp.ne.s32.totalorder %s238, %s252
      %p254 = scmp.eq.s32.totalorder %s31, 0
      %p255 = por %p253, %p254
      %s257 = sadd.s32 %s256, 1
      %p260 = scmp.eq.s32.totalorder %s25, 3
      %p261 = scmp.ne.s32.totalorder %s256, %s258
      %p262 = scmp.eq.s32.totalorder %s25, 0
      %p263 = por %p261, %p262
      %p264 = scmp.ne.s32.totalorder %s256, %s258
      %p265 = scmp.eq.s32.totalorder %s30, 3
      %p266 = por %p264, %p265
      %p267 = scmp.ne.s32.totalorder %s258, %s259
      %p268 = scmp.eq.s32.totalorder %s30, 0
      %p269 = por %p267, %p268
      %p270 = scmp.ne.s32.totalorder %s258, %s259
      %p271 = scmp.eq.s32.totalorder %s31, 3
      %p272 = por %p270, %p271
      %p274 = scmp.ne.s32.totalorder %s259, %s273
      %p275 = scmp.eq.s32.totalorder %s31, 0
      %p276 = por %p274, %p275
      %s278 = sadd.s32 %s277, 1
      %p281 = scmp.eq.s32.totalorder %s25, 3
      %p282 = scmp.ne.s32.totalorder %s277, %s279
      %p283 = scmp.eq.s32.totalorder %s25, 0
      %p284 = por %p282, %p283
      %p285 = scmp.ne.s32.totalorder %s277, %s279
      %p286 = scmp.eq.s32.totalorder %s30, 3
      %p287 = por %p285, %p286
      %p288 = scmp.ne.s32.totalorder %s279, %s280
      %p289 = scmp.eq.s32.totalorder %s30, 0
      %p290 = por %p288, %p289
      %p291 = scmp.ne.s32.totalorder %s279, %s280
      %p292 = scmp.eq.s32.totalorder %s31, 3
      %p293 = por %p291, %p292
      %p295 = scmp.ne.s32.totalorder %s280, %s294
      %p296 = scmp.eq.s32.totalorder %s31, 0
      %p297 = por %p295, %p296
      %s299 = sadd.s32 %s298, 1
      %p302 = scmp.eq.s32.totalorder %s25, 3
      %p303 = scmp.ne.s32.totalorder %s298, %s300
      %p304 = scmp.eq.s32.totalorder %s25, 0
      %p305 = por %p303, %p304
      %p306 = scmp.ne.s32.totalorder %s298, %s300
      %p307 = scmp.eq.s32.totalorder %s30, 3
      %p308 = por %p306, %p307
      %p309 = scmp.ne.s32.totalorder %s300, %s301
      %p310 = scmp.eq.s32.totalorder %s30, 0
      %p311 = por %p309, %p310
      %p312 = scmp.ne.s32.totalorder %s300, %s301
      %p313 = scmp.eq.s32.totalorder %s31, 3
      %p314 = por %p312, %p313
      %p316 = scmp.ne.s32.totalorder %s301, %s315
      %p317 = scmp.eq.s32.totalorder %s31, 0
      %p318 = por %p316, %p317
      %s319 = ssub.s32 %s32, %s44
      %s320 = ssub.s32 %s33, %s40
      %s321 = sor.u32 %s319, %s320
      %p322 = scmp.eq.s32.totalorder %s321, 0
      %s324 = sadd.s32 %s323, 1
      %s325 = scalar_select %p322, %s323, %s324
      %p328 = pneg %p322
      %p329 = scmp.eq.s32.totalorder %s25, 3
      %p330 = por %p328, %p329
      %p331 = scmp.ne.s32.totalorder %s323, %s326
      %p332 = scmp.eq.s32.totalorder %s25, 0
      %p333 = por %p331, %p332
      %p334 = scmp.ne.s32.totalorder %s323, %s326
      %p335 = scmp.eq.s32.totalorder %s30, 3
      %p336 = por %p334, %p335
      %p337 = scmp.ne.s32.totalorder %s326, %s327
      %p338 = scmp.eq.s32.totalorder %s30, 0
      %p339 = por %p337, %p338
      %p340 = scmp.ne.s32.totalorder %s326, %s327
      %p341 = scmp.eq.s32.totalorder %s31, 3
      %p342 = por %p340, %p341
      %p344 = scmp.ne.s32.totalorder %s327, %s343
      %p345 = scmp.eq.s32.totalorder %s31, 0
      %p346 = por %p344, %p345
      %s347 = ssub.s32 %s32, %s44
      %s348 = ssub.s32 %s33, %s40
      %s349 = sor.u32 %s347, %s348
      %p350 = scmp.eq.s32.totalorder %s349, 0
      %s352 = sadd.s32 %s351, 1
      %s353 = scalar_select %p350, %s351, %s352
      %p356 = pneg %p350
      %p357 = scmp.eq.s32.totalorder %s25, 3
      %p358 = por %p356, %p357
      %p359 = scmp.ne.s32.totalorder %s351, %s354
      %p360 = scmp.eq.s32.totalorder %s25, 0
      %p361 = por %p359, %p360
      %p362 = scmp.ne.s32.totalorder %s351, %s354
      %p363 = scmp.eq.s32.totalorder %s30, 3
      %p364 = por %p362, %p363
      %p365 = scmp.ne.s32.totalorder %s354, %s355
      %p366 = scmp.eq.s32.totalorder %s30, 0
      %p367 = por %p365, %p366
      %p368 = scmp.ne.s32.totalorder %s354, %s355
      %p369 = scmp.eq.s32.totalorder %s31, 3
      %p370 = por %p368, %p369
      %p372 = scmp.ne.s32.totalorder %s355, %s371
      %p373 = scmp.eq.s32.totalorder %s31, 0
      %p374 = por %p372, %p373
      %p375 = scmp.le.s32.totalorder 1, %s25
      %p376 = scmp.lt.s32.totalorder %s25, 5
      %p377 = pnand %p375, %p376
      %p378 = pneg %p377
      // Predicated region
      $region9: #{decoder_forward.1} parent=5 // pred_check
        _
      $region10: #{decoder_forward.1} parent=5 // pred_check_branch
        %380 = sbr.rel (%p377) target = $region12
      $region11: #{decoder_forward.1} parent=5 // pred_region
        %s381 = ssub.s32 %s25, 1
        // Predicated region
        $region13: #{decoder_forward.1} parent=11 // pred_check
          %p382 = pneg %p164
        $region14: #{decoder_forward.1} parent=11 // pred_check_branch
          %384 = sbr.rel (%p382) target = $region16
        $region15: #{decoder_forward.1} parent=11 // pred_region
          _
        $region16: #{decoder_forward.1} parent=11 // pred_fallthru
          _
        // Predicated region
        $region17: #{decoder_forward.1} parent=11 // pred_check
          %p385 = pneg %p185
        $region18: #{decoder_forward.1} parent=11 // pred_check_branch
          %387 = sbr.rel (%p385) target = $region20
        $region19: #{decoder_forward.1} parent=11 // pred_region
          _
        $region20: #{decoder_forward.1} parent=11 // pred_fallthru
          _
        // Predicated region
        $region21: #{decoder_forward.1} parent=11 // pred_check
          %p388 = pneg %p206
        $region22: #{decoder_forward.1} parent=11 // pred_check_branch
          %390 = sbr.rel (%p388) target = $region24
        $region23: #{decoder_forward.1} parent=11 // pred_region
          _
        $region24: #{decoder_forward.1} parent=11 // pred_fallthru
          _
        // Predicated region
        $region25: #{decoder_forward.1} parent=11 // pred_check
          %p391 = pneg %p227
        $region26: #{decoder_forward.1} parent=11 // pred_check_branch
          %393 = sbr.rel (%p391) target = $region28
        $region27: #{decoder_forward.1} parent=11 // pred_region
          _
        $region28: #{decoder_forward.1} parent=11 // pred_fallthru
          _
        // Predicated region
        $region29: #{decoder_forward.1} parent=11 // pred_check
          %p394 = pneg %p248
        $region30: #{decoder_forward.1} parent=11 // pred_check_branch
          %396 = sbr.rel (%p394) target = $region32
        $region31: #{decoder_forward.1} parent=11 // pred_region
          _
        $region32: #{decoder_forward.1} parent=11 // pred_fallthru
          _
        // Predicated region
        $region33: #{decoder_forward.1} parent=11 // pred_check
          %p397 = pneg %p269
        $region34: #{decoder_forward.1} parent=11 // pred_check_branch
          %399 = sbr.rel (%p397) target = $region36
        $region35: #{decoder_forward.1} parent=11 // pred_region
          _
        $region36: #{decoder_forward.1} parent=11 // pred_fallthru
          _
        // Predicated region
        $region37: #{decoder_forward.1} parent=11 // pred_check
          %p400 = pneg %p290
        $region38: #{decoder_forward.1} parent=11 // pred_check_branch
          %402 = sbr.rel (%p400) target = $region40
        $region39: #{decoder_forward.1} parent=11 // pred_region
          _
        $region40: #{decoder_forward.1} parent=11 // pred_fallthru
          _
        // Predicated region
        $region41: #{decoder_forward.1} parent=11 // pred_check
          %p403 = pneg %p311
        $region42: #{decoder_forward.1} parent=11 // pred_check_branch
          %405 = sbr.rel (%p403) target = $region44
        $region43: #{decoder_forward.1} parent=11 // pred_region
          _
        $region44: #{decoder_forward.1} parent=11 // pred_fallthru
          _
      $region12: #{decoder_forward.1} parent=5 // pred_fallthru
        _
      %p406 = scmp.lt.s32.totalorder %s25, 4
      // Predicated region
      $region45: #{decoder_forward.1} parent=5 // pred_check
        %p407 = pneg %p406
      $region46: #{decoder_forward.1} parent=5 // pred_check_branch
        %409 = sbr.rel (%p407) target = $region48
      $region47: #{decoder_forward.1} parent=5 // pred_region
        // Predicated region
        $region49: #{decoder_forward.1} parent=47 // pred_check
          %p410 = pneg %p59
        $region50: #{decoder_forward.1} parent=47 // pred_check_branch
          %412 = sbr.rel (%p410) target = $region52
        $region51: #{decoder_forward.1} parent=47 // pred_region
          %s413 = smul.u32 32, %s33
          %p414 = scmp.lt.s32.totalorder %s32, 1
          %s415 = scalar_select %p414, %s32, 1
          %p416 = scmp.lt.s32.totalorder %s413, 63
          %s417 = scalar_select %p416, %s413, 63
          %s418 = smul.addr %s415, 64
          %s419 = sadd.s32 %s417, %s418
          %s420 = smul.addr %s419, 4
          %s421 = scalar_lea.vmem %s0, %s420
          %s422 = smul.u32 32, %s33
        $region52: #{decoder_forward.1} parent=47 // pred_fallthru
          _
        // Predicated region
        $region53: #{decoder_forward.1} parent=47 // pred_check
          %p423 = pneg %p85
        $region54: #{decoder_forward.1} parent=47 // pred_check_branch
          %425 = sbr.rel (%p423) target = $region56
        $region55: #{decoder_forward.1} parent=47 // pred_region
          %p426 = scmp.lt.s32.totalorder %s32, 1
          %s427 = scalar_select %p426, %s32, 1
          %s428 = scalar_lea.vmem %s1, %s427
        $region56: #{decoder_forward.1} parent=47 // pred_fallthru
          _
        // Predicated region
        $region57: #{decoder_forward.1} parent=47 // pred_check
          %p429 = pneg %p111
        $region58: #{decoder_forward.1} parent=47 // pred_check_branch
          %431 = sbr.rel (%p429) target = $region60
        $region59: #{decoder_forward.1} parent=47 // pred_region
          %p432 = scmp.lt.s32.totalorder %s32, 1
          %s433 = scalar_select %p432, %s32, 1
          %s434 = scalar_lea.vmem %s2, %s433
        $region60: #{decoder_forward.1} parent=47 // pred_fallthru
          _
        // Predicated region
        $region61: #{decoder_forward.1} parent=47 // pred_check
          %p435 = pneg %p137
        $region62: #{decoder_forward.1} parent=47 // pred_check_branch
          %437 = sbr.rel (%p435) target = $region64
        $region63: #{decoder_forward.1} parent=47 // pred_region
          %p438 = scmp.lt.s32.totalorder %s32, 1
          %s439 = scalar_select %p438, %s32, 1
          %s440 = scalar_lea.vmem %s3, %s439
        $region64: #{decoder_forward.1} parent=47 // pred_fallthru
          _
      $region48: #{decoder_forward.1} parent=5 // pred_fallthru
        _
      %p441 = scmp.le.s32.totalorder 1, %s25
      %p442 = scmp.lt.s32.totalorder %s25, 5
      %p443 = pnand %p441, %p442
      %p444 = pneg %p443
      // Predicated region
      $region65: #{decoder_forward.1} parent=5 // pred_check
        _
      $region66: #{decoder_forward.1} parent=5 // pred_check_branch
        %446 = sbr.rel (%p443) target = $region68
      $region67: #{decoder_forward.1} parent=5 // pred_region
        %s447 = ssub.s32 %s25, 1
        %s448 = smul.u32 32, %s35
        %p449 = scmp.lt.s32.totalorder %s34, 1
        %s450 = scalar_select %p449, %s34, 1
        %p451 = scmp.lt.s32.totalorder %s448, 63
        %s452 = scalar_select %p451, %s448, 63
        %s453 = smul.addr %s450, 64
        %s454 = sadd.s32 %s452, %s453
        %s455 = smul.addr %s454, 4
        %s456 = scalar_lea.vmem %s0, %s455
        %p457 = pneg %p65
        %p458 = pneg %p62
        %p459 = scmp.lt.s32.totalorder %s34, 1
        %s460 = scalar_select %p459, %s34, 1
        %s461 = scalar_lea.vmem %s1, %s460
        %p462 = pneg %p91
        %p463 = pneg %p88
        %p464 = scmp.lt.s32.totalorder %s34, 1
        %s465 = scalar_select %p464, %s34, 1
        %s466 = scalar_lea.vmem %s2, %s465
        %p467 = pneg %p117
        %p468 = pneg %p114
        %p469 = scmp.lt.s32.totalorder %s34, 1
        %s470 = scalar_select %p469, %s34, 1
        %s471 = scalar_lea.vmem %s3, %s470
        %p472 = pneg %p143
        %p473 = pneg %p140
        %p474 = pneg %p164
        %p475 = pneg %p161
        %p476 = pneg %p185
        %p477 = pneg %p182
        %p478 = pneg %p206
        %p479 = pneg %p203
        %p480 = pneg %p227
        %p481 = pneg %p224
        %p482 = pneg %p248
        %p483 = pneg %p245
        %p484 = pneg %p269
        %p485 = pneg %p266
        %p486 = pneg %p290
        %p487 = pneg %p287
        %p488 = pneg %p311
        %p489 = pneg %p308
        %p490 = pneg %p339
        %p491 = pneg %p336
        %s492 = sand.u32 %s326, 1
        %s493 = scalar_lea.sflag [#allocation4], %s492
        %s494 = sand.u32 %s326, 1
        %s495 = smul.addr %s494, 256
        %s496 = scalar_lea.vmem [#allocation3], %s495
        %p497 = pneg %p367
        %p498 = pneg %p364
        %s499 = smul.u32 2, %s35
        %p500 = scmp.lt.s32.totalorder %s34, 1
        %s501 = scalar_select %p500, %s34, 1
        %p502 = scmp.lt.s32.totalorder %s499, 3
        %s503 = scalar_select %p502, %s499, 3
        %s504 = smul.addr %s501, 4
        %s505 = sadd.s32 %s503, %s504
        %s506 = scalar_lea.vmem %s13, %s505
        %s507 = smul.u32 32, %s35
        %p508 = scmp.lt.s32.totalorder %s34, 1
        %s509 = scalar_select %p508, %s34, 1
        %p510 = scmp.lt.s32.totalorder %s507, 63
        %s511 = scalar_select %p510, %s507, 63
        %s512 = smul.addr %s509, 64
        %s513 = sadd.s32 %s511, %s512
        %s514 = smul.addr %s513, 4
        %s515 = scalar_lea.vmem %s0, %s514
        %s516 = smul.u32 32, %s35
        %p517 = scmp.lt.s32.totalorder %s34, 1
        %s518 = scalar_select %p517, %s34, 1
        %s519 = scalar_lea.vmem %s1, %s518
        %p520 = scmp.lt.s32.totalorder %s34, 1
        %s521 = scalar_select %p520, %s34, 1
        %s522 = scalar_lea.vmem %s2, %s521
        %p523 = scmp.lt.s32.totalorder %s34, 1
        %s524 = scalar_select %p523, %s34, 1
        %s525 = scalar_lea.vmem %s3, %s524
        %s526 = smul.u32 32, %s35
        %s527 = smul.u32 2, %s35
        %p528 = scmp.lt.s32.totalorder %s34, 1
        %s529 = scalar_select %p528, %s34, 1
        %p530 = scmp.lt.s32.totalorder %s527, 3
        %s531 = scalar_select %p530, %s527, 3
        %s532 = smul.addr %s529, 4
        %s533 = sadd.s32 %s531, %s532
        %s534 = scalar_lea.vmem %s13, %s533
        %s535 = smul.u32 2, %s35
        %v537 = vld [vmem:[%s515] sm:$0xf]
        %v538 = vld [vmem:[%s515 + $0x4] sm:$0xf]
        %v539 = vld [vmem:[%s515 + $0x8] sm:$0xf]
        %v540 = vld [vmem:[%s515 + $0xc] sm:$0xf]
        %v541 = vld [vmem:[%s515 + $0x10] sm:$0xf]
        %v542 = vld [vmem:[%s515 + $0x14] sm:$0xf]
        %v543 = vld [vmem:[%s515 + $0x18] sm:$0xf]
        %v544 = vld [vmem:[%s515 + $0x1c] sm:$0xf]
        %v545 = vld [vmem:[%s515 + $0x20] sm:$0xf]
        %v546 = vld [vmem:[%s515 + $0x24] sm:$0xf]
        %v547 = vld [vmem:[%s515 + $0x28] sm:$0xf]
        %v548 = vld [vmem:[%s515 + $0x2c] sm:$0xf]
        %v549 = vld [vmem:[%s515 + $0x30] sm:$0xf]
        %v550 = vld [vmem:[%s515 + $0x34] sm:$0xf]
        %v551 = vld [vmem:[%s515 + $0x38] sm:$0xf]
        %v552 = vld [vmem:[%s515 + $0x3c] sm:$0xf]
        %v553 = vld [vmem:[%s515 + $0x40] sm:$0xf]
        %v554 = vld [vmem:[%s515 + $0x44] sm:$0xf]
        %v555 = vld [vmem:[%s515 + $0x48] sm:$0xf]
        %v556 = vld [vmem:[%s515 + $0x4c] sm:$0xf]
        %v557 = vld [vmem:[%s515 + $0x50] sm:$0xf]
        %v558 = vld [vmem:[%s515 + $0x54] sm:$0xf]
        %v559 = vld [vmem:[%s515 + $0x58] sm:$0xf]
        %v560 = vld [vmem:[%s515 + $0x5c] sm:$0xf]
        %v561 = vld [vmem:[%s515 + $0x60] sm:$0xf]
        %v562 = vld [vmem:[%s515 + $0x64] sm:$0xf]
        %v563 = vld [vmem:[%s515 + $0x68] sm:$0xf]
        %v564 = vld [vmem:[%s515 + $0x6c] sm:$0xf]
        %v565 = vld [vmem:[%s515 + $0x70] sm:$0xf]
        %v566 = vld [vmem:[%s515 + $0x74] sm:$0xf]
        %v567 = vld [vmem:[%s515 + $0x78] sm:$0xf]
        %v568 = vld [vmem:[%s515 + $0x7c] sm:$0xf]
        %v569 = vld [vmem:[%s4] sm:$0xff]
        %v570 = vld [vmem:[%s4 + $0x8] sm:$0xf]
        %v571 = vld [vmem:[%s4 + $0xc] sm:$0xff]
        %v572 = vld [vmem:[%s4 + $0x14] sm:$0xf]
        %v573 = vld [vmem:[%s4 + $0x18] sm:$0xff]
        %v574 = vld [vmem:[%s4 + $0x20] sm:$0xf]
        %v575 = vld [vmem:[%s4 + $0x24] sm:$0xff]
        %v576 = vld [vmem:[%s4 + $0x2c] sm:$0xf]
        %v577 = vld [vmem:[%s4 + $0x30] sm:$0xff]
        %v578 = vld [vmem:[%s4 + $0x38] sm:$0xf]
        %v579 = vld [vmem:[%s4 + $0x3c] sm:$0xff]
        %v580 = vld [vmem:[%s4 + $0x44] sm:$0xf]
        %v581 = vld [vmem:[%s4 + $0x48] sm:$0xff]
        %v582 = vld [vmem:[%s4 + $0x50] sm:$0xf]
        %v583 = vld [vmem:[%s4 + $0x54] sm:$0xff]
        %v584 = vld [vmem:[%s4 + $0x5c] sm:$0xf]
        %v585 = vld [vmem:[%s4 + $0x60] sm:$0xff]
        %v586 = vld [vmem:[%s4 + $0x68] sm:$0xf]
        %v587 = vld [vmem:[%s4 + $0x6c] sm:$0xff]
        %v588 = vld [vmem:[%s4 + $0x74] sm:$0xf]
        %v589 = vld [vmem:[%s4 + $0x78] sm:$0xff]
        %v590 = vld [vmem:[%s4 + $0x80] sm:$0xf]
        %v591 = vld [vmem:[%s4 + $0x84] sm:$0xff]
        %v592 = vld [vmem:[%s4 + $0x8c] sm:$0xf]
        %v593 = vld [vmem:[%s4 + $0x90] sm:$0xff]
        %v594 = vld [vmem:[%s4 + $0x98] sm:$0xf]
        %v595 = vld [vmem:[%s4 + $0x9c] sm:$0xff]
        %v596 = vld [vmem:[%s4 + $0xa4] sm:$0xf]
        %v597 = vld [vmem:[%s4 + $0xa8] sm:$0xff]
        %v598 = vld [vmem:[%s4 + $0xb0] sm:$0xf]
        %v599 = vld [vmem:[%s4 + $0xb4] sm:$0xff]
        %v600 = vld [vmem:[%s4 + $0xbc] sm:$0xf]
        %v633 = vunpack.c.l.b16 %v537
        %v634 = vunpack.c.l.b16 %v538
        %v635 = vunpack.c.l.b16 %v539
        %v636 = vunpack.c.l.b16 %v540
        %v637 = vunpack.c.l.b16 %v541
        %v638 = vunpack.c.l.b16 %v542
        %v639 = vunpack.c.l.b16 %v543
        %v640 = vunpack.c.l.b16 %v544
        %v641 = vunpack.c.l.b16 %v545
        %v642 = vunpack.c.l.b16 %v546
        %v643 = vunpack.c.l.b16 %v547
        %v644 = vunpack.c.l.b16 %v548
        %v645 = vunpack.c.l.b16 %v549
        %v646 = vunpack.c.l.b16 %v550
        %v647 = vunpack.c.l.b16 %v551
        %v648 = vunpack.c.l.b16 %v552
        %v649 = vunpack.c.l.b16 %v553
        %v650 = vunpack.c.l.b16 %v554
        %v651 = vunpack.c.l.b16 %v555
        %v652 = vunpack.c.l.b16 %v556
        %v653 = vunpack.c.l.b16 %v557
        %v654 = vunpack.c.l.b16 %v558
        %v655 = vunpack.c.l.b16 %v559
        %v656 = vunpack.c.l.b16 %v560
        %v657 = vunpack.c.l.b16 %v561
        %v658 = vunpack.c.l.b16 %v562
        %v659 = vunpack.c.l.b16 %v563
        %v660 = vunpack.c.l.b16 %v564
        %v661 = vunpack.c.l.b16 %v565
        %v662 = vunpack.c.l.b16 %v566
        %v663 = vunpack.c.l.b16 %v567
        %v664 = vunpack.c.l.b16 %v568
        %v665 = vpack.c.b16 %v634, %v633
        %v666 = vpack.c.b16 %v636, %v635
        %v667 = vpack.c.b16 %v638, %v637
        %v668 = vpack.c.b16 %v640, %v639
        %v669 = vpack.c.b16 %v642, %v641
        %v670 = vpack.c.b16 %v644, %v643
        %v671 = vpack.c.b16 %v646, %v645
        %v672 = vpack.c.b16 %v648, %v647
        %v673 = vpack.c.b16 %v650, %v649
        %v674 = vpack.c.b16 %v652, %v651
        %v675 = vpack.c.b16 %v654, %v653
        %v676 = vpack.c.b16 %v656, %v655
        %v677 = vpack.c.b16 %v658, %v657
        %v678 = vpack.c.b16 %v660, %v659
        %v679 = vpack.c.b16 %v662, %v661
        %v680 = vpack.c.b16 %v664, %v663
        %v729 = vunpack.c.l.b16 %v569
        %v730 = vunpack.c.h.b16 %v569
        %v731 = vunpack.c.l.b16 %v570
        %v732 = vunpack.c.l.b16 %v571
        %v733 = vunpack.c.h.b16 %v571
        %v734 = vunpack.c.l.b16 %v572
        %v735 = vunpack.c.l.b16 %v573
        %v736 = vunpack.c.h.b16 %v573
        %v737 = vunpack.c.l.b16 %v574
        %v738 = vunpack.c.l.b16 %v575
        %v739 = vunpack.c.h.b16 %v575
        %v740 = vunpack.c.l.b16 %v576
        %v741 = vunpack.c.l.b16 %v577
        %v742 = vunpack.c.h.b16 %v577
        %v743 = vunpack.c.l.b16 %v578
        %v744 = vunpack.c.l.b16 %v579
        %v745 = vunpack.c.h.b16 %v579
        %v746 = vunpack.c.l.b16 %v580
        %v747 = vunpack.c.l.b16 %v581
        %v748 = vunpack.c.h.b16 %v581
        %v749 = vunpack.c.l.b16 %v582
        %v750 = vunpack.c.l.b16 %v583
        %v751 = vunpack.c.h.b16 %v583
        %v752 = vunpack.c.l.b16 %v584
        %v753 = vunpack.c.l.b16 %v585
        %v754 = vunpack.c.h.b16 %v585
        %v755 = vunpack.c.l.b16 %v586
        %v756 = vunpack.c.l.b16 %v587
        %v757 = vunpack.c.h.b16 %v587
        %v758 = vunpack.c.l.b16 %v588
        %v759 = vunpack.c.l.b16 %v589
        %v760 = vunpack.c.h.b16 %v589
        %v761 = vunpack.c.l.b16 %v590
        %v762 = vunpack.c.l.b16 %v591
        %v763 = vunpack.c.h.b16 %v591
        %v764 = vunpack.c.l.b16 %v592
        %v765 = vunpack.c.l.b16 %v593
        %v766 = vunpack.c.h.b16 %v593
        %v767 = vunpack.c.l.b16 %v594
        %v768 = vunpack.c.l.b16 %v595
        %v769 = vunpack.c.h.b16 %v595
        %v770 = vunpack.c.l.b16 %v596
        %v771 = vunpack.c.l.b16 %v597
        %v772 = vunpack.c.h.b16 %v597
        %v773 = vunpack.c.l.b16 %v598
        %v774 = vunpack.c.l.b16 %v599
        %v775 = vunpack.c.h.b16 %v599
        %v776 = vunpack.c.l.b16 %v600
        %v777 = vpack.c.b16 %v732, %v729
        %v778 = vpack.c.b16 %v733, %v730
        %v779 = vpack.c.b16 %v734, %v731
        %v780 = vpack.c.b16 %v738, %v735
        %v781 = vpack.c.b16 %v739, %v736
        %v782 = vpack.c.b16 %v740, %v737
        %v783 = vpack.c.b16 %v744, %v741
        %v784 = vpack.c.b16 %v745, %v742
        %v785 = vpack.c.b16 %v746, %v743
        %v786 = vpack.c.b16 %v750, %v747
        %v787 = vpack.c.b16 %v751, %v748
        %v788 = vpack.c.b16 %v752, %v749
        %v789 = vpack.c.b16 %v756, %v753
        %v790 = vpack.c.b16 %v757, %v754
        %v791 = vpack.c.b16 %v758, %v755
        %v792 = vpack.c.b16 %v762, %v759
        %v793 = vpack.c.b16 %v763, %v760
        %v794 = vpack.c.b16 %v764, %v761
        %v795 = vpack.c.b16 %v768, %v765
        %v796 = vpack.c.b16 %v769, %v766
        %v797 = vpack.c.b16 %v770, %v767
        %v798 = vpack.c.b16 %v774, %v771
        %v799 = vpack.c.b16 %v775, %v772
        %v800 = vpack.c.b16 %v776, %v773
        %825 = vmatprep.subr.bf16.mxu0 %v778
        %826 = vmatpush1.bf16.msra.mxu0 %v777
        %827 = vmatprep.subr.bf16.mxu0 %v781
        %828 = vmatpush1.bf16.msra.mxu0 %v780
        %829 = vmatprep.subr.bf16.mxu0 %v784
        %830 = vmatpush1.bf16.msra.mxu0 %v783
        %831 = vmatprep.subr.bf16.mxu0 %v787
        %832 = vmatpush1.bf16.msra.mxu0 %v786
        %833 = vmatprep.subr.bf16.mxu0 %v790
        %834 = vmatpush1.bf16.msra.mxu0 %v789
        %835 = vmatprep.subr.bf16.mxu0 %v793
        %836 = vmatpush1.bf16.msra.mxu0 %v792
        %837 = vmatprep.subr.bf16.mxu0 %v796
        %838 = vmatpush1.bf16.msra.mxu0 %v795
        %839 = vmatprep.subr.bf16.mxu0 %v799
        %840 = vmatpush1.bf16.msra.mxu0 %v798
        %841 = vmatprep.subr.bf16.mxu0 0
        %842 = vmatpush1.bf16.msra.mxu0 0
        %843 = vmatprep.subr.bf16.mxu0 0
        %844 = vmatpush1.bf16.msra.mxu0 0
        %845 = vmatprep.subr.bf16.mxu0 0
        %846 = vmatpush1.bf16.msra.mxu0 0
        %847 = vmatprep.subr.bf16.mxu0 0
        %848 = vmatpush1.bf16.msra.mxu0 0
        %849 = vmatprep.subr.bf16.mxu0 0
        %850 = vmatpush1.bf16.msra.mxu0 0
        %851 = vmatprep.subr.bf16.mxu0 0
        %852 = vmatpush1.bf16.msra.mxu0 0
        %853 = vmatprep.subr.bf16.mxu0 0
        %854 = vmatpush1.bf16.msra.mxu0 0
        %855 = vmatprep.subr.bf16.mxu0 0
        %856 = vmatpush1.bf16.msra.mxu0 0
        %857 = vmatprep.mubr.bf16.mxu0 0
        %858 = vmatmul.mubr.bf16.gmra.mrb[0].mxu0 %v665
        %v859 = vpop.f32.mrb[0].mxu0
        %v860 = vadd.f32 0.0, %v859
        %v861 = vpop.f32.mrb[0].mxu0
        %v862 = vadd.f32 0.0, %v861
        %v863 = vpop.f32.mrb[0].mxu0
        %v864 = vadd.f32 0.0, %v863
        %v865 = vpop.f32.mrb[0].mxu0
        %v866 = vadd.f32 0.0, %v865
        %867 = vmatprep.mubr.bf16.mxu0 0
        %868 = vmatmul.mubr.bf16.gmra.mrb[0].mxu0 %v666
        %v869 = vpop.f32.mrb[0].mxu0
        %v870 = vadd.f32 0.0, %v869
        %v871 = vpop.f32.mrb[0].mxu0
        %v872 = vadd.f32 0.0, %v871
        %v873 = vpop.f32.mrb[0].mxu0
        %v874 = vadd.f32 0.0, %v873
        %v875 = vpop.f32.mrb[0].mxu0
        %v876 = vadd.f32 0.0, %v875
        %877 = vmatprep.mubr.bf16.mxu0 0
        %878 = vmatmul.mubr.bf16.gmra.mrb[0].mxu0 %v667
        %v879 = vpop.f32.mrb[0].mxu0
        %v880 = vadd.f32 0.0, %v879
        %v881 = vpop.f32.mrb[0].mxu0
        %v882 = vadd.f32 0.0, %v881
        %v883 = vpop.f32.mrb[0].mxu0
        %v884 = vadd.f32 0.0, %v883
        %v885 = vpop.f32.mrb[0].mxu0
        %v886 = vadd.f32 0.0, %v885
        %887 = vmatprep.mubr.bf16.mxu0 0
        %888 = vmatmul.mubr.bf16.gmra.mrb[0].mxu0 %v668
        %v889 = vpop.f32.mrb[0].mxu0
        %v890 = vadd.f32 0.0, %v889
        %v891 = vpop.f32.mrb[0].mxu0
        %v892 = vadd.f32 0.0, %v891
        %v893 = vpop.f32.mrb[0].mxu0
        %v894 = vadd.f32 0.0, %v893
        %v895 = vpop.f32.mrb[0].mxu0
        %v896 = vadd.f32 0.0, %v895
        %897 = vmatprep.mubr.bf16.mxu0 0
        %898 = vmatmul.mubr.bf16.gmra.mrb[0].mxu0 %v669
        %v899 = vpop.f32.mrb[0].mxu0
        %v900 = vadd.f32 0.0, %v899
        %v901 = vpop.f32.mrb[0].mxu0
        %v902 = vadd.f32 0.0, %v901
        %v903 = vpop.f32.mrb[0].mxu0
        %v904 = vadd.f32 0.0, %v903
        %v905 = vpop.f32.mrb[0].mxu0
        %v906 = vadd.f32 0.0, %v905
        %907 = vmatprep.mubr.bf16.mxu0 0
        %908 = vmatmul.mubr.bf16.gmra.mrb[0].mxu0 %v670
        %v909 = vpop.f32.mrb[0].mxu0
        %v910 = vadd.f32 0.0, %v909
        %v911 = vpop.f32.mrb[0].mxu0
        %v912 = vadd.f32 0.0, %v911
        %v913 = vpop.f32.mrb[0].mxu0
        %v914 = vadd.f32 0.0, %v913
        %v915 = vpop.f32.mrb[0].mxu0
        %v916 = vadd.f32 0.0, %v915
        %917 = vmatprep.mubr.bf16.mxu0 0
        %918 = vmatmul.mubr.bf16.gmra.mrb[0].mxu0 %v671
        %v919 = vpop.f32.mrb[0].mxu0
        %v920 = vadd.f32 0.0, %v919
        %v921 = vpop.f32.mrb[0].mxu0
        %v922 = vadd.f32 0.0, %v921
        %v923 = vpop.f32.mrb[0].mxu0
        %v924 = vadd.f32 0.0, %v923
        %v925 = vpop.f32.mrb[0].mxu0
        %v926 = vadd.f32 0.0, %v925
        %927 = vmatprep.mubr.bf16.mxu0 0
        %928 = vmatmul.mubr.bf16.gmra.mrb[0].mxu0 %v672
        %v929 = vpop.f32.mrb[0].mxu0
        %v930 = vadd.f32 0.0, %v929
        %v931 = vpop.f32.mrb[0].mxu0
        %v932 = vadd.f32 0.0, %v931
        %v933 = vpop.f32.mrb[0].mxu0
        %v934 = vadd.f32 0.0, %v933
        %v935 = vpop.f32.mrb[0].mxu0
        %v936 = vadd.f32 0.0, %v935
        %937 = vmatprep.mubr.bf16.mxu0 0
        %938 = vmatmul.mubr.bf16.gmra.mrb[0].mxu0 %v673
        %v939 = vpop.f32.mrb[0].mxu0
        %v940 = vadd.f32 0.0, %v939
        %v941 = vpop.f32.mrb[0].mxu0
        %v942 = vadd.f32 0.0, %v941
        %v943 = vpop.f32.mrb[0].mxu0
        %v944 = vadd.f32 0.0, %v943
        %v945 = vpop.f32.mrb[0].mxu0
        %v946 = vadd.f32 0.0, %v945
        %947 = vmatprep.mubr.bf16.mxu0 0
        %948 = vmatmul.mubr.bf16.gmra.mrb[0].mxu0 %v674
        %v949 = vpop.f32.mrb[0].mxu0
        %v950 = vadd.f32 0.0, %v949
        %v951 = vpop.f32.mrb[0].mxu0
        %v952 = vadd.f32 0.0, %v951
        %v953 = vpop.f32.mrb[0].mxu0
        %v954 = vadd.f32 0.0, %v953
        %v955 = vpop.f32.mrb[0].mxu0
        %v956 = vadd.f32 0.0, %v955
        %957 = vmatprep.mubr.bf16.mxu0 0
        %958 = vmatmul.mubr.bf16.gmra.mrb[0].mxu0 %v675
        %v959 = vpop.f32.mrb[0].mxu0
        %v960 = vadd.f32 0.0, %v959
        %v961 = vpop.f32.mrb[0].mxu0
        %v962 = vadd.f32 0.0, %v961
        %v963 = vpop.f32.mrb[0].mxu0
        %v964 = vadd.f32 0.0, %v963
        %v965 = vpop.f32.mrb[0].mxu0
        %v966 = vadd.f32 0.0, %v965
        %967 = vmatprep.mubr.bf16.mxu0 0
        %968 = vmatmul.mubr.bf16.gmra.mrb[0].mxu0 %v676
        %v969 = vpop.f32.mrb[0].mxu0
        %v970 = vadd.f32 0.0, %v969
        %v971 = vpop.f32.mrb[0].mxu0
        %v972 = vadd.f32 0.0, %v971
        %v973 = vpop.f32.mrb[0].mxu0
        %v974 = vadd.f32 0.0, %v973
        %v975 = vpop.f32.mrb[0].mxu0
        %v976 = vadd.f32 0.0, %v975
        %977 = vmatprep.mubr.bf16.mxu0 0
        %978 = vmatmul.mubr.bf16.gmra.mrb[0].mxu0 %v677
        %v979 = vpop.f32.mrb[0].mxu0
        %v980 = vadd.f32 0.0, %v979
        %v981 = vpop.f32.mrb[0].mxu0
        %v982 = vadd.f32 0.0, %v981
        %v983 = vpop.f32.mrb[0].mxu0
        %v984 = vadd.f32 0.0, %v983
        %v985 = vpop.f32.mrb[0].mxu0
        %v986 = vadd.f32 0.0, %v985
        %987 = vmatprep.mubr.bf16.mxu0 0
        %988 = vmatmul.mubr.bf16.gmra.mrb[0].mxu0 %v678
        %v989 = vpop.f32.mrb[0].mxu0
        %v990 = vadd.f32 0.0, %v989
        %v991 = vpop.f32.mrb[0].mxu0
        %v992 = vadd.f32 0.0, %v991
        %v993 = vpop.f32.mrb[0].mxu0
        %v994 = vadd.f32 0.0, %v993
        %v995 = vpop.f32.mrb[0].mxu0
        %v996 = vadd.f32 0.0, %v995
        %997 = vmatprep.mubr.bf16.mxu0 0
        %998 = vmatmul.mubr.bf16.gmra.mrb[0].mxu0 %v679
        %v999 = vpop.f32.mrb[0].mxu0
        %v1000 = vadd.f32 0.0, %v999
        %v1001 = vpop.f32.mrb[0].mxu0
        %v1002 = vadd.f32 0.0, %v1001
        %v1003 = vpop.f32.mrb[0].mxu0
        %v1004 = vadd.f32 0.0, %v1003
        %v1005 = vpop.f32.mrb[0].mxu0
        %v1006 = vadd.f32 0.0, %v1005
        %1007 = vmatprep.mubr.bf16.mxu0 0
        %1008 = vmatmul.mubr.bf16.gmra.mrb[0].mxu0 %v680
        %v1009 = vpop.f32.mrb[0].mxu0
        %v1010 = vadd.f32 0.0, %v1009
        %v1011 = vpop.f32.mrb[0].mxu0
        %v1012 = vadd.f32 0.0, %v1011
        %v1013 = vpop.f32.mrb[0].mxu0
        %v1014 = vadd.f32 0.0, %v1013
        %v1015 = vpop.f32.mrb[0].mxu0
        %v1016 = vadd.f32 0.0, %v1015
        %1017 = vdwg.mxu0
        %1018 = vmatprep.subr.bf16.mxu0 0
        %1019 = vmatpush1.bf16.msra.mxu0 %v779
        %1020 = vmatprep.subr.bf16.mxu0 0
        %1021 = vmatpush1.bf16.msra.mxu0 %v782
        %1022 = vmatprep.subr.bf16.mxu0 0
        %1023 = vmatpush1.bf16.msra.mxu0 %v785
        %1024 = vmatprep.subr.bf16.mxu0 0
        %1025 = vmatpush1.bf16.msra.mxu0 %v788
        %1026 = vmatprep.subr.bf16.mxu0 0
        %1027 = vmatpush1.bf16.msra.mxu0 %v791
        %1028 = vmatprep.subr.bf16.mxu0 0
        %1029 = vmatpush1.bf16.msra.mxu0 %v794
        %1030 = vmatprep.subr.bf16.mxu0 0
        %1031 = vmatpush1.bf16.msra.mxu0 %v797
        %1032 = vmatprep.subr.bf16.mxu0 0
        %1033 = vmatpush1.bf16.msra.mxu0 %v800
        %1034 = vmatprep.subr.bf16.mxu0 0
        %1035 = vmatpush1.bf16.msra.mxu0 0
        %1036 = vmatprep.subr.bf16.mxu0 0
        %1037 = vmatpush1.bf16.msra.mxu0 0
        %1038 = vmatprep.subr.bf16.mxu0 0
        %1039 = vmatpush1.bf16.msra.mxu0 0
        %1040 = vmatprep.subr.bf16.mxu0 0
        %1041 = vmatpush1.bf16.msra.mxu0 0
        %1042 = vmatprep.subr.bf16.mxu0 0
        %1043 = vmatpush1.bf16.msra.mxu0 0
        %1044 = vmatprep.subr.bf16.mxu0 0
        %1045 = vmatpush1.bf16.msra.mxu0 0
        %1046 = vmatprep.subr.bf16.mxu0 0
        %1047 = vmatpush1.bf16.msra.mxu0 0
        %1048 = vmatprep.subr.bf16.mxu0 0
        %1049 = vmatpush1.bf16.msra.mxu0 0
        %1050 = vmatprep.mubr.bf16.mxu0 0
        %1051 = vmatmul.mubr.bf16.gmra.mrb[0].mxu0 %v665
        %v1052 = vpop.f32.mrb[0].mxu0
        %v1053 = vadd.f32 0.0, %v1052
        %v1054 = vpop.f32.mrb[0].mxu0
        %v1055 = vpop.f32.mrb[0].mxu0
        %v1056 = vadd.f32 0.0, %v1055
        %v1057 = vpop.f32.mrb[0].mxu0
        %1058 = vmatprep.mubr.bf16.mxu0 0
        %1059 = vmatmul.mubr.bf16.gmra.mrb[0].mxu0 %v666
        %v1060 = vpop.f32.mrb[0].mxu0
        %v1061 = vadd.f32 0.0, %v1060
        %v1062 = vpop.f32.mrb[0].mxu0
        %v1063 = vpop.f32.mrb[0].mxu0
        %v1064 = vadd.f32 0.0, %v1063
        %v1065 = vpop.f32.mrb[0].mxu0
        %1066 = vmatprep.mubr.bf16.mxu0 0
        %1067 = vmatmul.mubr.bf16.gmra.mrb[0].mxu0 %v667
        %v1068 = vpop.f32.mrb[0].mxu0
        %v1069 = vadd.f32 0.0, %v1068
        %v1070 = vpop.f32.mrb[0].mxu0
        %v1071 = vpop.f32.mrb[0].mxu0
        %v1072 = vadd.f32 0.0, %v1071
        %v1073 = vpop.f32.mrb[0].mxu0
        %1074 = vmatprep.mubr.bf16.mxu0 0
        %1075 = vmatmul.mubr.bf16.gmra.mrb[0].mxu0 %v668
        %v1076 = vpop.f32.mrb[0].mxu0
        %v1077 = vadd.f32 0.0, %v1076
        %v1078 = vpop.f32.mrb[0].mxu0
        %v1079 = vpop.f32.mrb[0].mxu0
        %v1080 = vadd.f32 0.0, %v1079
        %v1081 = vpop.f32.mrb[0].mxu0
        %1082 = vmatprep.mubr.bf16.mxu0 0
        %1083 = vmatmul.mubr.bf16.gmra.mrb[0].mxu0 %v669
        %v1084 = vpop.f32.mrb[0].mxu0
        %v1085 = vadd.f32 0.0, %v1084
        %v1086 = vpop.f32.mrb[0].mxu0
        %v1087 = vpop.f32.mrb[0].mxu0
        %v1088 = vadd.f32 0.0, %v1087
        %v1089 = vpop.f32.mrb[0].mxu0
        %1090 = vmatprep.mubr.bf16.mxu0 0
        %1091 = vmatmul.mubr.bf16.gmra.mrb[0].mxu0 %v670
        %v1092 = vpop.f32.mrb[0].mxu0
        %v1093 = vadd.f32 0.0, %v1092
        %v1094 = vpop.f32.mrb[0].mxu0
        %v1095 = vpop.f32.mrb[0].mxu0
        %v1096 = vadd.f32 0.0, %v1095
        %v1097 = vpop.f32.mrb[0].mxu0
        %1098 = vmatprep.mubr.bf16.mxu0 0
        %1099 = vmatmul.mubr.bf16.gmra.mrb[0].mxu0 %v671
        %v1100 = vpop.f32.mrb[0].mxu0
        %v1101 = vadd.f32 0.0, %v1100
        %v1102 = vpop.f32.mrb[0].mxu0
        %v1103 = vpop.f32.mrb[0].mxu0
        %v1104 = vadd.f32 0.0, %v1103
        %v1105 = vpop.f32.mrb[0].mxu0
        %1106 = vmatprep.mubr.bf16.mxu0 0
        %1107 = vmatmul.mubr.bf16.gmra.mrb[0].mxu0 %v672
        %v1108 = vpop.f32.mrb[0].mxu0
        %v1109 = vadd.f32 0.0, %v1108
        %v1110 = vpop.f32.mrb[0].mxu0
        %v1111 = vpop.f32.mrb[0].mxu0
        %v1112 = vadd.f32 0.0, %v1111
        %v1113 = vpop.f32.mrb[0].mxu0
        %1114 = vmatprep.mubr.bf16.mxu0 0
        %1115 = vmatmul.mubr.bf16.gmra.mrb[0].mxu0 %v673
        %v1116 = vpop.f32.mrb[0].mxu0
        %v1117 = vadd.f32 0.0, %v1116
        %v1118 = vpop.f32.mrb[0].mxu0
        %v1119 = vpop.f32.mrb[0].mxu0
        %v1120 = vadd.f32 0.0, %v1119
        %v1121 = vpop.f32.mrb[0].mxu0
        %1122 = vmatprep.mubr.bf16.mxu0 0
        %1123 = vmatmul.mubr.bf16.gmra.mrb[0].mxu0 %v674
        %v1124 = vpop.f32.mrb[0].mxu0
        %v1125 = vadd.f32 0.0, %v1124
        %v1126 = vpop.f32.mrb[0].mxu0
        %v1127 = vpop.f32.mrb[0].mxu0
        %v1128 = vadd.f32 0.0, %v1127
        %v1129 = vpop.f32.mrb[0].mxu0
        %1130 = vmatprep.mubr.bf16.mxu0 0
        %1131 = vmatmul.mubr.bf16.gmra.mrb[0].mxu0 %v675
        %v1132 = vpop.f32.mrb[0].mxu0
        %v1133 = vadd.f32 0.0, %v1132
        %v1134 = vpop.f32.mrb[0].mxu0
        %v1135 = vpop.f32.mrb[0].mxu0
        %v1136 = vadd.f32 0.0, %v1135
        %v1137 = vpop.f32.mrb[0].mxu0
        %1138 = vmatprep.mubr.bf16.mxu0 0
        %1139 = vmatmul.mubr.bf16.gmra.mrb[0].mxu0 %v676
        %v1140 = vpop.f32.mrb[0].mxu0
        %v1141 = vadd.f32 0.0, %v1140
        %v1142 = vpop.f32.mrb[0].mxu0
        %v1143 = vpop.f32.mrb[0].mxu0
        %v1144 = vadd.f32 0.0, %v1143
        %v1145 = vpop.f32.mrb[0].mxu0
        %1146 = vmatprep.mubr.bf16.mxu0 0
        %1147 = vmatmul.mubr.bf16.gmra.mrb[0].mxu0 %v677
        %v1148 = vpop.f32.mrb[0].mxu0
        %v1149 = vadd.f32 0.0, %v1148
        %v1150 = vpop.f32.mrb[0].mxu0
        %v1151 = vpop.f32.mrb[0].mxu0
        %v1152 = vadd.f32 0.0, %v1151
        %v1153 = vpop.f32.mrb[0].mxu0
        %1154 = vmatprep.mubr.bf16.mxu0 0
        %1155 = vmatmul.mubr.bf16.gmra.mrb[0].mxu0 %v678
        %v1156 = vpop.f32.mrb[0].mxu0
        %v1157 = vadd.f32 0.0, %v1156
        %v1158 = vpop.f32.mrb[0].mxu0
        %v1159 = vpop.f32.mrb[0].mxu0
        %v1160 = vadd.f32 0.0, %v1159
        %v1161 = vpop.f32.mrb[0].mxu0
        %1162 = vmatprep.mubr.bf16.mxu0 0
        %1163 = vmatmul.mubr.bf16.gmra.mrb[0].mxu0 %v679
        %v1164 = vpop.f32.mrb[0].mxu0
        %v1165 = vadd.f32 0.0, %v1164
        %v1166 = vpop.f32.mrb[0].mxu0
        %v1167 = vpop.f32.mrb[0].mxu0
        %v1168 = vadd.f32 0.0, %v1167
        %v1169 = vpop.f32.mrb[0].mxu0
        %1170 = vmatprep.mubr.bf16.mxu0 0
        %1171 = vmatmul.mubr.bf16.gmra.mrb[0].mxu0 %v680
        %v1172 = vpop.f32.mrb[0].mxu0
        %v1173 = vadd.f32 0.0, %v1172
        %v1174 = vpop.f32.mrb[0].mxu0
        %v1175 = vpop.f32.mrb[0].mxu0
        %v1176 = vadd.f32 0.0, %v1175
        %v1177 = vpop.f32.mrb[0].mxu0
        %1178 = vdwg.mxu0
        %v1179 = vld [vmem:[%s519] sm:$0x1]
        %v1181 = vlaneseq
        %v1182 = vshrl.u32 %v1181, 7
        %v1183 = vsub.s32 0, %v1182
        %v1184 = vrot.slane %v1179, %v1183
        %v1186 = vadd.f32 %v860, %v1184
        %v1187 = vadd.f32 %v864, %v1184
        %v1188 = vadd.f32 %v870, %v1184
        %v1189 = vadd.f32 %v874, %v1184
        %v1190 = vadd.f32 %v880, %v1184
        %v1191 = vadd.f32 %v884, %v1184
        %v1192 = vadd.f32 %v890, %v1184
        %v1193 = vadd.f32 %v894, %v1184
        %v1194 = vadd.f32 %v900, %v1184
        %v1195 = vadd.f32 %v904, %v1184
        %v1196 = vadd.f32 %v910, %v1184
        %v1197 = vadd.f32 %v914, %v1184
        %v1198 = vadd.f32 %v920, %v1184
        %v1199 = vadd.f32 %v924, %v1184
        %v1200 = vadd.f32 %v930, %v1184
        %v1201 = vadd.f32 %v934, %v1184
        %v1202 = vadd.f32 %v940, %v1184
        %v1203 = vadd.f32 %v944, %v1184
        %v1204 = vadd.f32 %v950, %v1184
        %v1205 = vadd.f32 %v954, %v1184
        %v1206 = vadd.f32 %v960, %v1184
        %v1207 = vadd.f32 %v964, %v1184
        %v1208 = vadd.f32 %v970, %v1184
        %v1209 = vadd.f32 %v974, %v1184
        %v1210 = vadd.f32 %v980, %v1184
        %v1211 = vadd.f32 %v984, %v1184
        %v1212 = vadd.f32 %v990, %v1184
        %v1213 = vadd.f32 %v994, %v1184
        %v1214 = vadd.f32 %v1000, %v1184
        %v1215 = vadd.f32 %v1004, %v1184
        %v1216 = vadd.f32 %v1010, %v1184
        %v1217 = vadd.f32 %v1014, %v1184
        %v1218 = vmax.f32 %v1186, 0.0
        %v1219 = vmax.f32 %v1187, 0.0
        %v1220 = vmax.f32 %v1188, 0.0
        %v1221 = vmax.f32 %v1189, 0.0
        %v1222 = vmax.f32 %v1190, 0.0
        %v1223 = vmax.f32 %v1191, 0.0
        %v1224 = vmax.f32 %v1192, 0.0
        %v1225 = vmax.f32 %v1193, 0.0
        %v1226 = vmax.f32 %v1194, 0.0
        %v1227 = vmax.f32 %v1195, 0.0
        %v1228 = vmax.f32 %v1196, 0.0
        %v1229 = vmax.f32 %v1197, 0.0
        %v1230 = vmax.f32 %v1198, 0.0
        %v1231 = vmax.f32 %v1199, 0.0
        %v1232 = vmax.f32 %v1200, 0.0
        %v1233 = vmax.f32 %v1201, 0.0
        %v1234 = vmax.f32 %v1202, 0.0
        %v1235 = vmax.f32 %v1203, 0.0
        %v1236 = vmax.f32 %v1204, 0.0
        %v1237 = vmax.f32 %v1205, 0.0
        %v1238 = vmax.f32 %v1206, 0.0
        %v1239 = vmax.f32 %v1207, 0.0
        %v1240 = vmax.f32 %v1208, 0.0
        %v1241 = vmax.f32 %v1209, 0.0
        %v1242 = vmax.f32 %v1210, 0.0
        %v1243 = vmax.f32 %v1211, 0.0
        %v1244 = vmax.f32 %v1212, 0.0
        %v1245 = vmax.f32 %v1213, 0.0
        %v1246 = vmax.f32 %v1214, 0.0
        %v1247 = vmax.f32 %v1215, 0.0
        %v1248 = vmax.f32 %v1216, 0.0
        %v1249 = vmax.f32 %v1217, 0.0
        %v1250 = vld [vmem:[%s522] sm:$0x1]
        %v1252 = vlaneseq
        %v1253 = vshrl.u32 %v1252, 7
        %v1254 = vsub.s32 0, %v1253
        %v1255 = vrot.slane %v1250, %v1254
        %v1257 = vadd.f32 %v862, %v1255
        %v1258 = vadd.f32 %v866, %v1255
        %v1259 = vadd.f32 %v872, %v1255
        %v1260 = vadd.f32 %v876, %v1255
        %v1261 = vadd.f32 %v882, %v1255
        %v1262 = vadd.f32 %v886, %v1255
        %v1263 = vadd.f32 %v892, %v1255
        %v1264 = vadd.f32 %v896, %v1255
        %v1265 = vadd.f32 %v902, %v1255
        %v1266 = vadd.f32 %v906, %v1255
        %v1267 = vadd.f32 %v912, %v1255
        %v1268 = vadd.f32 %v916, %v1255
        %v1269 = vadd.f32 %v922, %v1255
        %v1270 = vadd.f32 %v926, %v1255
        %v1271 = vadd.f32 %v932, %v1255
        %v1272 = vadd.f32 %v936, %v1255
        %v1273 = vadd.f32 %v942, %v1255
        %v1274 = vadd.f32 %v946, %v1255
        %v1275 = vadd.f32 %v952, %v1255
        %v1276 = vadd.f32 %v956, %v1255
        %v1277 = vadd.f32 %v962, %v1255
        %v1278 = vadd.f32 %v966, %v1255
        %v1279 = vadd.f32 %v972, %v1255
        %v1280 = vadd.f32 %v976, %v1255
        %v1281 = vadd.f32 %v982, %v1255
        %v1282 = vadd.f32 %v986, %v1255
        %v1283 = vadd.f32 %v992, %v1255
        %v1284 = vadd.f32 %v996, %v1255
        %v1285 = vadd.f32 %v1002, %v1255
        %v1286 = vadd.f32 %v1006, %v1255
        %v1287 = vadd.f32 %v1012, %v1255
        %v1288 = vadd.f32 %v1016, %v1255
        %v1289 = vpack.c.bf16 %v1219, %v1218
        %v1290 = vpack.c.bf16 %v1221, %v1220
        %v1291 = vpack.c.bf16 %v1223, %v1222
        %v1292 = vpack.c.bf16 %v1225, %v1224
        %v1293 = vpack.c.bf16 %v1227, %v1226
        %v1294 = vpack.c.bf16 %v1229, %v1228
        %v1295 = vpack.c.bf16 %v1231, %v1230
        %v1296 = vpack.c.bf16 %v1233, %v1232
        %v1297 = vpack.c.bf16 %v1235, %v1234
        %v1298 = vpack.c.bf16 %v1237, %v1236
        %v1299 = vpack.c.bf16 %v1239, %v1238
        %v1300 = vpack.c.bf16 %v1241, %v1240
        %v1301 = vpack.c.bf16 %v1243, %v1242
        %v1302 = vpack.c.bf16 %v1245, %v1244
        %v1303 = vpack.c.bf16 %v1247, %v1246
        %v1304 = vpack.c.bf16 %v1249, %v1248
        %v1305 = vld [vmem:[%s5] sm:$0xf]
        %v1306 = vld [vmem:[%s5 + $0x4] sm:$0xf]
        %v1307 = vld [vmem:[%s5 + $0x8] sm:$0xf]
        %v1308 = vld [vmem:[%s5 + $0xc] sm:$0xf]
        %v1309 = vld [vmem:[%s5 + $0x10] sm:$0xf]
        %v1310 = vld [vmem:[%s5 + $0x14] sm:$0xf]
        %v1311 = vld [vmem:[%s5 + $0x18] sm:$0xf]
        %v1312 = vld [vmem:[%s5 + $0x1c] sm:$0xf]
        %v1313 = vld [vmem:[%s5 + $0x20] sm:$0xf]
        %v1314 = vld [vmem:[%s5 + $0x24] sm:$0xf]
        %v1315 = vld [vmem:[%s5 + $0x28] sm:$0xf]
        %v1316 = vld [vmem:[%s5 + $0x2c] sm:$0xf]
        %v1317 = vld [vmem:[%s5 + $0x30] sm:$0xf]
        %v1318 = vld [vmem:[%s5 + $0x34] sm:$0xf]
        %v1319 = vld [vmem:[%s5 + $0x38] sm:$0xf]
        %v1320 = vld [vmem:[%s5 + $0x3c] sm:$0xf]
        %v1321 = vld [vmem:[%s6] sm:$0x1]
        %v1323 = vlaneseq
        %v1324 = vshrl.u32 %v1323, 7
        %v1325 = vsub.s32 0, %v1324
        %v1326 = vrot.slane %v1321, %v1325
        %v1344 = vunpack.c.l.b16 %v1305
        %v1345 = vunpack.c.l.b16 %v1306
        %v1346 = vunpack.c.l.b16 %v1307
        %v1347 = vunpack.c.l.b16 %v1308
        %v1348 = vunpack.c.l.b16 %v1309
        %v1349 = vunpack.c.l.b16 %v1310
        %v1350 = vunpack.c.l.b16 %v1311
        %v1351 = vunpack.c.l.b16 %v1312
        %v1352 = vunpack.c.l.b16 %v1313
        %v1353 = vunpack.c.l.b16 %v1314
        %v1354 = vunpack.c.l.b16 %v1315
        %v1355 = vunpack.c.l.b16 %v1316
        %v1356 = vunpack.c.l.b16 %v1317
        %v1357 = vunpack.c.l.b16 %v1318
        %v1358 = vunpack.c.l.b16 %v1319
        %v1359 = vunpack.c.l.b16 %v1320
        %v1360 = vpack.c.b16 %v1345, %v1344
        %v1361 = vpack.c.b16 %v1347, %v1346
        %v1362 = vpack.c.b16 %v1349, %v1348
        %v1363 = vpack.c.b16 %v1351, %v1350
        %v1364 = vpack.c.b16 %v1353, %v1352
        %v1365 = vpack.c.b16 %v1355, %v1354
        %v1366 = vpack.c.b16 %v1357, %v1356
        %v1367 = vpack.c.b16 %v1359, %v1358
        %1376 = vmatprep.subr.bf16.mxu0 0
        %1377 = vmatpush1.bf16.msra.mxu0 %v1360
        %1378 = vmatprep.subr.bf16.mxu0 0
        %1379 = vmatpush1.bf16.msra.mxu0 %v1361
        %1380 = vmatprep.subr.bf16.mxu0 0
        %1381 = vmatpush1.bf16.msra.mxu0 %v1362
        %1382 = vmatprep.subr.bf16.mxu0 0
        %1383 = vmatpush1.bf16.msra.mxu0 %v1363
        %1384 = vmatprep.subr.bf16.mxu0 0
        %1385 = vmatpush1.bf16.msra.mxu0 %v1364
        %1386 = vmatprep.subr.bf16.mxu0 0
        %1387 = vmatpush1.bf16.msra.mxu0 %v1365
        %1388 = vmatprep.subr.bf16.mxu0 0
        %1389 = vmatpush1.bf16.msra.mxu0 %v1366
        %1390 = vmatprep.subr.bf16.mxu0 0
        %1391 = vmatpush1.bf16.msra.mxu0 %v1367
        %1392 = vmatprep.subr.bf16.mxu0 0
        %1393 = vmatpush1.bf16.msra.mxu0 0
        %1394 = vmatprep.subr.bf16.mxu0 0
        %1395 = vmatpush1.bf16.msra.mxu0 0
        %1396 = vmatprep.subr.bf16.mxu0 0
        %1397 = vmatpush1.bf16.msra.mxu0 0
        %1398 = vmatprep.subr.bf16.mxu0 0
        %1399 = vmatpush1.bf16.msra.mxu0 0
        %1400 = vmatprep.subr.bf16.mxu0 0
        %1401 = vmatpush1.bf16.msra.mxu0 0
        %1402 = vmatprep.subr.bf16.mxu0 0
        %1403 = vmatpush1.bf16.msra.mxu0 0
        %1404 = vmatprep.subr.bf16.mxu0 0
        %1405 = vmatpush1.bf16.msra.mxu0 0
        %1406 = vmatprep.subr.bf16.mxu0 0
        %1407 = vmatpush1.bf16.msra.mxu0 0
        %1408 = vmatprep.mubr.bf16.mxu0 0
        %1409 = vmatmul.mubr.bf16.gmra.mrb[0].mxu0 %v1289
        %v1410 = vpop.f32.mrb[0].mxu0
        %v1411 = vadd.f32 %v1326, %v1410
        %v1412 = vpop.f32.mrb[0].mxu0
        %v1413 = vpop.f32.mrb[0].mxu0
        %v1414 = vadd.f32 %v1326, %v1413
        %v1415 = vpop.f32.mrb[0].mxu0
        %1416 = vmatprep.mubr.bf16.mxu0 0
        %1417 = vmatmul.mubr.bf16.gmra.mrb[0].mxu0 %v1290
        %v1418 = vpop.f32.mrb[0].mxu0
        %v1419 = vadd.f32 %v1326, %v1418
        %v1420 = vpop.f32.mrb[0].mxu0
        %v1421 = vpop.f32.mrb[0].mxu0
        %v1422 = vadd.f32 %v1326, %v1421
        %v1423 = vpop.f32.mrb[0].mxu0
        %1424 = vmatprep.mubr.bf16.mxu0 0
        %1425 = vmatmul.mubr.bf16.gmra.mrb[0].mxu0 %v1291
        %v1426 = vpop.f32.mrb[0].mxu0
        %v1427 = vadd.f32 %v1326, %v1426
        %v1428 = vpop.f32.mrb[0].mxu0
        %v1429 = vpop.f32.mrb[0].mxu0
        %v1430 = vadd.f32 %v1326, %v1429
        %v1431 = vpop.f32.mrb[0].mxu0
        %1432 = vmatprep.mubr.bf16.mxu0 0
        %1433 = vmatmul.mubr.bf16.gmra.mrb[0].mxu0 %v1292
        %v1434 = vpop.f32.mrb[0].mxu0
        %v1435 = vadd.f32 %v1326, %v1434
        %v1436 = vpop.f32.mrb[0].mxu0
        %v1437 = vpop.f32.mrb[0].mxu0
        %v1438 = vadd.f32 %v1326, %v1437
        %v1439 = vpop.f32.mrb[0].mxu0
        %1440 = vmatprep.mubr.bf16.mxu0 0
        %1441 = vmatmul.mubr.bf16.gmra.mrb[0].mxu0 %v1293
        %v1442 = vpop.f32.mrb[0].mxu0
        %v1443 = vadd.f32 %v1326, %v1442
        %v1444 = vpop.f32.mrb[0].mxu0
        %v1445 = vpop.f32.mrb[0].mxu0
        %v1446 = vadd.f32 %v1326, %v1445
        %v1447 = vpop.f32.mrb[0].mxu0
        %1448 = vmatprep.mubr.bf16.mxu0 0
        %1449 = vmatmul.mubr.bf16.gmra.mrb[0].mxu0 %v1294
        %v1450 = vpop.f32.mrb[0].mxu0
        %v1451 = vadd.f32 %v1326, %v1450
        %v1452 = vpop.f32.mrb[0].mxu0
        %v1453 = vpop.f32.mrb[0].mxu0
        %v1454 = vadd.f32 %v1326, %v1453
        %v1455 = vpop.f32.mrb[0].mxu0
        %1456 = vmatprep.mubr.bf16.mxu0 0
        %1457 = vmatmul.mubr.bf16.gmra.mrb[0].mxu0 %v1295
        %v1458 = vpop.f32.mrb[0].mxu0
        %v1459 = vadd.f32 %v1326, %v1458
        %v1460 = vpop.f32.mrb[0].mxu0
        %v1461 = vpop.f32.mrb[0].mxu0
        %v1462 = vadd.f32 %v1326, %v1461
        %v1463 = vpop.f32.mrb[0].mxu0
        %1464 = vmatprep.mubr.bf16.mxu0 0
        %1465 = vmatmul.mubr.bf16.gmra.mrb[0].mxu0 %v1296
        %v1466 = vpop.f32.mrb[0].mxu0
        %v1467 = vadd.f32 %v1326, %v1466
        %v1468 = vpop.f32.mrb[0].mxu0
        %v1469 = vpop.f32.mrb[0].mxu0
        %v1470 = vadd.f32 %v1326, %v1469
        %v1471 = vpop.f32.mrb[0].mxu0
        %1472 = vmatprep.mubr.bf16.mxu0 0
        %1473 = vmatmul.mubr.bf16.gmra.mrb[0].mxu0 %v1297
        %v1474 = vpop.f32.mrb[0].mxu0
        %v1475 = vadd.f32 %v1326, %v1474
        %v1476 = vpop.f32.mrb[0].mxu0
        %v1477 = vpop.f32.mrb[0].mxu0
        %v1478 = vadd.f32 %v1326, %v1477
        %v1479 = vpop.f32.mrb[0].mxu0
        %1480 = vmatprep.mubr.bf16.mxu0 0
        %1481 = vmatmul.mubr.bf16.gmra.mrb[0].mxu0 %v1298
        %v1482 = vpop.f32.mrb[0].mxu0
        %v1483 = vadd.f32 %v1326, %v1482
        %v1484 = vpop.f32.mrb[0].mxu0
        %v1485 = vpop.f32.mrb[0].mxu0
        %v1486 = vadd.f32 %v1326, %v1485
        %v1487 = vpop.f32.mrb[0].mxu0
        %1488 = vmatprep.mubr.bf16.mxu0 0
        %1489 = vmatmul.mubr.bf16.gmra.mrb[0].mxu0 %v1299
        %v1490 = vpop.f32.mrb[0].mxu0
        %v1491 = vadd.f32 %v1326, %v1490
        %v1492 = vpop.f32.mrb[0].mxu0
        %v1493 = vpop.f32.mrb[0].mxu0
        %v1494 = vadd.f32 %v1326, %v1493
        %v1495 = vpop.f32.mrb[0].mxu0
        %1496 = vmatprep.mubr.bf16.mxu0 0
        %1497 = vmatmul.mubr.bf16.gmra.mrb[0].mxu0 %v1300
        %v1498 = vpop.f32.mrb[0].mxu0
        %v1499 = vadd.f32 %v1326, %v1498
        %v1500 = vpop.f32.mrb[0].mxu0
        %v1501 = vpop.f32.mrb[0].mxu0
        %v1502 = vadd.f32 %v1326, %v1501
        %v1503 = vpop.f32.mrb[0].mxu0
        %1504 = vmatprep.mubr.bf16.mxu0 0
        %1505 = vmatmul.mubr.bf16.gmra.mrb[0].mxu0 %v1301
        %v1506 = vpop.f32.mrb[0].mxu0
        %v1507 = vadd.f32 %v1326, %v1506
        %v1508 = vpop.f32.mrb[0].mxu0
        %v1509 = vpop.f32.mrb[0].mxu0
        %v1510 = vadd.f32 %v1326, %v1509
        %v1511 = vpop.f32.mrb[0].mxu0
        %1512 = vmatprep.mubr.bf16.mxu0 0
        %1513 = vmatmul.mubr.bf16.gmra.mrb[0].mxu0 %v1302
        %v1514 = vpop.f32.mrb[0].mxu0
        %v1515 = vadd.f32 %v1326, %v1514
        %v1516 = vpop.f32.mrb[0].mxu0
        %v1517 = vpop.f32.mrb[0].mxu0
        %v1518 = vadd.f32 %v1326, %v1517
        %v1519 = vpop.f32.mrb[0].mxu0
        %1520 = vmatprep.mubr.bf16.mxu0 0
        %1521 = vmatmul.mubr.bf16.gmra.mrb[0].mxu0 %v1303
        %v1522 = vpop.f32.mrb[0].mxu0
        %v1523 = vadd.f32 %v1326, %v1522
        %v1524 = vpop.f32.mrb[0].mxu0
        %v1525 = vpop.f32.mrb[0].mxu0
        %v1526 = vadd.f32 %v1326, %v1525
        %v1527 = vpop.f32.mrb[0].mxu0
        %1528 = vmatprep.mubr.bf16.mxu0 0
        %1529 = vmatmul.mubr.bf16.gmra.mrb[0].mxu0 %v1304
        %v1530 = vpop.f32.mrb[0].mxu0
        %v1531 = vadd.f32 %v1326, %v1530
        %v1532 = vpop.f32.mrb[0].mxu0
        %v1533 = vpop.f32.mrb[0].mxu0
        %v1534 = vadd.f32 %v1326, %v1533
        %v1535 = vpop.f32.mrb[0].mxu0
        %1536 = vdwg.mxu0
        %v1537 = vmax.f32 %v1411, 0.0
        %v1538 = vmax.f32 %v1414, 0.0
        %v1539 = vmax.f32 %v1419, 0.0
        %v1540 = vmax.f32 %v1422, 0.0
        %v1541 = vmax.f32 %v1427, 0.0
        %v1542 = vmax.f32 %v1430, 0.0
        %v1543 = vmax.f32 %v1435, 0.0
        %v1544 = vmax.f32 %v1438, 0.0
        %v1545 = vmax.f32 %v1443, 0.0
        %v1546 = vmax.f32 %v1446, 0.0
        %v1547 = vmax.f32 %v1451, 0.0
        %v1548 = vmax.f32 %v1454, 0.0
        %v1549 = vmax.f32 %v1459, 0.0
        %v1550 = vmax.f32 %v1462, 0.0
        %v1551 = vmax.f32 %v1467, 0.0
        %v1552 = vmax.f32 %v1470, 0.0
        %v1553 = vmax.f32 %v1475, 0.0
        %v1554 = vmax.f32 %v1478, 0.0
        %v1555 = vmax.f32 %v1483, 0.0
        %v1556 = vmax.f32 %v1486, 0.0
        %v1557 = vmax.f32 %v1491, 0.0
        %v1558 = vmax.f32 %v1494, 0.0
        %v1559 = vmax.f32 %v1499, 0.0
        %v1560 = vmax.f32 %v1502, 0.0
        %v1561 = vmax.f32 %v1507, 0.0
        %v1562 = vmax.f32 %v1510, 0.0
        %v1563 = vmax.f32 %v1515, 0.0
        %v1564 = vmax.f32 %v1518, 0.0
        %v1565 = vmax.f32 %v1523, 0.0
        %v1566 = vmax.f32 %v1526, 0.0
        %v1567 = vmax.f32 %v1531, 0.0
        %v1568 = vmax.f32 %v1534, 0.0
        %v1569 = vpack.c.bf16 %v1538, %v1537
        %v1570 = vpack.c.bf16 %v1540, %v1539
        %v1571 = vpack.c.bf16 %v1542, %v1541
        %v1572 = vpack.c.bf16 %v1544, %v1543
        %v1573 = vpack.c.bf16 %v1546, %v1545
        %v1574 = vpack.c.bf16 %v1548, %v1547
        %v1575 = vpack.c.bf16 %v1550, %v1549
        %v1576 = vpack.c.bf16 %v1552, %v1551
        %v1577 = vpack.c.bf16 %v1554, %v1553
        %v1578 = vpack.c.bf16 %v1556, %v1555
        %v1579 = vpack.c.bf16 %v1558, %v1557
        %v1580 = vpack.c.bf16 %v1560, %v1559
        %v1581 = vpack.c.bf16 %v1562, %v1561
        %v1582 = vpack.c.bf16 %v1564, %v1563
        %v1583 = vpack.c.bf16 %v1566, %v1565
        %v1584 = vpack.c.bf16 %v1568, %v1567
        %s1585 = scalar_lea.vmem %s5, 64
        %v1586 = vld [vmem:[%s1585] sm:$0xf]
        %v1587 = vld [vmem:[%s1585 + $0x4] sm:$0xf]
        %v1588 = vld [vmem:[%s1585 + $0x8] sm:$0xf]
        %v1589 = vld [vmem:[%s1585 + $0xc] sm:$0xf]
        %v1590 = vld [vmem:[%s1585 + $0x10] sm:$0xf]
        %v1591 = vld [vmem:[%s1585 + $0x14] sm:$0xf]
        %v1592 = vld [vmem:[%s1585 + $0x18] sm:$0xf]
        %v1593 = vld [vmem:[%s1585 + $0x1c] sm:$0xf]
        %v1594 = vld [vmem:[%s1585 + $0x20] sm:$0xf]
        %v1595 = vld [vmem:[%s1585 + $0x24] sm:$0xf]
        %v1596 = vld [vmem:[%s1585 + $0x28] sm:$0xf]
        %v1597 = vld [vmem:[%s1585 + $0x2c] sm:$0xf]
        %v1598 = vld [vmem:[%s1585 + $0x30] sm:$0xf]
        %v1599 = vld [vmem:[%s1585 + $0x34] sm:$0xf]
        %v1600 = vld [vmem:[%s1585 + $0x38] sm:$0xf]
        %v1601 = vld [vmem:[%s1585 + $0x3c] sm:$0xf]
        %s1602 = scalar_lea.vmem %s6, 1
        %v1603 = vld [vmem:[%s1602] sm:$0x1]
        %v1605 = vlaneseq
        %v1606 = vshrl.u32 %v1605, 7
        %v1607 = vsub.s32 0, %v1606
        %v1608 = vrot.slane %v1603, %v1607
        %v1626 = vunpack.c.l.b16 %v1586
        %v1627 = vunpack.c.l.b16 %v1587
        %v1628 = vunpack.c.l.b16 %v1588
        %v1629 = vunpack.c.l.b16 %v1589
        %v1630 = vunpack.c.l.b16 %v1590
        %v1631 = vunpack.c.l.b16 %v1591
        %v1632 = vunpack.c.l.b16 %v1592
        %v1633 = vunpack.c.l.b16 %v1593
        %v1634 = vunpack.c.l.b16 %v1594
        %v1635 = vunpack.c.l.b16 %v1595
        %v1636 = vunpack.c.l.b16 %v1596
        %v1637 = vunpack.c.l.b16 %v1597
        %v1638 = vunpack.c.l.b16 %v1598
        %v1639 = vunpack.c.l.b16 %v1599
        %v1640 = vunpack.c.l.b16 %v1600
        %v1641 = vunpack.c.l.b16 %v1601
        %v1642 = vpack.c.b16 %v1627, %v1626
        %v1643 = vpack.c.b16 %v1629, %v1628
        %v1644 = vpack.c.b16 %v1631, %v1630
        %v1645 = vpack.c.b16 %v1633, %v1632
        %v1646 = vpack.c.b16 %v1635, %v1634
        %v1647 = vpack.c.b16 %v1637, %v1636
        %v1648 = vpack.c.b16 %v1639, %v1638
        %v1649 = vpack.c.b16 %v1641, %v1640
        %1658 = vmatprep.subr.bf16.mxu0 0
        %1659 = vmatpush1.bf16.msra.mxu0 %v1642
        %1660 = vmatprep.subr.bf16.mxu0 0
        %1661 = vmatpush1.bf16.msra.mxu0 %v1643
        %1662 = vmatprep.subr.bf16.mxu0 0
        %1663 = vmatpush1.bf16.msra.mxu0 %v1644
        %1664 = vmatprep.subr.bf16.mxu0 0
        %1665 = vmatpush1.bf16.msra.mxu0 %v1645
        %1666 = vmatprep.subr.bf16.mxu0 0
        %1667 = vmatpush1.bf16.msra.mxu0 %v1646
        %1668 = vmatprep.subr.bf16.mxu0 0
        %1669 = vmatpush1.bf16.msra.mxu0 %v1647
        %1670 = vmatprep.subr.bf16.mxu0 0
        %1671 = vmatpush1.bf16.msra.mxu0 %v1648
        %1672 = vmatprep.subr.bf16.mxu0 0
        %1673 = vmatpush1.bf16.msra.mxu0 %v1649
        %1674 = vmatprep.subr.bf16.mxu0 0
        %1675 = vmatpush1.bf16.msra.mxu0 0
        %1676 = vmatprep.subr.bf16.mxu0 0
        %1677 = vmatpush1.bf16.msra.mxu0 0
        %1678 = vmatprep.subr.bf16.mxu0 0
        %1679 = vmatpush1.bf16.msra.mxu0 0
        %1680 = vmatprep.subr.bf16.mxu0 0
        %1681 = vmatpush1.bf16.msra.mxu0 0
        %1682 = vmatprep.subr.bf16.mxu0 0
        %1683 = vmatpush1.bf16.msra.mxu0 0
        %1684 = vmatprep.subr.bf16.mxu0 0
        %1685 = vmatpush1.bf16.msra.mxu0 0
        %1686 = vmatprep.subr.bf16.mxu0 0
        %1687 = vmatpush1.bf16.msra.mxu0 0
        %1688 = vmatprep.subr.bf16.mxu0 0
        %1689 = vmatpush1.bf16.msra.mxu0 0
        %1690 = vmatprep.mubr.bf16.mxu0 0
        %1691 = vmatmul.mubr.bf16.gmra.mrb[0].mxu0 %v1569
        %v1692 = vpop.f32.mrb[0].mxu0
        %v1693 = vadd.f32 %v1608, %v1692
        %v1694 = vpop.f32.mrb[0].mxu0
        %v1695 = vpop.f32.mrb[0].mxu0
        %v1696 = vadd.f32 %v1608, %v1695
        %v1697 = vpop.f32.mrb[0].mxu0
        %1698 = vmatprep.mubr.bf16.mxu0 0
        %1699 = vmatmul.mubr.bf16.gmra.mrb[0].mxu0 %v1570
        %v1700 = vpop.f32.mrb[0].mxu0
        %v1701 = vadd.f32 %v1608, %v1700
        %v1702 = vpop.f32.mrb[0].mxu0
        %v1703 = vpop.f32.mrb[0].mxu0
        %v1704 = vadd.f32 %v1608, %v1703
        %v1705 = vpop.f32.mrb[0].mxu0
        %1706 = vmatprep.mubr.bf16.mxu0 0
        %1707 = vmatmul.mubr.bf16.gmra.mrb[0].mxu0 %v1571
        %v1708 = vpop.f32.mrb[0].mxu0
        %v1709 = vadd.f32 %v1608, %v1708
        %v1710 = vpop.f32.mrb[0].mxu0
        %v1711 = vpop.f32.mrb[0].mxu0
        %v1712 = vadd.f32 %v1608, %v1711
        %v1713 = vpop.f32.mrb[0].mxu0
        %1714 = vmatprep.mubr.bf16.mxu0 0
        %1715 = vmatmul.mubr.bf16.gmra.mrb[0].mxu0 %v1572
        %v1716 = vpop.f32.mrb[0].mxu0
        %v1717 = vadd.f32 %v1608, %v1716
        %v1718 = vpop.f32.mrb[0].mxu0
        %v1719 = vpop.f32.mrb[0].mxu0
        %v1720 = vadd.f32 %v1608, %v1719
        %v1721 = vpop.f32.mrb[0].mxu0
        %1722 = vmatprep.mubr.bf16.mxu0 0
        %1723 = vmatmul.mubr.bf16.gmra.mrb[0].mxu0 %v1573
        %v1724 = vpop.f32.mrb[0].mxu0
        %v1725 = vadd.f32 %v1608, %v1724
        %v1726 = vpop.f32.mrb[0].mxu0
        %v1727 = vpop.f32.mrb[0].mxu0
        %v1728 = vadd.f32 %v1608, %v1727
        %v1729 = vpop.f32.mrb[0].mxu0
        %1730 = vmatprep.mubr.bf16.mxu0 0
        %1731 = vmatmul.mubr.bf16.gmra.mrb[0].mxu0 %v1574
        %v1732 = vpop.f32.mrb[0].mxu0
        %v1733 = vadd.f32 %v1608, %v1732
        %v1734 = vpop.f32.mrb[0].mxu0
        %v1735 = vpop.f32.mrb[0].mxu0
        %v1736 = vadd.f32 %v1608, %v1735
        %v1737 = vpop.f32.mrb[0].mxu0
        %1738 = vmatprep.mubr.bf16.mxu0 0
        %1739 = vmatmul.mubr.bf16.gmra.mrb[0].mxu0 %v1575
        %v1740 = vpop.f32.mrb[0].mxu0
        %v1741 = vadd.f32 %v1608, %v1740
        %v1742 = vpop.f32.mrb[0].mxu0
        %v1743 = vpop.f32.mrb[0].mxu0
        %v1744 = vadd.f32 %v1608, %v1743
        %v1745 = vpop.f32.mrb[0].mxu0
        %1746 = vmatprep.mubr.bf16.mxu0 0
        %1747 = vmatmul.mubr.bf16.gmra.mrb[0].mxu0 %v1576
        %v1748 = vpop.f32.mrb[0].mxu0
        %v1749 = vadd.f32 %v1608, %v1748
        %v1750 = vpop.f32.mrb[0].mxu0
        %v1751 = vpop.f32.mrb[0].mxu0
        %v1752 = vadd.f32 %v1608, %v1751
        %v1753 = vpop.f32.mrb[0].mxu0
        %1754 = vmatprep.mubr.bf16.mxu0 0
        %1755 = vmatmul.mubr.bf16.gmra.mrb[0].mxu0 %v1577
        %v1756 = vpop.f32.mrb[0].mxu0
        %v1757 = vadd.f32 %v1608, %v1756
        %v1758 = vpop.f32.mrb[0].mxu0
        %v1759 = vpop.f32.mrb[0].mxu0
        %v1760 = vadd.f32 %v1608, %v1759
        %v1761 = vpop.f32.mrb[0].mxu0
        %1762 = vmatprep.mubr.bf16.mxu0 0
        %1763 = vmatmul.mubr.bf16.gmra.mrb[0].mxu0 %v1578
        %v1764 = vpop.f32.mrb[0].mxu0
        %v1765 = vadd.f32 %v1608, %v1764
        %v1766 = vpop.f32.mrb[0].mxu0
        %v1767 = vpop.f32.mrb[0].mxu0
        %v1768 = vadd.f32 %v1608, %v1767
        %v1769 = vpop.f32.mrb[0].mxu0
        %1770 = vmatprep.mubr.bf16.mxu0 0
        %1771 = vmatmul.mubr.bf16.gmra.mrb[0].mxu0 %v1579
        %v1772 = vpop.f32.mrb[0].mxu0
        %v1773 = vadd.f32 %v1608, %v1772
        %v1774 = vpop.f32.mrb[0].mxu0
        %v1775 = vpop.f32.mrb[0].mxu0
        %v1776 = vadd.f32 %v1608, %v1775
        %v1777 = vpop.f32.mrb[0].mxu0
        %1778 = vmatprep.mubr.bf16.mxu0 0
        %1779 = vmatmul.mubr.bf16.gmra.mrb[0].mxu0 %v1580
        %v1780 = vpop.f32.mrb[0].mxu0
        %v1781 = vadd.f32 %v1608, %v1780
        %v1782 = vpop.f32.mrb[0].mxu0
        %v1783 = vpop.f32.mrb[0].mxu0
        %v1784 = vadd.f32 %v1608, %v1783
        %v1785 = vpop.f32.mrb[0].mxu0
        %1786 = vmatprep.mubr.bf16.mxu0 0
        %1787 = vmatmul.mubr.bf16.gmra.mrb[0].mxu0 %v1581
        %v1788 = vpop.f32.mrb[0].mxu0
        %v1789 = vadd.f32 %v1608, %v1788
        %v1790 = vpop.f32.mrb[0].mxu0
        %v1791 = vpop.f32.mrb[0].mxu0
        %v1792 = vadd.f32 %v1608, %v1791
        %v1793 = vpop.f32.mrb[0].mxu0
        %1794 = vmatprep.mubr.bf16.mxu0 0
        %1795 = vmatmul.mubr.bf16.gmra.mrb[0].mxu0 %v1582
        %v1796 = vpop.f32.mrb[0].mxu0
        %v1797 = vadd.f32 %v1608, %v1796
        %v1798 = vpop.f32.mrb[0].mxu0
        %v1799 = vpop.f32.mrb[0].mxu0
        %v1800 = vadd.f32 %v1608, %v1799
        %v1801 = vpop.f32.mrb[0].mxu0
        %1802 = vmatprep.mubr.bf16.mxu0 0
        %1803 = vmatmul.mubr.bf16.gmra.mrb[0].mxu0 %v1583
        %v1804 = vpop.f32.mrb[0].mxu0
        %v1805 = vadd.f32 %v1608, %v1804
        %v1806 = vpop.f32.mrb[0].mxu0
        %v1807 = vpop.f32.mrb[0].mxu0
        %v1808 = vadd.f32 %v1608, %v1807
        %v1809 = vpop.f32.mrb[0].mxu0
        %1810 = vmatprep.mubr.bf16.mxu0 0
        %1811 = vmatmul.mubr.bf16.gmra.mrb[0].mxu0 %v1584
        %v1812 = vpop.f32.mrb[0].mxu0
        %v1813 = vadd.f32 %v1608, %v1812
        %v1814 = vpop.f32.mrb[0].mxu0
        %v1815 = vpop.f32.mrb[0].mxu0
        %v1816 = vadd.f32 %v1608, %v1815
        %v1817 = vpop.f32.mrb[0].mxu0
        %1818 = vdwg.mxu0
        %v1819 = vmax.f32 %v1693, 0.0
        %v1820 = vmax.f32 %v1696, 0.0
        %v1821 = vmax.f32 %v1701, 0.0
        %v1822 = vmax.f32 %v1704, 0.0
        %v1823 = vmax.f32 %v1709, 0.0
        %v1824 = vmax.f32 %v1712, 0.0
        %v1825 = vmax.f32 %v1717, 0.0
        %v1826 = vmax.f32 %v1720, 0.0
        %v1827 = vmax.f32 %v1725, 0.0
        %v1828 = vmax.f32 %v1728, 0.0
        %v1829 = vmax.f32 %v1733, 0.0
        %v1830 = vmax.f32 %v1736, 0.0
        %v1831 = vmax.f32 %v1741, 0.0
        %v1832 = vmax.f32 %v1744, 0.0
        %v1833 = vmax.f32 %v1749, 0.0
        %v1834 = vmax.f32 %v1752, 0.0
        %v1835 = vmax.f32 %v1757, 0.0
        %v1836 = vmax.f32 %v1760, 0.0
        %v1837 = vmax.f32 %v1765, 0.0
        %v1838 = vmax.f32 %v1768, 0.0
        %v1839 = vmax.f32 %v1773, 0.0
        %v1840 = vmax.f32 %v1776, 0.0
        %v1841 = vmax.f32 %v1781, 0.0
        %v1842 = vmax.f32 %v1784, 0.0
        %v1843 = vmax.f32 %v1789, 0.0
        %v1844 = vmax.f32 %v1792, 0.0
        %v1845 = vmax.f32 %v1797, 0.0
        %v1846 = vmax.f32 %v1800, 0.0
        %v1847 = vmax.f32 %v1805, 0.0
        %v1848 = vmax.f32 %v1808, 0.0
        %v1849 = vmax.f32 %v1813, 0.0
        %v1850 = vmax.f32 %v1816, 0.0
        %v1851 = vpack.c.bf16 %v1820, %v1819
        %v1852 = vpack.c.bf16 %v1822, %v1821
        %v1853 = vpack.c.bf16 %v1824, %v1823
        %v1854 = vpack.c.bf16 %v1826, %v1825
        %v1855 = vpack.c.bf16 %v1828, %v1827
        %v1856 = vpack.c.bf16 %v1830, %v1829
        %v1857 = vpack.c.bf16 %v1832, %v1831
        %v1858 = vpack.c.bf16 %v1834, %v1833
        %v1859 = vpack.c.bf16 %v1836, %v1835
        %v1860 = vpack.c.bf16 %v1838, %v1837
        %v1861 = vpack.c.bf16 %v1840, %v1839
        %v1862 = vpack.c.bf16 %v1842, %v1841
        %v1863 = vpack.c.bf16 %v1844, %v1843
        %v1864 = vpack.c.bf16 %v1846, %v1845
        %v1865 = vpack.c.bf16 %v1848, %v1847
        %v1866 = vpack.c.bf16 %v1850, %v1849
        %s1867 = scalar_lea.vmem %s5, 128
        %v1868 = vld [vmem:[%s1867] sm:$0xf]
        %v1869 = vld [vmem:[%s1867 + $0x4] sm:$0xf]
        %v1870 = vld [vmem:[%s1867 + $0x8] sm:$0xf]
        %v1871 = vld [vmem:[%s1867 + $0xc] sm:$0xf]
        %v1872 = vld [vmem:[%s1867 + $0x10] sm:$0xf]
        %v1873 = vld [vmem:[%s1867 + $0x14] sm:$0xf]
        %v1874 = vld [vmem:[%s1867 + $0x18] sm:$0xf]
        %v1875 = vld [vmem:[%s1867 + $0x1c] sm:$0xf]
        %v1876 = vld [vmem:[%s1867 + $0x20] sm:$0xf]
        %v1877 = vld [vmem:[%s1867 + $0x24] sm:$0xf]
        %v1878 = vld [vmem:[%s1867 + $0x28] sm:$0xf]
        %v1879 = vld [vmem:[%s1867 + $0x2c] sm:$0xf]
        %v1880 = vld [vmem:[%s1867 + $0x30] sm:$0xf]
        %v1881 = vld [vmem:[%s1867 + $0x34] sm:$0xf]
        %v1882 = vld [vmem:[%s1867 + $0x38] sm:$0xf]
        %v1883 = vld [vmem:[%s1867 + $0x3c] sm:$0xf]
        %s1884 = scalar_lea.vmem %s6, 2
        %v1885 = vld [vmem:[%s1884] sm:$0x1]
        %v1887 = vlaneseq
        %v1888 = vshrl.u32 %v1887, 7
        %v1889 = vsub.s32 0, %v1888
        %v1890 = vrot.slane %v1885, %v1889
        %v1908 = vunpack.c.l.b16 %v1868
        %v1909 = vunpack.c.l.b16 %v1869
        %v1910 = vunpack.c.l.b16 %v1870
        %v1911 = vunpack.c.l.b16 %v1871
        %v1912 = vunpack.c.l.b16 %v1872
        %v1913 = vunpack.c.l.b16 %v1873
        %v1914 = vunpack.c.l.b16 %v1874
        %v1915 = vunpack.c.l.b16 %v1875
        %v1916 = vunpack.c.l.b16 %v1876
        %v1917 = vunpack.c.l.b16 %v1877
        %v1918 = vunpack.c.l.b16 %v1878
        %v1919 = vunpack.c.l.b16 %v1879
        %v1920 = vunpack.c.l.b16 %v1880
        %v1921 = vunpack.c.l.b16 %v1881
        %v1922 = vunpack.c.l.b16 %v1882
        %v1923 = vunpack.c.l.b16 %v1883
        %v1924 = vpack.c.b16 %v1909, %v1908
        %v1925 = vpack.c.b16 %v1911, %v1910
        %v1926 = vpack.c.b16 %v1913, %v1912
        %v1927 = vpack.c.b16 %v1915, %v1914
        %v1928 = vpack.c.b16 %v1917, %v1916
        %v1929 = vpack.c.b16 %v1919, %v1918
        %v1930 = vpack.c.b16 %v1921, %v1920
        %v1931 = vpack.c.b16 %v1923, %v1922
        %1940 = vmatprep.subr.bf16.mxu0 0
        %1941 = vmatpush1.bf16.msra.mxu0 %v1924
        %1942 = vmatprep.subr.bf16.mxu0 0
        %1943 = vmatpush1.bf16.msra.mxu0 %v1925
        %1944 = vmatprep.subr.bf16.mxu0 0
        %1945 = vmatpush1.bf16.msra.mxu0 %v1926
        %1946 = vmatprep.subr.bf16.mxu0 0
        %1947 = vmatpush1.bf16.msra.mxu0 %v1927
        %1948 = vmatprep.subr.bf16.mxu0 0
        %1949 = vmatpush1.bf16.msra.mxu0 %v1928
        %1950 = vmatprep.subr.bf16.mxu0 0
        %1951 = vmatpush1.bf16.msra.mxu0 %v1929
        %1952 = vmatprep.subr.bf16.mxu0 0
        %1953 = vmatpush1.bf16.msra.mxu0 %v1930
        %1954 = vmatprep.subr.bf16.mxu0 0
        %1955 = vmatpush1.bf16.msra.mxu0 %v1931
        %1956 = vmatprep.subr.bf16.mxu0 0
        %1957 = vmatpush1.bf16.msra.mxu0 0
        %1958 = vmatprep.subr.bf16.mxu0 0
        %1959 = vmatpush1.bf16.msra.mxu0 0
        %1960 = vmatprep.subr.bf16.mxu0 0
        %1961 = vmatpush1.bf16.msra.mxu0 0
        %1962 = vmatprep.subr.bf16.mxu0 0
        %1963 = vmatpush1.bf16.msra.mxu0 0
        %1964 = vmatprep.subr.bf16.mxu0 0
        %1965 = vmatpush1.bf16.msra.mxu0 0
        %1966 = vmatprep.subr.bf16.mxu0 0
        %1967 = vmatpush1.bf16.msra.mxu0 0
        %1968 = vmatprep.subr.bf16.mxu0 0
        %1969 = vmatpush1.bf16.msra.mxu0 0
        %1970 = vmatprep.subr.bf16.mxu0 0
        %1971 = vmatpush1.bf16.msra.mxu0 0
        %1972 = vmatprep.mubr.bf16.mxu0 0
        %1973 = vmatmul.mubr.bf16.gmra.mrb[0].mxu0 %v1851
        %v1974 = vpop.f32.mrb[0].mxu0
        %v1975 = vadd.f32 %v1890, %v1974
        %v1976 = vpop.f32.mrb[0].mxu0
        %v1977 = vpop.f32.mrb[0].mxu0
        %v1978 = vadd.f32 %v1890, %v1977
        %v1979 = vpop.f32.mrb[0].mxu0
        %1980 = vmatprep.mubr.bf16.mxu0 0
        %1981 = vmatmul.mubr.bf16.gmra.mrb[0].mxu0 %v1852
        %v1982 = vpop.f32.mrb[0].mxu0
        %v1983 = vadd.f32 %v1890, %v1982
        %v1984 = vpop.f32.mrb[0].mxu0
        %v1985 = vpop.f32.mrb[0].mxu0
        %v1986 = vadd.f32 %v1890, %v1985
        %v1987 = vpop.f32.mrb[0].mxu0
        %1988 = vmatprep.mubr.bf16.mxu0 0
        %1989 = vmatmul.mubr.bf16.gmra.mrb[0].mxu0 %v1853
        %v1990 = vpop.f32.mrb[0].mxu0
        %v1991 = vadd.f32 %v1890, %v1990
        %v1992 = vpop.f32.mrb[0].mxu0
        %v1993 = vpop.f32.mrb[0].mxu0
        %v1994 = vadd.f32 %v1890, %v1993
        %v1995 = vpop.f32.mrb[0].mxu0
        %1996 = vmatprep.mubr.bf16.mxu0 0
        %1997 = vmatmul.mubr.bf16.gmra.mrb[0].mxu0 %v1854
        %v1998 = vpop.f32.mrb[0].mxu0
        %v1999 = vadd.f32 %v1890, %v1998
        %v2000 = vpop.f32.mrb[0].mxu0
        %v2001 = vpop.f32.mrb[0].mxu0
        %v2002 = vadd.f32 %v1890, %v2001
        %v2003 = vpop.f32.mrb[0].mxu0
        %2004 = vmatprep.mubr.bf16.mxu0 0
        %2005 = vmatmul.mubr.bf16.gmra.mrb[0].mxu0 %v1855
        %v2006 = vpop.f32.mrb[0].mxu0
        %v2007 = vadd.f32 %v1890, %v2006
        %v2008 = vpop.f32.mrb[0].mxu0
        %v2009 = vpop.f32.mrb[0].mxu0
        %v2010 = vadd.f32 %v1890, %v2009
        %v2011 = vpop.f32.mrb[0].mxu0
        %2012 = vmatprep.mubr.bf16.mxu0 0
        %2013 = vmatmul.mubr.bf16.gmra.mrb[0].mxu0 %v1856
        %v2014 = vpop.f32.mrb[0].mxu0
        %v2015 = vadd.f32 %v1890, %v2014
        %v2016 = vpop.f32.mrb[0].mxu0
        %v2017 = vpop.f32.mrb[0].mxu0
        %v2018 = vadd.f32 %v1890, %v2017
        %v2019 = vpop.f32.mrb[0].mxu0
        %2020 = vmatprep.mubr.bf16.mxu0 0
        %2021 = vmatmul.mubr.bf16.gmra.mrb[0].mxu0 %v1857
        %v2022 = vpop.f32.mrb[0].mxu0
        %v2023 = vadd.f32 %v1890, %v2022
        %v2024 = vpop.f32.mrb[0].mxu0
        %v2025 = vpop.f32.mrb[0].mxu0
        %v2026 = vadd.f32 %v1890, %v2025
        %v2027 = vpop.f32.mrb[0].mxu0
        %2028 = vmatprep.mubr.bf16.mxu0 0
        %2029 = vmatmul.mubr.bf16.gmra.mrb[0].mxu0 %v1858
        %v2030 = vpop.f32.mrb[0].mxu0
        %v2031 = vadd.f32 %v1890, %v2030
        %v2032 = vpop.f32.mrb[0].mxu0
        %v2033 = vpop.f32.mrb[0].mxu0
        %v2034 = vadd.f32 %v1890, %v2033
        %v2035 = vpop.f32.mrb[0].mxu0
        %2036 = vmatprep.mubr.bf16.mxu0 0
        %2037 = vmatmul.mubr.bf16.gmra.mrb[0].mxu0 %v1859
        %v2038 = vpop.f32.mrb[0].mxu0
        %v2039 = vadd.f32 %v1890, %v2038
        %v2040 = vpop.f32.mrb[0].mxu0
        %v2041 = vpop.f32.mrb[0].mxu0
        %v2042 = vadd.f32 %v1890, %v2041
        %v2043 = vpop.f32.mrb[0].mxu0
        %2044 = vmatprep.mubr.bf16.mxu0 0
        %2045 = vmatmul.mubr.bf16.gmra.mrb[0].mxu0 %v1860
        %v2046 = vpop.f32.mrb[0].mxu0
        %v2047 = vadd.f32 %v1890, %v2046
        %v2048 = vpop.f32.mrb[0].mxu0
        %v2049 = vpop.f32.mrb[0].mxu0
        %v2050 = vadd.f32 %v1890, %v2049
        %v2051 = vpop.f32.mrb[0].mxu0
        %2052 = vmatprep.mubr.bf16.mxu0 0
        %2053 = vmatmul.mubr.bf16.gmra.mrb[0].mxu0 %v1861
        %v2054 = vpop.f32.mrb[0].mxu0
        %v2055 = vadd.f32 %v1890, %v2054
        %v2056 = vpop.f32.mrb[0].mxu0
        %v2057 = vpop.f32.mrb[0].mxu0
        %v2058 = vadd.f32 %v1890, %v2057
        %v2059 = vpop.f32.mrb[0].mxu0
        %2060 = vmatprep.mubr.bf16.mxu0 0
        %2061 = vmatmul.mubr.bf16.gmra.mrb[0].mxu0 %v1862
        %v2062 = vpop.f32.mrb[0].mxu0
        %v2063 = vadd.f32 %v1890, %v2062
        %v2064 = vpop.f32.mrb[0].mxu0
        %v2065 = vpop.f32.mrb[0].mxu0
        %v2066 = vadd.f32 %v1890, %v2065
        %v2067 = vpop.f32.mrb[0].mxu0
        %2068 = vmatprep.mubr.bf16.mxu0 0
        %2069 = vmatmul.mubr.bf16.gmra.mrb[0].mxu0 %v1863
        %v2070 = vpop.f32.mrb[0].mxu0
        %v2071 = vadd.f32 %v1890, %v2070
        %v2072 = vpop.f32.mrb[0].mxu0
        %v2073 = vpop.f32.mrb[0].mxu0
        %v2074 = vadd.f32 %v1890, %v2073
        %v2075 = vpop.f32.mrb[0].mxu0
        %2076 = vmatprep.mubr.bf16.mxu0 0
        %2077 = vmatmul.mubr.bf16.gmra.mrb[0].mxu0 %v1864
        %v2078 = vpop.f32.mrb[0].mxu0
        %v2079 = vadd.f32 %v1890, %v2078
        %v2080 = vpop.f32.mrb[0].mxu0
        %v2081 = vpop.f32.mrb[0].mxu0
        %v2082 = vadd.f32 %v1890, %v2081
        %v2083 = vpop.f32.mrb[0].mxu0
        %2084 = vmatprep.mubr.bf16.mxu0 0
        %2085 = vmatmul.mubr.bf16.gmra.mrb[0].mxu0 %v1865
        %v2086 = vpop.f32.mrb[0].mxu0
        %v2087 = vadd.f32 %v1890, %v2086
        %v2088 = vpop.f32.mrb[0].mxu0
        %v2089 = vpop.f32.mrb[0].mxu0
        %v2090 = vadd.f32 %v1890, %v2089
        %v2091 = vpop.f32.mrb[0].mxu0
        %2092 = vmatprep.mubr.bf16.mxu0 0
        %2093 = vmatmul.mubr.bf16.gmra.mrb[0].mxu0 %v1866
        %v2094 = vpop.f32.mrb[0].mxu0
        %v2095 = vadd.f32 %v1890, %v2094
        %v2096 = vpop.f32.mrb[0].mxu0
        %v2097 = vpop.f32.mrb[0].mxu0
        %v2098 = vadd.f32 %v1890, %v2097
        %v2099 = vpop.f32.mrb[0].mxu0
        %2100 = vdwg.mxu0
        %v2101 = vmax.f32 %v1975, 0.0
        %v2102 = vmax.f32 %v1978, 0.0
        %v2103 = vmax.f32 %v1983, 0.0
        %v2104 = vmax.f32 %v1986, 0.0
        %v2105 = vmax.f32 %v1991, 0.0
        %v2106 = vmax.f32 %v1994, 0.0
        %v2107 = vmax.f32 %v1999, 0.0
        %v2108 = vmax.f32 %v2002, 0.0
        %v2109 = vmax.f32 %v2007, 0.0
        %v2110 = vmax.f32 %v2010, 0.0
        %v2111 = vmax.f32 %v2015, 0.0
        %v2112 = vmax.f32 %v2018, 0.0
        %v2113 = vmax.f32 %v2023, 0.0
        %v2114 = vmax.f32 %v2026, 0.0
        %v2115 = vmax.f32 %v2031, 0.0
        %v2116 = vmax.f32 %v2034, 0.0
        %v2117 = vmax.f32 %v2039, 0.0
        %v2118 = vmax.f32 %v2042, 0.0
        %v2119 = vmax.f32 %v2047, 0.0
        %v2120 = vmax.f32 %v2050, 0.0
        %v2121 = vmax.f32 %v2055, 0.0
        %v2122 = vmax.f32 %v2058, 0.0
        %v2123 = vmax.f32 %v2063, 0.0
        %v2124 = vmax.f32 %v2066, 0.0
        %v2125 = vmax.f32 %v2071, 0.0
        %v2126 = vmax.f32 %v2074, 0.0
        %v2127 = vmax.f32 %v2079, 0.0
        %v2128 = vmax.f32 %v2082, 0.0
        %v2129 = vmax.f32 %v2087, 0.0
        %v2130 = vmax.f32 %v2090, 0.0
        %v2131 = vmax.f32 %v2095, 0.0
        %v2132 = vmax.f32 %v2098, 0.0
        %v2133 = vpack.c.bf16 %v2102, %v2101
        %v2134 = vpack.c.bf16 %v2104, %v2103
        %v2135 = vpack.c.bf16 %v2106, %v2105
        %v2136 = vpack.c.bf16 %v2108, %v2107
        %v2137 = vpack.c.bf16 %v2110, %v2109
        %v2138 = vpack.c.bf16 %v2112, %v2111
        %v2139 = vpack.c.bf16 %v2114, %v2113
        %v2140 = vpack.c.bf16 %v2116, %v2115
        %v2141 = vpack.c.bf16 %v2118, %v2117
        %v2142 = vpack.c.bf16 %v2120, %v2119
        %v2143 = vpack.c.bf16 %v2122, %v2121
        %v2144 = vpack.c.bf16 %v2124, %v2123
        %v2145 = vpack.c.bf16 %v2126, %v2125
        %v2146 = vpack.c.bf16 %v2128, %v2127
        %v2147 = vpack.c.bf16 %v2130, %v2129
        %v2148 = vpack.c.bf16 %v2132, %v2131
        %s2149 = scalar_lea.vmem %s5, 192
        %v2150 = vld [vmem:[%s2149] sm:$0xf]
        %v2151 = vld [vmem:[%s2149 + $0x4] sm:$0xf]
        %v2152 = vld [vmem:[%s2149 + $0x8] sm:$0xf]
        %v2153 = vld [vmem:[%s2149 + $0xc] sm:$0xf]
        %v2154 = vld [vmem:[%s2149 + $0x10] sm:$0xf]
        %v2155 = vld [vmem:[%s2149 + $0x14] sm:$0xf]
        %v2156 = vld [vmem:[%s2149 + $0x18] sm:$0xf]
        %v2157 = vld [vmem:[%s2149 + $0x1c] sm:$0xf]
        %v2158 = vld [vmem:[%s2149 + $0x20] sm:$0xf]
        %v2159 = vld [vmem:[%s2149 + $0x24] sm:$0xf]
        %v2160 = vld [vmem:[%s2149 + $0x28] sm:$0xf]
        %v2161 = vld [vmem:[%s2149 + $0x2c] sm:$0xf]
        %v2162 = vld [vmem:[%s2149 + $0x30] sm:$0xf]
        %v2163 = vld [vmem:[%s2149 + $0x34] sm:$0xf]
        %v2164 = vld [vmem:[%s2149 + $0x38] sm:$0xf]
        %v2165 = vld [vmem:[%s2149 + $0x3c] sm:$0xf]
        %s2166 = scalar_lea.vmem %s6, 3
        %v2167 = vld [vmem:[%s2166] sm:$0x1]
        %v2169 = vlaneseq
        %v2170 = vshrl.u32 %v2169, 7
        %v2171 = vsub.s32 0, %v2170
        %v2172 = vrot.slane %v2167, %v2171
        %v2190 = vunpack.c.l.b16 %v2150
        %v2191 = vunpack.c.l.b16 %v2151
        %v2192 = vunpack.c.l.b16 %v2152
        %v2193 = vunpack.c.l.b16 %v2153
        %v2194 = vunpack.c.l.b16 %v2154
        %v2195 = vunpack.c.l.b16 %v2155
        %v2196 = vunpack.c.l.b16 %v2156
        %v2197 = vunpack.c.l.b16 %v2157
        %v2198 = vunpack.c.l.b16 %v2158
        %v2199 = vunpack.c.l.b16 %v2159
        %v2200 = vunpack.c.l.b16 %v2160
        %v2201 = vunpack.c.l.b16 %v2161
        %v2202 = vunpack.c.l.b16 %v2162
        %v2203 = vunpack.c.l.b16 %v2163
        %v2204 = vunpack.c.l.b16 %v2164
        %v2205 = vunpack.c.l.b16 %v2165
        %v2206 = vpack.c.b16 %v2191, %v2190
        %v2207 = vpack.c.b16 %v2193, %v2192
        %v2208 = vpack.c.b16 %v2195, %v2194
        %v2209 = vpack.c.b16 %v2197, %v2196
        %v2210 = vpack.c.b16 %v2199, %v2198
        %v2211 = vpack.c.b16 %v2201, %v2200
        %v2212 = vpack.c.b16 %v2203, %v2202
        %v2213 = vpack.c.b16 %v2205, %v2204
        %2222 = vmatprep.subr.bf16.mxu0 0
        %2223 = vmatpush1.bf16.msra.mxu0 %v2206
        %2224 = vmatprep.subr.bf16.mxu0 0
        %2225 = vmatpush1.bf16.msra.mxu0 %v2207
        %2226 = vmatprep.subr.bf16.mxu0 0
        %2227 = vmatpush1.bf16.msra.mxu0 %v2208
        %2228 = vmatprep.subr.bf16.mxu0 0
        %2229 = vmatpush1.bf16.msra.mxu0 %v2209
        %2230 = vmatprep.subr.bf16.mxu0 0
        %2231 = vmatpush1.bf16.msra.mxu0 %v2210
        %2232 = vmatprep.subr.bf16.mxu0 0
        %2233 = vmatpush1.bf16.msra.mxu0 %v2211
        %2234 = vmatprep.subr.bf16.mxu0 0
        %2235 = vmatpush1.bf16.msra.mxu0 %v2212
        %2236 = vmatprep.subr.bf16.mxu0 0
        %2237 = vmatpush1.bf16.msra.mxu0 %v2213
        %2238 = vmatprep.subr.bf16.mxu0 0
        %2239 = vmatpush1.bf16.msra.mxu0 0
        %2240 = vmatprep.subr.bf16.mxu0 0
        %2241 = vmatpush1.bf16.msra.mxu0 0
        %2242 = vmatprep.subr.bf16.mxu0 0
        %2243 = vmatpush1.bf16.msra.mxu0 0
        %2244 = vmatprep.subr.bf16.mxu0 0
        %2245 = vmatpush1.bf16.msra.mxu0 0
        %2246 = vmatprep.subr.bf16.mxu0 0
        %2247 = vmatpush1.bf16.msra.mxu0 0
        %2248 = vmatprep.subr.bf16.mxu0 0
        %2249 = vmatpush1.bf16.msra.mxu0 0
        %2250 = vmatprep.subr.bf16.mxu0 0
        %2251 = vmatpush1.bf16.msra.mxu0 0
        %2252 = vmatprep.subr.bf16.mxu0 0
        %2253 = vmatpush1.bf16.msra.mxu0 0
        %2254 = vmatprep.mubr.bf16.mxu0 0
        %2255 = vmatmul.mubr.bf16.gmra.mrb[0].mxu0 %v2133
        %v2256 = vpop.f32.mrb[0].mxu0
        %v2257 = vadd.f32 %v2172, %v2256
        %v2258 = vpop.f32.mrb[0].mxu0
        %v2259 = vpop.f32.mrb[0].mxu0
        %v2260 = vadd.f32 %v2172, %v2259
        %v2261 = vpop.f32.mrb[0].mxu0
        %2262 = vmatprep.mubr.bf16.mxu0 0
        %2263 = vmatmul.mubr.bf16.gmra.mrb[0].mxu0 %v2134
        %v2264 = vpop.f32.mrb[0].mxu0
        %v2265 = vadd.f32 %v2172, %v2264
        %v2266 = vpop.f32.mrb[0].mxu0
        %v2267 = vpop.f32.mrb[0].mxu0
        %v2268 = vadd.f32 %v2172, %v2267
        %v2269 = vpop.f32.mrb[0].mxu0
        %2270 = vmatprep.mubr.bf16.mxu0 0
        %2271 = vmatmul.mubr.bf16.gmra.mrb[0].mxu0 %v2135
        %v2272 = vpop.f32.mrb[0].mxu0
        %v2273 = vadd.f32 %v2172, %v2272
        %v2274 = vpop.f32.mrb[0].mxu0
        %v2275 = vpop.f32.mrb[0].mxu0
        %v2276 = vadd.f32 %v2172, %v2275
        %v2277 = vpop.f32.mrb[0].mxu0
        %2278 = vmatprep.mubr.bf16.mxu0 0
        %2279 = vmatmul.mubr.bf16.gmra.mrb[0].mxu0 %v2136
        %v2280 = vpop.f32.mrb[0].mxu0
        %v2281 = vadd.f32 %v2172, %v2280
        %v2282 = vpop.f32.mrb[0].mxu0
        %v2283 = vpop.f32.mrb[0].mxu0
        %v2284 = vadd.f32 %v2172, %v2283
        %v2285 = vpop.f32.mrb[0].mxu0
        %2286 = vmatprep.mubr.bf16.mxu0 0
        %2287 = vmatmul.mubr.bf16.gmra.mrb[0].mxu0 %v2137
        %v2288 = vpop.f32.mrb[0].mxu0
        %v2289 = vadd.f32 %v2172, %v2288
        %v2290 = vpop.f32.mrb[0].mxu0
        %v2291 = vpop.f32.mrb[0].mxu0
        %v2292 = vadd.f32 %v2172, %v2291
        %v2293 = vpop.f32.mrb[0].mxu0
        %2294 = vmatprep.mubr.bf16.mxu0 0
        %2295 = vmatmul.mubr.bf16.gmra.mrb[0].mxu0 %v2138
        %v2296 = vpop.f32.mrb[0].mxu0
        %v2297 = vadd.f32 %v2172, %v2296
        %v2298 = vpop.f32.mrb[0].mxu0
        %v2299 = vpop.f32.mrb[0].mxu0
        %v2300 = vadd.f32 %v2172, %v2299
        %v2301 = vpop.f32.mrb[0].mxu0
        %2302 = vmatprep.mubr.bf16.mxu0 0
        %2303 = vmatmul.mubr.bf16.gmra.mrb[0].mxu0 %v2139
        %v2304 = vpop.f32.mrb[0].mxu0
        %v2305 = vadd.f32 %v2172, %v2304
        %v2306 = vpop.f32.mrb[0].mxu0
        %v2307 = vpop.f32.mrb[0].mxu0
        %v2308 = vadd.f32 %v2172, %v2307
        %v2309 = vpop.f32.mrb[0].mxu0
        %2310 = vmatprep.mubr.bf16.mxu0 0
        %2311 = vmatmul.mubr.bf16.gmra.mrb[0].mxu0 %v2140
        %v2312 = vpop.f32.mrb[0].mxu0
        %v2313 = vadd.f32 %v2172, %v2312
        %v2314 = vpop.f32.mrb[0].mxu0
        %v2315 = vpop.f32.mrb[0].mxu0
        %v2316 = vadd.f32 %v2172, %v2315
        %v2317 = vpop.f32.mrb[0].mxu0
        %2318 = vmatprep.mubr.bf16.mxu0 0
        %2319 = vmatmul.mubr.bf16.gmra.mrb[0].mxu0 %v2141
        %v2320 = vpop.f32.mrb[0].mxu0
        %v2321 = vadd.f32 %v2172, %v2320
        %v2322 = vpop.f32.mrb[0].mxu0
        %v2323 = vpop.f32.mrb[0].mxu0
        %v2324 = vadd.f32 %v2172, %v2323
        %v2325 = vpop.f32.mrb[0].mxu0
        %2326 = vmatprep.mubr.bf16.mxu0 0
        %2327 = vmatmul.mubr.bf16.gmra.mrb[0].mxu0 %v2142
        %v2328 = vpop.f32.mrb[0].mxu0
        %v2329 = vadd.f32 %v2172, %v2328
        %v2330 = vpop.f32.mrb[0].mxu0
        %v2331 = vpop.f32.mrb[0].mxu0
        %v2332 = vadd.f32 %v2172, %v2331
        %v2333 = vpop.f32.mrb[0].mxu0
        %2334 = vmatprep.mubr.bf16.mxu0 0
        %2335 = vmatmul.mubr.bf16.gmra.mrb[0].mxu0 %v2143
        %v2336 = vpop.f32.mrb[0].mxu0
        %v2337 = vadd.f32 %v2172, %v2336
        %v2338 = vpop.f32.mrb[0].mxu0
        %v2339 = vpop.f32.mrb[0].mxu0
        %v2340 = vadd.f32 %v2172, %v2339
        %v2341 = vpop.f32.mrb[0].mxu0
        %2342 = vmatprep.mubr.bf16.mxu0 0
        %2343 = vmatmul.mubr.bf16.gmra.mrb[0].mxu0 %v2144
        %v2344 = vpop.f32.mrb[0].mxu0
        %v2345 = vadd.f32 %v2172, %v2344
        %v2346 = vpop.f32.mrb[0].mxu0
        %v2347 = vpop.f32.mrb[0].mxu0
        %v2348 = vadd.f32 %v2172, %v2347
        %v2349 = vpop.f32.mrb[0].mxu0
        %2350 = vmatprep.mubr.bf16.mxu0 0
        %2351 = vmatmul.mubr.bf16.gmra.mrb[0].mxu0 %v2145
        %v2352 = vpop.f32.mrb[0].mxu0
        %v2353 = vadd.f32 %v2172, %v2352
        %v2354 = vpop.f32.mrb[0].mxu0
        %v2355 = vpop.f32.mrb[0].mxu0
        %v2356 = vadd.f32 %v2172, %v2355
        %v2357 = vpop.f32.mrb[0].mxu0
        %2358 = vmatprep.mubr.bf16.mxu0 0
        %2359 = vmatmul.mubr.bf16.gmra.mrb[0].mxu0 %v2146
        %v2360 = vpop.f32.mrb[0].mxu0
        %v2361 = vadd.f32 %v2172, %v2360
        %v2362 = vpop.f32.mrb[0].mxu0
        %v2363 = vpop.f32.mrb[0].mxu0
        %v2364 = vadd.f32 %v2172, %v2363
        %v2365 = vpop.f32.mrb[0].mxu0
        %2366 = vmatprep.mubr.bf16.mxu0 0
        %2367 = vmatmul.mubr.bf16.gmra.mrb[0].mxu0 %v2147
        %v2368 = vpop.f32.mrb[0].mxu0
        %v2369 = vadd.f32 %v2172, %v2368
        %v2370 = vpop.f32.mrb[0].mxu0
        %v2371 = vpop.f32.mrb[0].mxu0
        %v2372 = vadd.f32 %v2172, %v2371
        %v2373 = vpop.f32.mrb[0].mxu0
        %2374 = vmatprep.mubr.bf16.mxu0 0
        %2375 = vmatmul.mubr.bf16.gmra.mrb[0].mxu0 %v2148
        %v2376 = vpop.f32.mrb[0].mxu0
        %v2377 = vadd.f32 %v2172, %v2376
        %v2378 = vpop.f32.mrb[0].mxu0
        %v2379 = vpop.f32.mrb[0].mxu0
        %v2380 = vadd.f32 %v2172, %v2379
        %v2381 = vpop.f32.mrb[0].mxu0
        %2382 = vdwg.mxu0
        %v2383 = vmax.f32 %v2257, 0.0
        %v2384 = vmax.f32 %v2260, 0.0
        %v2385 = vmax.f32 %v2265, 0.0
        %v2386 = vmax.f32 %v2268, 0.0
        %v2387 = vmax.f32 %v2273, 0.0
        %v2388 = vmax.f32 %v2276, 0.0
        %v2389 = vmax.f32 %v2281, 0.0
        %v2390 = vmax.f32 %v2284, 0.0
        %v2391 = vmax.f32 %v2289, 0.0
        %v2392 = vmax.f32 %v2292, 0.0
        %v2393 = vmax.f32 %v2297, 0.0
        %v2394 = vmax.f32 %v2300, 0.0
        %v2395 = vmax.f32 %v2305, 0.0
        %v2396 = vmax.f32 %v2308, 0.0
        %v2397 = vmax.f32 %v2313, 0.0
        %v2398 = vmax.f32 %v2316, 0.0
        %v2399 = vmax.f32 %v2321, 0.0
        %v2400 = vmax.f32 %v2324, 0.0
        %v2401 = vmax.f32 %v2329, 0.0
        %v2402 = vmax.f32 %v2332, 0.0
        %v2403 = vmax.f32 %v2337, 0.0
        %v2404 = vmax.f32 %v2340, 0.0
        %v2405 = vmax.f32 %v2345, 0.0
        %v2406 = vmax.f32 %v2348, 0.0
        %v2407 = vmax.f32 %v2353, 0.0
        %v2408 = vmax.f32 %v2356, 0.0
        %v2409 = vmax.f32 %v2361, 0.0
        %v2410 = vmax.f32 %v2364, 0.0
        %v2411 = vmax.f32 %v2369, 0.0
        %v2412 = vmax.f32 %v2372, 0.0
        %v2413 = vmax.f32 %v2377, 0.0
        %v2414 = vmax.f32 %v2380, 0.0
        %v2415 = vadd.f32 %v2383, %v1257
        %v2416 = vadd.f32 %v2384, %v1258
        %v2417 = vadd.f32 %v2385, %v1259
        %v2418 = vadd.f32 %v2386, %v1260
        %v2419 = vadd.f32 %v2387, %v1261
        %v2420 = vadd.f32 %v2388, %v1262
        %v2421 = vadd.f32 %v2389, %v1263
        %v2422 = vadd.f32 %v2390, %v1264
        %v2423 = vadd.f32 %v2391, %v1265
        %v2424 = vadd.f32 %v2392, %v1266
        %v2425 = vadd.f32 %v2393, %v1267
        %v2426 = vadd.f32 %v2394, %v1268
        %v2427 = vadd.f32 %v2395, %v1269
        %v2428 = vadd.f32 %v2396, %v1270
        %v2429 = vadd.f32 %v2397, %v1271
        %v2430 = vadd.f32 %v2398, %v1272
        %v2431 = vadd.f32 %v2399, %v1273
        %v2432 = vadd.f32 %v2400, %v1274
        %v2433 = vadd.f32 %v2401, %v1275
        %v2434 = vadd.f32 %v2402, %v1276
        %v2435 = vadd.f32 %v2403, %v1277
        %v2436 = vadd.f32 %v2404, %v1278
        %v2437 = vadd.f32 %v2405, %v1279
        %v2438 = vadd.f32 %v2406, %v1280
        %v2439 = vadd.f32 %v2407, %v1281
        %v2440 = vadd.f32 %v2408, %v1282
        %v2441 = vadd.f32 %v2409, %v1283
        %v2442 = vadd.f32 %v2410, %v1284
        %v2443 = vadd.f32 %v2411, %v1285
        %v2444 = vadd.f32 %v2412, %v1286
        %v2445 = vadd.f32 %v2413, %v1287
        %v2446 = vadd.f32 %v2414, %v1288
        %v2447 = vpack.c.bf16 %v2416, %v2415
        %v2448 = vpack.c.bf16 %v2418, %v2417
        %v2449 = vpack.c.bf16 %v2420, %v2419
        %v2450 = vpack.c.bf16 %v2422, %v2421
        %v2451 = vpack.c.bf16 %v2424, %v2423
        %v2452 = vpack.c.bf16 %v2426, %v2425
        %v2453 = vpack.c.bf16 %v2428, %v2427
        %v2454 = vpack.c.bf16 %v2430, %v2429
        %v2455 = vpack.c.bf16 %v2432, %v2431
        %v2456 = vpack.c.bf16 %v2434, %v2433
        %v2457 = vpack.c.bf16 %v2436, %v2435
        %v2458 = vpack.c.bf16 %v2438, %v2437
        %v2459 = vpack.c.bf16 %v2440, %v2439
        %v2460 = vpack.c.bf16 %v2442, %v2441
        %v2461 = vpack.c.bf16 %v2444, %v2443
        %v2462 = vpack.c.bf16 %v2446, %v2445
        %s2463 = scalar_lea.vmem %s5, 256
        %v2464 = vld [vmem:[%s2463] sm:$0xf]
        %v2465 = vld [vmem:[%s2463 + $0x4] sm:$0xf]
        %v2466 = vld [vmem:[%s2463 + $0x8] sm:$0xf]
        %v2467 = vld [vmem:[%s2463 + $0xc] sm:$0xf]
        %v2468 = vld [vmem:[%s2463 + $0x10] sm:$0xf]
        %v2469 = vld [vmem:[%s2463 + $0x14] sm:$0xf]
        %v2470 = vld [vmem:[%s2463 + $0x18] sm:$0xf]
        %v2471 = vld [vmem:[%s2463 + $0x1c] sm:$0xf]
        %v2472 = vld [vmem:[%s2463 + $0x20] sm:$0xf]
        %v2473 = vld [vmem:[%s2463 + $0x24] sm:$0xf]
        %v2474 = vld [vmem:[%s2463 + $0x28] sm:$0xf]
        %v2475 = vld [vmem:[%s2463 + $0x2c] sm:$0xf]
        %v2476 = vld [vmem:[%s2463 + $0x30] sm:$0xf]
        %v2477 = vld [vmem:[%s2463 + $0x34] sm:$0xf]
        %v2478 = vld [vmem:[%s2463 + $0x38] sm:$0xf]
        %v2479 = vld [vmem:[%s2463 + $0x3c] sm:$0xf]
        %s2480 = scalar_lea.vmem %s6, 4
        %v2481 = vld [vmem:[%s2480] sm:$0x1]
        %v2483 = vlaneseq
        %v2484 = vshrl.u32 %v2483, 7
        %v2485 = vsub.s32 0, %v2484
        %v2486 = vrot.slane %v2481, %v2485
        %v2504 = vunpack.c.l.b16 %v2464
        %v2505 = vunpack.c.l.b16 %v2465
        %v2506 = vunpack.c.l.b16 %v2466
        %v2507 = vunpack.c.l.b16 %v2467
        %v2508 = vunpack.c.l.b16 %v2468
        %v2509 = vunpack.c.l.b16 %v2469
        %v2510 = vunpack.c.l.b16 %v2470
        %v2511 = vunpack.c.l.b16 %v2471
        %v2512 = vunpack.c.l.b16 %v2472
        %v2513 = vunpack.c.l.b16 %v2473
        %v2514 = vunpack.c.l.b16 %v2474
        %v2515 = vunpack.c.l.b16 %v2475
        %v2516 = vunpack.c.l.b16 %v2476
        %v2517 = vunpack.c.l.b16 %v2477
        %v2518 = vunpack.c.l.b16 %v2478
        %v2519 = vunpack.c.l.b16 %v2479
        %v2520 = vpack.c.b16 %v2505, %v2504
        %v2521 = vpack.c.b16 %v2507, %v2506
        %v2522 = vpack.c.b16 %v2509, %v2508
        %v2523 = vpack.c.b16 %v2511, %v2510
        %v2524 = vpack.c.b16 %v2513, %v2512
        %v2525 = vpack.c.b16 %v2515, %v2514
        %v2526 = vpack.c.b16 %v2517, %v2516
        %v2527 = vpack.c.b16 %v2519, %v2518
        %2536 = vmatprep.subr.bf16.mxu0 0
        %2537 = vmatpush1.bf16.msra.mxu0 %v2520
        %2538 = vmatprep.subr.bf16.mxu0 0
        %2539 = vmatpush1.bf16.msra.mxu0 %v2521
        %2540 = vmatprep.subr.bf16.mxu0 0
        %2541 = vmatpush1.bf16.msra.mxu0 %v2522
        %2542 = vmatprep.subr.bf16.mxu0 0
        %2543 = vmatpush1.bf16.msra.mxu0 %v2523
        %2544 = vmatprep.subr.bf16.mxu0 0
        %2545 = vmatpush1.bf16.msra.mxu0 %v2524
        %2546 = vmatprep.subr.bf16.mxu0 0
        %2547 = vmatpush1.bf16.msra.mxu0 %v2525
        %2548 = vmatprep.subr.bf16.mxu0 0
        %2549 = vmatpush1.bf16.msra.mxu0 %v2526
        %2550 = vmatprep.subr.bf16.mxu0 0
        %2551 = vmatpush1.bf16.msra.mxu0 %v2527
        %2552 = vmatprep.subr.bf16.mxu0 0
        %2553 = vmatpush1.bf16.msra.mxu0 0
        %2554 = vmatprep.subr.bf16.mxu0 0
        %2555 = vmatpush1.bf16.msra.mxu0 0
        %2556 = vmatprep.subr.bf16.mxu0 0
        %2557 = vmatpush1.bf16.msra.mxu0 0
        %2558 = vmatprep.subr.bf16.mxu0 0
        %2559 = vmatpush1.bf16.msra.mxu0 0
        %2560 = vmatprep.subr.bf16.mxu0 0
        %2561 = vmatpush1.bf16.msra.mxu0 0
        %2562 = vmatprep.subr.bf16.mxu0 0
        %2563 = vmatpush1.bf16.msra.mxu0 0
        %2564 = vmatprep.subr.bf16.mxu0 0
        %2565 = vmatpush1.bf16.msra.mxu0 0
        %2566 = vmatprep.subr.bf16.mxu0 0
        %2567 = vmatpush1.bf16.msra.mxu0 0
        %2568 = vmatprep.mubr.bf16.mxu0 0
        %2569 = vmatmul.mubr.bf16.gmra.mrb[0].mxu0 %v2447
        %v2570 = vpop.f32.mrb[0].mxu0
        %v2571 = vadd.f32 %v2486, %v2570
        %v2572 = vpop.f32.mrb[0].mxu0
        %v2573 = vpop.f32.mrb[0].mxu0
        %v2574 = vadd.f32 %v2486, %v2573
        %v2575 = vpop.f32.mrb[0].mxu0
        %2576 = vmatprep.mubr.bf16.mxu0 0
        %2577 = vmatmul.mubr.bf16.gmra.mrb[0].mxu0 %v2448
        %v2578 = vpop.f32.mrb[0].mxu0
        %v2579 = vadd.f32 %v2486, %v2578
        %v2580 = vpop.f32.mrb[0].mxu0
        %v2581 = vpop.f32.mrb[0].mxu0
        %v2582 = vadd.f32 %v2486, %v2581
        %v2583 = vpop.f32.mrb[0].mxu0
        %2584 = vmatprep.mubr.bf16.mxu0 0
        %2585 = vmatmul.mubr.bf16.gmra.mrb[0].mxu0 %v2449
        %v2586 = vpop.f32.mrb[0].mxu0
        %v2587 = vadd.f32 %v2486, %v2586
        %v2588 = vpop.f32.mrb[0].mxu0
        %v2589 = vpop.f32.mrb[0].mxu0
        %v2590 = vadd.f32 %v2486, %v2589
        %v2591 = vpop.f32.mrb[0].mxu0
        %2592 = vmatprep.mubr.bf16.mxu0 0
        %2593 = vmatmul.mubr.bf16.gmra.mrb[0].mxu0 %v2450
        %v2594 = vpop.f32.mrb[0].mxu0
        %v2595 = vadd.f32 %v2486, %v2594
        %v2596 = vpop.f32.mrb[0].mxu0
        %v2597 = vpop.f32.mrb[0].mxu0
        %v2598 = vadd.f32 %v2486, %v2597
        %v2599 = vpop.f32.mrb[0].mxu0
        %2600 = vmatprep.mubr.bf16.mxu0 0
        %2601 = vmatmul.mubr.bf16.gmra.mrb[0].mxu0 %v2451
        %v2602 = vpop.f32.mrb[0].mxu0
        %v2603 = vadd.f32 %v2486, %v2602
        %v2604 = vpop.f32.mrb[0].mxu0
        %v2605 = vpop.f32.mrb[0].mxu0
        %v2606 = vadd.f32 %v2486, %v2605
        %v2607 = vpop.f32.mrb[0].mxu0
        %2608 = vmatprep.mubr.bf16.mxu0 0
        %2609 = vmatmul.mubr.bf16.gmra.mrb[0].mxu0 %v2452
        %v2610 = vpop.f32.mrb[0].mxu0
        %v2611 = vadd.f32 %v2486, %v2610
        %v2612 = vpop.f32.mrb[0].mxu0
        %v2613 = vpop.f32.mrb[0].mxu0
        %v2614 = vadd.f32 %v2486, %v2613
        %v2615 = vpop.f32.mrb[0].mxu0
        %2616 = vmatprep.mubr.bf16.mxu0 0
        %2617 = vmatmul.mubr.bf16.gmra.mrb[0].mxu0 %v2453
        %v2618 = vpop.f32.mrb[0].mxu0
        %v2619 = vadd.f32 %v2486, %v2618
        %v2620 = vpop.f32.mrb[0].mxu0
        %v2621 = vpop.f32.mrb[0].mxu0
        %v2622 = vadd.f32 %v2486, %v2621
        %v2623 = vpop.f32.mrb[0].mxu0
        %2624 = vmatprep.mubr.bf16.mxu0 0
        %2625 = vmatmul.mubr.bf16.gmra.mrb[0].mxu0 %v2454
        %v2626 = vpop.f32.mrb[0].mxu0
        %v2627 = vadd.f32 %v2486, %v2626
        %v2628 = vpop.f32.mrb[0].mxu0
        %v2629 = vpop.f32.mrb[0].mxu0
        %v2630 = vadd.f32 %v2486, %v2629
        %v2631 = vpop.f32.mrb[0].mxu0
        %2632 = vmatprep.mubr.bf16.mxu0 0
        %2633 = vmatmul.mubr.bf16.gmra.mrb[0].mxu0 %v2455
        %v2634 = vpop.f32.mrb[0].mxu0
        %v2635 = vadd.f32 %v2486, %v2634
        %v2636 = vpop.f32.mrb[0].mxu0
        %v2637 = vpop.f32.mrb[0].mxu0
        %v2638 = vadd.f32 %v2486, %v2637
        %v2639 = vpop.f32.mrb[0].mxu0
        %2640 = vmatprep.mubr.bf16.mxu0 0
        %2641 = vmatmul.mubr.bf16.gmra.mrb[0].mxu0 %v2456
        %v2642 = vpop.f32.mrb[0].mxu0
        %v2643 = vadd.f32 %v2486, %v2642
        %v2644 = vpop.f32.mrb[0].mxu0
        %v2645 = vpop.f32.mrb[0].mxu0
        %v2646 = vadd.f32 %v2486, %v2645
        %v2647 = vpop.f32.mrb[0].mxu0
        %2648 = vmatprep.mubr.bf16.mxu0 0
        %2649 = vmatmul.mubr.bf16.gmra.mrb[0].mxu0 %v2457
        %v2650 = vpop.f32.mrb[0].mxu0
        %v2651 = vadd.f32 %v2486, %v2650
        %v2652 = vpop.f32.mrb[0].mxu0
        %v2653 = vpop.f32.mrb[0].mxu0
        %v2654 = vadd.f32 %v2486, %v2653
        %v2655 = vpop.f32.mrb[0].mxu0
        %2656 = vmatprep.mubr.bf16.mxu0 0
        %2657 = vmatmul.mubr.bf16.gmra.mrb[0].mxu0 %v2458
        %v2658 = vpop.f32.mrb[0].mxu0
        %v2659 = vadd.f32 %v2486, %v2658
        %v2660 = vpop.f32.mrb[0].mxu0
        %v2661 = vpop.f32.mrb[0].mxu0
        %v2662 = vadd.f32 %v2486, %v2661
        %v2663 = vpop.f32.mrb[0].mxu0
        %2664 = vmatprep.mubr.bf16.mxu0 0
        %2665 = vmatmul.mubr.bf16.gmra.mrb[0].mxu0 %v2459
        %v2666 = vpop.f32.mrb[0].mxu0
        %v2667 = vadd.f32 %v2486, %v2666
        %v2668 = vpop.f32.mrb[0].mxu0
        %v2669 = vpop.f32.mrb[0].mxu0
        %v2670 = vadd.f32 %v2486, %v2669
        %v2671 = vpop.f32.mrb[0].mxu0
        %2672 = vmatprep.mubr.bf16.mxu0 0
        %2673 = vmatmul.mubr.bf16.gmra.mrb[0].mxu0 %v2460
        %v2674 = vpop.f32.mrb[0].mxu0
        %v2675 = vadd.f32 %v2486, %v2674
        %v2676 = vpop.f32.mrb[0].mxu0
        %v2677 = vpop.f32.mrb[0].mxu0
        %v2678 = vadd.f32 %v2486, %v2677
        %v2679 = vpop.f32.mrb[0].mxu0
        %2680 = vmatprep.mubr.bf16.mxu0 0
        %2681 = vmatmul.mubr.bf16.gmra.mrb[0].mxu0 %v2461
        %v2682 = vpop.f32.mrb[0].mxu0
        %v2683 = vadd.f32 %v2486, %v2682
        %v2684 = vpop.f32.mrb[0].mxu0
        %v2685 = vpop.f32.mrb[0].mxu0
        %v2686 = vadd.f32 %v2486, %v2685
        %v2687 = vpop.f32.mrb[0].mxu0
        %2688 = vmatprep.mubr.bf16.mxu0 0
        %2689 = vmatmul.mubr.bf16.gmra.mrb[0].mxu0 %v2462
        %v2690 = vpop.f32.mrb[0].mxu0
        %v2691 = vadd.f32 %v2486, %v2690
        %v2692 = vpop.f32.mrb[0].mxu0
        %v2693 = vpop.f32.mrb[0].mxu0
        %v2694 = vadd.f32 %v2486, %v2693
        %v2695 = vpop.f32.mrb[0].mxu0
        %2696 = vdwg.mxu0
        %v2697 = vmax.f32 %v2571, 0.0
        %v2698 = vmax.f32 %v2574, 0.0
        %v2699 = vmax.f32 %v2579, 0.0
        %v2700 = vmax.f32 %v2582, 0.0
        %v2701 = vmax.f32 %v2587, 0.0
        %v2702 = vmax.f32 %v2590, 0.0
        %v2703 = vmax.f32 %v2595, 0.0
        %v2704 = vmax.f32 %v2598, 0.0
        %v2705 = vmax.f32 %v2603, 0.0
        %v2706 = vmax.f32 %v2606, 0.0
        %v2707 = vmax.f32 %v2611, 0.0
        %v2708 = vmax.f32 %v2614, 0.0
        %v2709 = vmax.f32 %v2619, 0.0
        %v2710 = vmax.f32 %v2622, 0.0
        %v2711 = vmax.f32 %v2627, 0.0
        %v2712 = vmax.f32 %v2630, 0.0
        %v2713 = vmax.f32 %v2635, 0.0
        %v2714 = vmax.f32 %v2638, 0.0
        %v2715 = vmax.f32 %v2643, 0.0
        %v2716 = vmax.f32 %v2646, 0.0
        %v2717 = vmax.f32 %v2651, 0.0
        %v2718 = vmax.f32 %v2654, 0.0
        %v2719 = vmax.f32 %v2659, 0.0
        %v2720 = vmax.f32 %v2662, 0.0
        %v2721 = vmax.f32 %v2667, 0.0
        %v2722 = vmax.f32 %v2670, 0.0
        %v2723 = vmax.f32 %v2675, 0.0
        %v2724 = vmax.f32 %v2678, 0.0
        %v2725 = vmax.f32 %v2683, 0.0
        %v2726 = vmax.f32 %v2686, 0.0
        %v2727 = vmax.f32 %v2691, 0.0
        %v2728 = vmax.f32 %v2694, 0.0
        %v2729 = vpack.c.bf16 %v2698, %v2697
        %v2730 = vpack.c.bf16 %v2700, %v2699
        %v2731 = vpack.c.bf16 %v2702, %v2701
        %v2732 = vpack.c.bf16 %v2704, %v2703
        %v2733 = vpack.c.bf16 %v2706, %v2705
        %v2734 = vpack.c.bf16 %v2708, %v2707
        %v2735 = vpack.c.bf16 %v2710, %v2709
        %v2736 = vpack.c.bf16 %v2712, %v2711
        %v2737 = vpack.c.bf16 %v2714, %v2713
        %v2738 = vpack.c.bf16 %v2716, %v2715
        %v2739 = vpack.c.bf16 %v2718, %v2717
        %v2740 = vpack.c.bf16 %v2720, %v2719
        %v2741 = vpack.c.bf16 %v2722, %v2721
        %v2742 = vpack.c.bf16 %v2724, %v2723
        %v2743 = vpack.c.bf16 %v2726, %v2725
        %v2744 = vpack.c.bf16 %v2728, %v2727
        %s2745 = scalar_lea.vmem %s5, 320
        %v2746 = vld [vmem:[%s2745] sm:$0xf]
        %v2747 = vld [vmem:[%s2745 + $0x4] sm:$0xf]
        %v2748 = vld [vmem:[%s2745 + $0x8] sm:$0xf]
        %v2749 = vld [vmem:[%s2745 + $0xc] sm:$0xf]
        %v2750 = vld [vmem:[%s2745 + $0x10] sm:$0xf]
        %v2751 = vld [vmem:[%s2745 + $0x14] sm:$0xf]
        %v2752 = vld [vmem:[%s2745 + $0x18] sm:$0xf]
        %v2753 = vld [vmem:[%s2745 + $0x1c] sm:$0xf]
        %v2754 = vld [vmem:[%s2745 + $0x20] sm:$0xf]
        %v2755 = vld [vmem:[%s2745 + $0x24] sm:$0xf]
        %v2756 = vld [vmem:[%s2745 + $0x28] sm:$0xf]
        %v2757 = vld [vmem:[%s2745 + $0x2c] sm:$0xf]
        %v2758 = vld [vmem:[%s2745 + $0x30] sm:$0xf]
        %v2759 = vld [vmem:[%s2745 + $0x34] sm:$0xf]
        %v2760 = vld [vmem:[%s2745 + $0x38] sm:$0xf]
        %v2761 = vld [vmem:[%s2745 + $0x3c] sm:$0xf]
        %s2762 = scalar_lea.vmem %s6, 5
        %v2763 = vld [vmem:[%s2762] sm:$0x1]
        %v2765 = vlaneseq
        %v2766 = vshrl.u32 %v2765, 7
        %v2767 = vsub.s32 0, %v2766
        %v2768 = vrot.slane %v2763, %v2767
        %v2786 = vunpack.c.l.b16 %v2746
        %v2787 = vunpack.c.l.b16 %v2747
        %v2788 = vunpack.c.l.b16 %v2748
        %v2789 = vunpack.c.l.b16 %v2749
        %v2790 = vunpack.c.l.b16 %v2750
        %v2791 = vunpack.c.l.b16 %v2751
        %v2792 = vunpack.c.l.b16 %v2752
        %v2793 = vunpack.c.l.b16 %v2753
        %v2794 = vunpack.c.l.b16 %v2754
        %v2795 = vunpack.c.l.b16 %v2755
        %v2796 = vunpack.c.l.b16 %v2756
        %v2797 = vunpack.c.l.b16 %v2757
        %v2798 = vunpack.c.l.b16 %v2758
        %v2799 = vunpack.c.l.b16 %v2759
        %v2800 = vunpack.c.l.b16 %v2760
        %v2801 = vunpack.c.l.b16 %v2761
        %v2802 = vpack.c.b16 %v2787, %v2786
        %v2803 = vpack.c.b16 %v2789, %v2788
        %v2804 = vpack.c.b16 %v2791, %v2790
        %v2805 = vpack.c.b16 %v2793, %v2792
        %v2806 = vpack.c.b16 %v2795, %v2794
        %v2807 = vpack.c.b16 %v2797, %v2796
        %v2808 = vpack.c.b16 %v2799, %v2798
        %v2809 = vpack.c.b16 %v2801, %v2800
        %2818 = vmatprep.subr.bf16.mxu0 0
        %2819 = vmatpush1.bf16.msra.mxu0 %v2802
        %2820 = vmatprep.subr.bf16.mxu0 0
        %2821 = vmatpush1.bf16.msra.mxu0 %v2803
        %2822 = vmatprep.subr.bf16.mxu0 0
        %2823 = vmatpush1.bf16.msra.mxu0 %v2804
        %2824 = vmatprep.subr.bf16.mxu0 0
        %2825 = vmatpush1.bf16.msra.mxu0 %v2805
        %2826 = vmatprep.subr.bf16.mxu0 0
        %2827 = vmatpush1.bf16.msra.mxu0 %v2806
        %2828 = vmatprep.subr.bf16.mxu0 0
        %2829 = vmatpush1.bf16.msra.mxu0 %v2807
        %2830 = vmatprep.subr.bf16.mxu0 0
        %2831 = vmatpush1.bf16.msra.mxu0 %v2808
        %2832 = vmatprep.subr.bf16.mxu0 0
        %2833 = vmatpush1.bf16.msra.mxu0 %v2809
        %2834 = vmatprep.subr.bf16.mxu0 0
        %2835 = vmatpush1.bf16.msra.mxu0 0
        %2836 = vmatprep.subr.bf16.mxu0 0
        %2837 = vmatpush1.bf16.msra.mxu0 0
        %2838 = vmatprep.subr.bf16.mxu0 0
        %2839 = vmatpush1.bf16.msra.mxu0 0
        %2840 = vmatprep.subr.bf16.mxu0 0
        %2841 = vmatpush1.bf16.msra.mxu0 0
        %2842 = vmatprep.subr.bf16.mxu0 0
        %2843 = vmatpush1.bf16.msra.mxu0 0
        %2844 = vmatprep.subr.bf16.mxu0 0
        %2845 = vmatpush1.bf16.msra.mxu0 0
        %2846 = vmatprep.subr.bf16.mxu0 0
        %2847 = vmatpush1.bf16.msra.mxu0 0
        %2848 = vmatprep.subr.bf16.mxu0 0
        %2849 = vmatpush1.bf16.msra.mxu0 0
        %2850 = vmatprep.mubr.bf16.mxu0 0
        %2851 = vmatmul.mubr.bf16.gmra.mrb[0].mxu0 %v2729
        %v2852 = vpop.f32.mrb[0].mxu0
        %v2853 = vadd.f32 %v2768, %v2852
        %v2854 = vpop.f32.mrb[0].mxu0
        %v2855 = vpop.f32.mrb[0].mxu0
        %v2856 = vadd.f32 %v2768, %v2855
        %v2857 = vpop.f32.mrb[0].mxu0
        %2858 = vmatprep.mubr.bf16.mxu0 0
        %2859 = vmatmul.mubr.bf16.gmra.mrb[0].mxu0 %v2730
        %v2860 = vpop.f32.mrb[0].mxu0
        %v2861 = vadd.f32 %v2768, %v2860
        %v2862 = vpop.f32.mrb[0].mxu0
        %v2863 = vpop.f32.mrb[0].mxu0
        %v2864 = vadd.f32 %v2768, %v2863
        %v2865 = vpop.f32.mrb[0].mxu0
        %2866 = vmatprep.mubr.bf16.mxu0 0
        %2867 = vmatmul.mubr.bf16.gmra.mrb[0].mxu0 %v2731
        %v2868 = vpop.f32.mrb[0].mxu0
        %v2869 = vadd.f32 %v2768, %v2868
        %v2870 = vpop.f32.mrb[0].mxu0
        %v2871 = vpop.f32.mrb[0].mxu0
        %v2872 = vadd.f32 %v2768, %v2871
        %v2873 = vpop.f32.mrb[0].mxu0
        %2874 = vmatprep.mubr.bf16.mxu0 0
        %2875 = vmatmul.mubr.bf16.gmra.mrb[0].mxu0 %v2732
        %v2876 = vpop.f32.mrb[0].mxu0
        %v2877 = vadd.f32 %v2768, %v2876
        %v2878 = vpop.f32.mrb[0].mxu0
        %v2879 = vpop.f32.mrb[0].mxu0
        %v2880 = vadd.f32 %v2768, %v2879
        %v2881 = vpop.f32.mrb[0].mxu0
        %2882 = vmatprep.mubr.bf16.mxu0 0
        %2883 = vmatmul.mubr.bf16.gmra.mrb[0].mxu0 %v2733
        %v2884 = vpop.f32.mrb[0].mxu0
        %v2885 = vadd.f32 %v2768, %v2884
        %v2886 = vpop.f32.mrb[0].mxu0
        %v2887 = vpop.f32.mrb[0].mxu0
        %v2888 = vadd.f32 %v2768, %v2887
        %v2889 = vpop.f32.mrb[0].mxu0
        %2890 = vmatprep.mubr.bf16.mxu0 0
        %2891 = vmatmul.mubr.bf16.gmra.mrb[0].mxu0 %v2734
        %v2892 = vpop.f32.mrb[0].mxu0
        %v2893 = vadd.f32 %v2768, %v2892
        %v2894 = vpop.f32.mrb[0].mxu0
        %v2895 = vpop.f32.mrb[0].mxu0
        %v2896 = vadd.f32 %v2768, %v2895
        %v2897 = vpop.f32.mrb[0].mxu0
        %2898 = vmatprep.mubr.bf16.mxu0 0
        %2899 = vmatmul.mubr.bf16.gmra.mrb[0].mxu0 %v2735
        %v2900 = vpop.f32.mrb[0].mxu0
        %v2901 = vadd.f32 %v2768, %v2900
        %v2902 = vpop.f32.mrb[0].mxu0
        %v2903 = vpop.f32.mrb[0].mxu0
        %v2904 = vadd.f32 %v2768, %v2903
        %v2905 = vpop.f32.mrb[0].mxu0
        %2906 = vmatprep.mubr.bf16.mxu0 0
        %2907 = vmatmul.mubr.bf16.gmra.mrb[0].mxu0 %v2736
        %v2908 = vpop.f32.mrb[0].mxu0
        %v2909 = vadd.f32 %v2768, %v2908
        %v2910 = vpop.f32.mrb[0].mxu0
        %v2911 = vpop.f32.mrb[0].mxu0
        %v2912 = vadd.f32 %v2768, %v2911
        %v2913 = vpop.f32.mrb[0].mxu0
        %2914 = vmatprep.mubr.bf16.mxu0 0
        %2915 = vmatmul.mubr.bf16.gmra.mrb[0].mxu0 %v2737
        %v2916 = vpop.f32.mrb[0].mxu0
        %v2917 = vadd.f32 %v2768, %v2916
        %v2918 = vpop.f32.mrb[0].mxu0
        %v2919 = vpop.f32.mrb[0].mxu0
        %v2920 = vadd.f32 %v2768, %v2919
        %v2921 = vpop.f32.mrb[0].mxu0
        %2922 = vmatprep.mubr.bf16.mxu0 0
        %2923 = vmatmul.mubr.bf16.gmra.mrb[0].mxu0 %v2738
        %v2924 = vpop.f32.mrb[0].mxu0
        %v2925 = vadd.f32 %v2768, %v2924
        %v2926 = vpop.f32.mrb[0].mxu0
        %v2927 = vpop.f32.mrb[0].mxu0
        %v2928 = vadd.f32 %v2768, %v2927
        %v2929 = vpop.f32.mrb[0].mxu0
        %2930 = vmatprep.mubr.bf16.mxu0 0
        %2931 = vmatmul.mubr.bf16.gmra.mrb[0].mxu0 %v2739
        %v2932 = vpop.f32.mrb[0].mxu0
        %v2933 = vadd.f32 %v2768, %v2932
        %v2934 = vpop.f32.mrb[0].mxu0
        %v2935 = vpop.f32.mrb[0].mxu0
        %v2936 = vadd.f32 %v2768, %v2935
        %v2937 = vpop.f32.mrb[0].mxu0
        %2938 = vmatprep.mubr.bf16.mxu0 0
        %2939 = vmatmul.mubr.bf16.gmra.mrb[0].mxu0 %v2740
        %v2940 = vpop.f32.mrb[0].mxu0
        %v2941 = vadd.f32 %v2768, %v2940
        %v2942 = vpop.f32.mrb[0].mxu0
        %v2943 = vpop.f32.mrb[0].mxu0
        %v2944 = vadd.f32 %v2768, %v2943
        %v2945 = vpop.f32.mrb[0].mxu0
        %2946 = vmatprep.mubr.bf16.mxu0 0
        %2947 = vmatmul.mubr.bf16.gmra.mrb[0].mxu0 %v2741
        %v2948 = vpop.f32.mrb[0].mxu0
        %v2949 = vadd.f32 %v2768, %v2948
        %v2950 = vpop.f32.mrb[0].mxu0
        %v2951 = vpop.f32.mrb[0].mxu0
        %v2952 = vadd.f32 %v2768, %v2951
        %v2953 = vpop.f32.mrb[0].mxu0
        %2954 = vmatprep.mubr.bf16.mxu0 0
        %2955 = vmatmul.mubr.bf16.gmra.mrb[0].mxu0 %v2742
        %v2956 = vpop.f32.mrb[0].mxu0
        %v2957 = vadd.f32 %v2768, %v2956
        %v2958 = vpop.f32.mrb[0].mxu0
        %v2959 = vpop.f32.mrb[0].mxu0
        %v2960 = vadd.f32 %v2768, %v2959
        %v2961 = vpop.f32.mrb[0].mxu0
        %2962 = vmatprep.mubr.bf16.mxu0 0
        %2963 = vmatmul.mubr.bf16.gmra.mrb[0].mxu0 %v2743
        %v2964 = vpop.f32.mrb[0].mxu0
        %v2965 = vadd.f32 %v2768, %v2964
        %v2966 = vpop.f32.mrb[0].mxu0
        %v2967 = vpop.f32.mrb[0].mxu0
        %v2968 = vadd.f32 %v2768, %v2967
        %v2969 = vpop.f32.mrb[0].mxu0
        %2970 = vmatprep.mubr.bf16.mxu0 0
        %2971 = vmatmul.mubr.bf16.gmra.mrb[0].mxu0 %v2744
        %v2972 = vpop.f32.mrb[0].mxu0
        %v2973 = vadd.f32 %v2768, %v2972
        %v2974 = vpop.f32.mrb[0].mxu0
        %v2975 = vpop.f32.mrb[0].mxu0
        %v2976 = vadd.f32 %v2768, %v2975
        %v2977 = vpop.f32.mrb[0].mxu0
        %2978 = vdwg.mxu0
        %v2979 = vmax.f32 %v2853, 0.0
        %v2980 = vmax.f32 %v2856, 0.0
        %v2981 = vmax.f32 %v2861, 0.0
        %v2982 = vmax.f32 %v2864, 0.0
        %v2983 = vmax.f32 %v2869, 0.0
        %v2984 = vmax.f32 %v2872, 0.0
        %v2985 = vmax.f32 %v2877, 0.0
        %v2986 = vmax.f32 %v2880, 0.0
        %v2987 = vmax.f32 %v2885, 0.0
        %v2988 = vmax.f32 %v2888, 0.0
        %v2989 = vmax.f32 %v2893, 0.0
        %v2990 = vmax.f32 %v2896, 0.0
        %v2991 = vmax.f32 %v2901, 0.0
        %v2992 = vmax.f32 %v2904, 0.0
        %v2993 = vmax.f32 %v2909, 0.0
        %v2994 = vmax.f32 %v2912, 0.0
        %v2995 = vmax.f32 %v2917, 0.0
        %v2996 = vmax.f32 %v2920, 0.0
        %v2997 = vmax.f32 %v2925, 0.0
        %v2998 = vmax.f32 %v2928, 0.0
        %v2999 = vmax.f32 %v2933, 0.0
        %v3000 = vmax.f32 %v2936, 0.0
        %v3001 = vmax.f32 %v2941, 0.0
        %v3002 = vmax.f32 %v2944, 0.0
        %v3003 = vmax.f32 %v2949, 0.0
        %v3004 = vmax.f32 %v2952, 0.0
        %v3005 = vmax.f32 %v2957, 0.0
        %v3006 = vmax.f32 %v2960, 0.0
        %v3007 = vmax.f32 %v2965, 0.0
        %v3008 = vmax.f32 %v2968, 0.0
        %v3009 = vmax.f32 %v2973, 0.0
        %v3010 = vmax.f32 %v2976, 0.0
        %v3011 = vpack.c.bf16 %v2980, %v2979
        %v3012 = vpack.c.bf16 %v2982, %v2981
        %v3013 = vpack.c.bf16 %v2984, %v2983
        %v3014 = vpack.c.bf16 %v2986, %v2985
        %v3015 = vpack.c.bf16 %v2988, %v2987
        %v3016 = vpack.c.bf16 %v2990, %v2989
        %v3017 = vpack.c.bf16 %v2992, %v2991
        %v3018 = vpack.c.bf16 %v2994, %v2993
        %v3019 = vpack.c.bf16 %v2996, %v2995
        %v3020 = vpack.c.bf16 %v2998, %v2997
        %v3021 = vpack.c.bf16 %v3000, %v2999
        %v3022 = vpack.c.bf16 %v3002, %v3001
        %v3023 = vpack.c.bf16 %v3004, %v3003
        %v3024 = vpack.c.bf16 %v3006, %v3005
        %v3025 = vpack.c.bf16 %v3008, %v3007
        %v3026 = vpack.c.bf16 %v3010, %v3009
        %s3027 = scalar_lea.vmem %s5, 384
        %v3028 = vld [vmem:[%s3027] sm:$0xf]
        %v3029 = vld [vmem:[%s3027 + $0x4] sm:$0xf]
        %v3030 = vld [vmem:[%s3027 + $0x8] sm:$0xf]
        %v3031 = vld [vmem:[%s3027 + $0xc] sm:$0xf]
        %v3032 = vld [vmem:[%s3027 + $0x10] sm:$0xf]
        %v3033 = vld [vmem:[%s3027 + $0x14] sm:$0xf]
        %v3034 = vld [vmem:[%s3027 + $0x18] sm:$0xf]
        %v3035 = vld [vmem:[%s3027 + $0x1c] sm:$0xf]
        %v3036 = vld [vmem:[%s3027 + $0x20] sm:$0xf]
        %v3037 = vld [vmem:[%s3027 + $0x24] sm:$0xf]
        %v3038 = vld [vmem:[%s3027 + $0x28] sm:$0xf]
        %v3039 = vld [vmem:[%s3027 + $0x2c] sm:$0xf]
        %v3040 = vld [vmem:[%s3027 + $0x30] sm:$0xf]
        %v3041 = vld [vmem:[%s3027 + $0x34] sm:$0xf]
        %v3042 = vld [vmem:[%s3027 + $0x38] sm:$0xf]
        %v3043 = vld [vmem:[%s3027 + $0x3c] sm:$0xf]
        %s3044 = scalar_lea.vmem %s6, 6
        %v3045 = vld [vmem:[%s3044] sm:$0x1]
        %v3047 = vlaneseq
        %v3048 = vshrl.u32 %v3047, 7
        %v3049 = vsub.s32 0, %v3048
        %v3050 = vrot.slane %v3045, %v3049
        %v3068 = vunpack.c.l.b16 %v3028
        %v3069 = vunpack.c.l.b16 %v3029
        %v3070 = vunpack.c.l.b16 %v3030
        %v3071 = vunpack.c.l.b16 %v3031
        %v3072 = vunpack.c.l.b16 %v3032
        %v3073 = vunpack.c.l.b16 %v3033
        %v3074 = vunpack.c.l.b16 %v3034
        %v3075 = vunpack.c.l.b16 %v3035
        %v3076 = vunpack.c.l.b16 %v3036
        %v3077 = vunpack.c.l.b16 %v3037
        %v3078 = vunpack.c.l.b16 %v3038
        %v3079 = vunpack.c.l.b16 %v3039
        %v3080 = vunpack.c.l.b16 %v3040
        %v3081 = vunpack.c.l.b16 %v3041
        %v3082 = vunpack.c.l.b16 %v3042
        %v3083 = vunpack.c.l.b16 %v3043
        %v3084 = vpack.c.b16 %v3069, %v3068
        %v3085 = vpack.c.b16 %v3071, %v3070
        %v3086 = vpack.c.b16 %v3073, %v3072
        %v3087 = vpack.c.b16 %v3075, %v3074
        %v3088 = vpack.c.b16 %v3077, %v3076
        %v3089 = vpack.c.b16 %v3079, %v3078
        %v3090 = vpack.c.b16 %v3081, %v3080
        %v3091 = vpack.c.b16 %v3083, %v3082
        %3100 = vmatprep.subr.bf16.mxu0 0
        %3101 = vmatpush1.bf16.msra.mxu0 %v3084
        %3102 = vmatprep.subr.bf16.mxu0 0
        %3103 = vmatpush1.bf16.msra.mxu0 %v3085
        %3104 = vmatprep.subr.bf16.mxu0 0
        %3105 = vmatpush1.bf16.msra.mxu0 %v3086
        %3106 = vmatprep.subr.bf16.mxu0 0
        %3107 = vmatpush1.bf16.msra.mxu0 %v3087
        %3108 = vmatprep.subr.bf16.mxu0 0
        %3109 = vmatpush1.bf16.msra.mxu0 %v3088
        %3110 = vmatprep.subr.bf16.mxu0 0
        %3111 = vmatpush1.bf16.msra.mxu0 %v3089
        %3112 = vmatprep.subr.bf16.mxu0 0
        %3113 = vmatpush1.bf16.msra.mxu0 %v3090
        %3114 = vmatprep.subr.bf16.mxu0 0
        %3115 = vmatpush1.bf16.msra.mxu0 %v3091
        %3116 = vmatprep.subr.bf16.mxu0 0
        %3117 = vmatpush1.bf16.msra.mxu0 0
        %3118 = vmatprep.subr.bf16.mxu0 0
        %3119 = vmatpush1.bf16.msra.mxu0 0
        %3120 = vmatprep.subr.bf16.mxu0 0
        %3121 = vmatpush1.bf16.msra.mxu0 0
        %3122 = vmatprep.subr.bf16.mxu0 0
        %3123 = vmatpush1.bf16.msra.mxu0 0
        %3124 = vmatprep.subr.bf16.mxu0 0
        %3125 = vmatpush1.bf16.msra.mxu0 0
        %3126 = vmatprep.subr.bf16.mxu0 0
        %3127 = vmatpush1.bf16.msra.mxu0 0
        %3128 = vmatprep.subr.bf16.mxu0 0
        %3129 = vmatpush1.bf16.msra.mxu0 0
        %3130 = vmatprep.subr.bf16.mxu0 0
        %3131 = vmatpush1.bf16.msra.mxu0 0
        %3132 = vmatprep.mubr.bf16.mxu0 0
        %3133 = vmatmul.mubr.bf16.gmra.mrb[0].mxu0 %v3011
        %v3134 = vpop.f32.mrb[0].mxu0
        %v3135 = vadd.f32 %v3050, %v3134
        %v3136 = vpop.f32.mrb[0].mxu0
        %v3137 = vpop.f32.mrb[0].mxu0
        %v3138 = vadd.f32 %v3050, %v3137
        %v3139 = vpop.f32.mrb[0].mxu0
        %3140 = vmatprep.mubr.bf16.mxu0 0
        %3141 = vmatmul.mubr.bf16.gmra.mrb[0].mxu0 %v3012
        %v3142 = vpop.f32.mrb[0].mxu0
        %v3143 = vadd.f32 %v3050, %v3142
        %v3144 = vpop.f32.mrb[0].mxu0
        %v3145 = vpop.f32.mrb[0].mxu0
        %v3146 = vadd.f32 %v3050, %v3145
        %v3147 = vpop.f32.mrb[0].mxu0
        %3148 = vmatprep.mubr.bf16.mxu0 0
        %3149 = vmatmul.mubr.bf16.gmra.mrb[0].mxu0 %v3013
        %v3150 = vpop.f32.mrb[0].mxu0
        %v3151 = vadd.f32 %v3050, %v3150
        %v3152 = vpop.f32.mrb[0].mxu0
        %v3153 = vpop.f32.mrb[0].mxu0
        %v3154 = vadd.f32 %v3050, %v3153
        %v3155 = vpop.f32.mrb[0].mxu0
        %3156 = vmatprep.mubr.bf16.mxu0 0
        %3157 = vmatmul.mubr.bf16.gmra.mrb[0].mxu0 %v3014
        %v3158 = vpop.f32.mrb[0].mxu0
        %v3159 = vadd.f32 %v3050, %v3158
        %v3160 = vpop.f32.mrb[0].mxu0
        %v3161 = vpop.f32.mrb[0].mxu0
        %v3162 = vadd.f32 %v3050, %v3161
        %v3163 = vpop.f32.mrb[0].mxu0
        %3164 = vmatprep.mubr.bf16.mxu0 0
        %3165 = vmatmul.mubr.bf16.gmra.mrb[0].mxu0 %v3015
        %v3166 = vpop.f32.mrb[0].mxu0
        %v3167 = vadd.f32 %v3050, %v3166
        %v3168 = vpop.f32.mrb[0].mxu0
        %v3169 = vpop.f32.mrb[0].mxu0
        %v3170 = vadd.f32 %v3050, %v3169
        %v3171 = vpop.f32.mrb[0].mxu0
        %3172 = vmatprep.mubr.bf16.mxu0 0
        %3173 = vmatmul.mubr.bf16.gmra.mrb[0].mxu0 %v3016
        %v3174 = vpop.f32.mrb[0].mxu0
        %v3175 = vadd.f32 %v3050, %v3174
        %v3176 = vpop.f32.mrb[0].mxu0
        %v3177 = vpop.f32.mrb[0].mxu0
        %v3178 = vadd.f32 %v3050, %v3177
        %v3179 = vpop.f32.mrb[0].mxu0
        %3180 = vmatprep.mubr.bf16.mxu0 0
        %3181 = vmatmul.mubr.bf16.gmra.mrb[0].mxu0 %v3017
        %v3182 = vpop.f32.mrb[0].mxu0
        %v3183 = vadd.f32 %v3050, %v3182
        %v3184 = vpop.f32.mrb[0].mxu0
        %v3185 = vpop.f32.mrb[0].mxu0
        %v3186 = vadd.f32 %v3050, %v3185
        %v3187 = vpop.f32.mrb[0].mxu0
        %3188 = vmatprep.mubr.bf16.mxu0 0
        %3189 = vmatmul.mubr.bf16.gmra.mrb[0].mxu0 %v3018
        %v3190 = vpop.f32.mrb[0].mxu0
        %v3191 = vadd.f32 %v3050, %v3190
        %v3192 = vpop.f32.mrb[0].mxu0
        %v3193 = vpop.f32.mrb[0].mxu0
        %v3194 = vadd.f32 %v3050, %v3193
        %v3195 = vpop.f32.mrb[0].mxu0
        %3196 = vmatprep.mubr.bf16.mxu0 0
        %3197 = vmatmul.mubr.bf16.gmra.mrb[0].mxu0 %v3019
        %v3198 = vpop.f32.mrb[0].mxu0
        %v3199 = vadd.f32 %v3050, %v3198
        %v3200 = vpop.f32.mrb[0].mxu0
        %v3201 = vpop.f32.mrb[0].mxu0
        %v3202 = vadd.f32 %v3050, %v3201
        %v3203 = vpop.f32.mrb[0].mxu0
        %3204 = vmatprep.mubr.bf16.mxu0 0
        %3205 = vmatmul.mubr.bf16.gmra.mrb[0].mxu0 %v3020
        %v3206 = vpop.f32.mrb[0].mxu0
        %v3207 = vadd.f32 %v3050, %v3206
        %v3208 = vpop.f32.mrb[0].mxu0
        %v3209 = vpop.f32.mrb[0].mxu0
        %v3210 = vadd.f32 %v3050, %v3209
        %v3211 = vpop.f32.mrb[0].mxu0
        %3212 = vmatprep.mubr.bf16.mxu0 0
        %3213 = vmatmul.mubr.bf16.gmra.mrb[0].mxu0 %v3021
        %v3214 = vpop.f32.mrb[0].mxu0
        %v3215 = vadd.f32 %v3050, %v3214
        %v3216 = vpop.f32.mrb[0].mxu0
        %v3217 = vpop.f32.mrb[0].mxu0
        %v3218 = vadd.f32 %v3050, %v3217
        %v3219 = vpop.f32.mrb[0].mxu0
        %3220 = vmatprep.mubr.bf16.mxu0 0
        %3221 = vmatmul.mubr.bf16.gmra.mrb[0].mxu0 %v3022
        %v3222 = vpop.f32.mrb[0].mxu0
        %v3223 = vadd.f32 %v3050, %v3222
        %v3224 = vpop.f32.mrb[0].mxu0
        %v3225 = vpop.f32.mrb[0].mxu0
        %v3226 = vadd.f32 %v3050, %v3225
        %v3227 = vpop.f32.mrb[0].mxu0
        %3228 = vmatprep.mubr.bf16.mxu0 0
        %3229 = vmatmul.mubr.bf16.gmra.mrb[0].mxu0 %v3023
        %v3230 = vpop.f32.mrb[0].mxu0
        %v3231 = vadd.f32 %v3050, %v3230
        %v3232 = vpop.f32.mrb[0].mxu0
        %v3233 = vpop.f32.mrb[0].mxu0
        %v3234 = vadd.f32 %v3050, %v3233
        %v3235 = vpop.f32.mrb[0].mxu0
        %3236 = vmatprep.mubr.bf16.mxu0 0
        %3237 = vmatmul.mubr.bf16.gmra.mrb[0].mxu0 %v3024
        %v3238 = vpop.f32.mrb[0].mxu0
        %v3239 = vadd.f32 %v3050, %v3238
        %v3240 = vpop.f32.mrb[0].mxu0
        %v3241 = vpop.f32.mrb[0].mxu0
        %v3242 = vadd.f32 %v3050, %v3241
        %v3243 = vpop.f32.mrb[0].mxu0
        %3244 = vmatprep.mubr.bf16.mxu0 0
        %3245 = vmatmul.mubr.bf16.gmra.mrb[0].mxu0 %v3025
        %v3246 = vpop.f32.mrb[0].mxu0
        %v3247 = vadd.f32 %v3050, %v3246
        %v3248 = vpop.f32.mrb[0].mxu0
        %v3249 = vpop.f32.mrb[0].mxu0
        %v3250 = vadd.f32 %v3050, %v3249
        %v3251 = vpop.f32.mrb[0].mxu0
        %3252 = vmatprep.mubr.bf16.mxu0 0
        %3253 = vmatmul.mubr.bf16.gmra.mrb[0].mxu0 %v3026
        %v3254 = vpop.f32.mrb[0].mxu0
        %v3255 = vadd.f32 %v3050, %v3254
        %v3256 = vpop.f32.mrb[0].mxu0
        %v3257 = vpop.f32.mrb[0].mxu0
        %v3258 = vadd.f32 %v3050, %v3257
        %v3259 = vpop.f32.mrb[0].mxu0
        %3260 = vdwg.mxu0
        %v3261 = vmax.f32 %v3135, 0.0
        %v3262 = vmax.f32 %v3138, 0.0
        %v3263 = vmax.f32 %v3143, 0.0
        %v3264 = vmax.f32 %v3146, 0.0
        %v3265 = vmax.f32 %v3151, 0.0
        %v3266 = vmax.f32 %v3154, 0.0
        %v3267 = vmax.f32 %v3159, 0.0
        %v3268 = vmax.f32 %v3162, 0.0
        %v3269 = vmax.f32 %v3167, 0.0
        %v3270 = vmax.f32 %v3170, 0.0
        %v3271 = vmax.f32 %v3175, 0.0
        %v3272 = vmax.f32 %v3178, 0.0
        %v3273 = vmax.f32 %v3183, 0.0
        %v3274 = vmax.f32 %v3186, 0.0
        %v3275 = vmax.f32 %v3191, 0.0
        %v3276 = vmax.f32 %v3194, 0.0
        %v3277 = vmax.f32 %v3199, 0.0
        %v3278 = vmax.f32 %v3202, 0.0
        %v3279 = vmax.f32 %v3207, 0.0
        %v3280 = vmax.f32 %v3210, 0.0
        %v3281 = vmax.f32 %v3215, 0.0
        %v3282 = vmax.f32 %v3218, 0.0
        %v3283 = vmax.f32 %v3223, 0.0
        %v3284 = vmax.f32 %v3226, 0.0
        %v3285 = vmax.f32 %v3231, 0.0
        %v3286 = vmax.f32 %v3234, 0.0
        %v3287 = vmax.f32 %v3239, 0.0
        %v3288 = vmax.f32 %v3242, 0.0
        %v3289 = vmax.f32 %v3247, 0.0
        %v3290 = vmax.f32 %v3250, 0.0
        %v3291 = vmax.f32 %v3255, 0.0
        %v3292 = vmax.f32 %v3258, 0.0
        %v3293 = vpack.c.bf16 %v3262, %v3261
        %v3294 = vpack.c.bf16 %v3264, %v3263
        %v3295 = vpack.c.bf16 %v3266, %v3265
        %v3296 = vpack.c.bf16 %v3268, %v3267
        %v3297 = vpack.c.bf16 %v3270, %v3269
        %v3298 = vpack.c.bf16 %v3272, %v3271
        %v3299 = vpack.c.bf16 %v3274, %v3273
        %v3300 = vpack.c.bf16 %v3276, %v3275
        %v3301 = vpack.c.bf16 %v3278, %v3277
        %v3302 = vpack.c.bf16 %v3280, %v3279
        %v3303 = vpack.c.bf16 %v3282, %v3281
        %v3304 = vpack.c.bf16 %v3284, %v3283
        %v3305 = vpack.c.bf16 %v3286, %v3285
        %v3306 = vpack.c.bf16 %v3288, %v3287
        %v3307 = vpack.c.bf16 %v3290, %v3289
        %v3308 = vpack.c.bf16 %v3292, %v3291
        %v3309 = vld [vmem:[%s8] sm:$0x1]
        %v3310 = vld [vmem:[#allocation2] sm:$0x1]
        %3312 = vset.pattern.permute.xlu0 0
        %3313 = vperm.xlu0 %3312, %v3310
        %v3314 = vpop.permute.xlu0 %3313
        %v3316 = vlaneseq
        %v3317 = vshrl.u32 %v3316, 7
        %v3318 = vsub.s32 0, %v3317
        %v3319 = vrot.slane %v3314, %v3318
        %3320 = vmatprep.subr.bf16.mxu0 0
        %3321 = vmatpush1.bf16.xpose.msra.mxu0 %v3293
        %3322 = vmatprep.subr.bf16.mxu0 0
        %3323 = vmatpush1.bf16.xpose.msra.mxu0 %v3294
        %3324 = vmatprep.subr.bf16.mxu0 0
        %3325 = vmatpush1.bf16.xpose.msra.mxu0 %v3295
        %3326 = vmatprep.subr.bf16.mxu0 0
        %3327 = vmatpush1.bf16.xpose.msra.mxu0 %v3296
        %3328 = vmatprep.subr.bf16.mxu0 0
        %3329 = vmatpush1.bf16.xpose.msra.mxu0 %v3297
        %3330 = vmatprep.subr.bf16.mxu0 0
        %3331 = vmatpush1.bf16.xpose.msra.mxu0 %v3298
        %3332 = vmatprep.subr.bf16.mxu0 0
        %3333 = vmatpush1.bf16.xpose.msra.mxu0 %v3299
        %3334 = vmatprep.subr.bf16.mxu0 0
        %3335 = vmatpush1.bf16.xpose.msra.mxu0 %v3300
        %3336 = vmatprep.subr.bf16.mxu0 0
        %3337 = vmatpush1.bf16.xpose.msra.mxu0 %v3301
        %3338 = vmatprep.subr.bf16.mxu0 0
        %3339 = vmatpush1.bf16.xpose.msra.mxu0 %v3302
        %3340 = vmatprep.subr.bf16.mxu0 0
        %3341 = vmatpush1.bf16.xpose.msra.mxu0 %v3303
        %3342 = vmatprep.subr.bf16.mxu0 0
        %3343 = vmatpush1.bf16.xpose.msra.mxu0 %v3304
        %3344 = vmatprep.subr.bf16.mxu0 0
        %3345 = vmatpush1.bf16.xpose.msra.mxu0 %v3305
        %3346 = vmatprep.subr.bf16.mxu0 0
        %3347 = vmatpush1.bf16.xpose.msra.mxu0 %v3306
        %3348 = vmatprep.subr.bf16.mxu0 0
        %3349 = vmatpush1.bf16.xpose.msra.mxu0 %v3307
        %3350 = vmatprep.subr.bf16.mxu0 0
        %3351 = vmatpush1.bf16.xpose.msra.mxu0 %v3308
        %3352 = vmatprep.mubr.bf16.mxu0 0
        %3353 = vmatmul.mubr.bf16.gmra.mrb[0].mxu0 %v3309
        %v3354 = vpop.f32.mrb[0].mxu0
        %v3355 = vadd.f32 %v3319, %v3354
        %v3356 = vpop.f32.mrb[0].mxu0
        %v3357 = vadd.f32 %v3319, %v3356
        %v3358 = vpop.f32.mrb[0].mxu0
        %v3359 = vpop.f32.mrb[0].mxu0
        %3360 = vdwg.mxu0
        %v3363 = vcombine.low %v3355, %v3357
        %v3365 = vunpack.c.l.s4 1966171168
        %v3366 = vunpack.c.0.s8 %v3365
        %v3367 = vlaneseq
        %v3368 = vshrl.u32 %v3367, 7
        %v3369 = vsub.s32 %v3366, %v3368
        %v3370 = vrot.slane %v3363, %v3369
        %v3372 = vunpack.c.l.s4 1966171168
        %v3373 = vunpack.c.0.s8 %v3372
        %v3374 = vlaneseq
        %v3375 = vshrl.u32 %v3374, 7
        %v3376 = vsub.s32 %v3373, %v3375
        %v3377 = vrot.slane %v3370, %v3376
        %v3379 = vlaneseq
        %vm3380 = vcmp.ge.s32.totalorder %v3379, 0
        %vm3381 = vcmp.lt.s32.totalorder %v3379, 256
        %vm3382 = vmand %vm3380, %vm3381
        %3383 = vst.msk [vmem:[%s534] sm:$0x3] %vm3382, %v3377
        %v3384 = vld [vmem:[%s7] sm:$0xf]
        %v3385 = vld [vmem:[%s7 + $0x4] sm:$0xf]
        %v3386 = vld [vmem:[%s7 + $0x8] sm:$0xf]
        %v3387 = vld [vmem:[%s7 + $0xc] sm:$0xf]
        %v3388 = vld [vmem:[%s7 + $0x10] sm:$0xf]
        %v3389 = vld [vmem:[%s7 + $0x14] sm:$0xf]
        %v3390 = vld [vmem:[%s7 + $0x18] sm:$0xf]
        %v3391 = vld [vmem:[%s7 + $0x1c] sm:$0xf]
        %v3392 = vld [vmem:[%s7 + $0x20] sm:$0xf]
        %v3393 = vld [vmem:[%s7 + $0x24] sm:$0xf]
        %v3394 = vld [vmem:[%s7 + $0x28] sm:$0xf]
        %v3395 = vld [vmem:[%s7 + $0x2c] sm:$0xf]
        %v3396 = vld [vmem:[%s7 + $0x30] sm:$0xf]
        %v3397 = vld [vmem:[%s7 + $0x34] sm:$0xf]
        %v3398 = vld [vmem:[%s7 + $0x38] sm:$0xf]
        %v3399 = vld [vmem:[%s7 + $0x3c] sm:$0xf]
        %v3416 = vunpack.c.l.b16 %v3384
        %v3417 = vunpack.c.l.b16 %v3385
        %v3418 = vunpack.c.l.b16 %v3386
        %v3419 = vunpack.c.l.b16 %v3387
        %v3420 = vunpack.c.l.b16 %v3388
        %v3421 = vunpack.c.l.b16 %v3389
        %v3422 = vunpack.c.l.b16 %v3390
        %v3423 = vunpack.c.l.b16 %v3391
        %v3424 = vunpack.c.l.b16 %v3392
        %v3425 = vunpack.c.l.b16 %v3393
        %v3426 = vunpack.c.l.b16 %v3394
        %v3427 = vunpack.c.l.b16 %v3395
        %v3428 = vunpack.c.l.b16 %v3396
        %v3429 = vunpack.c.l.b16 %v3397
        %v3430 = vunpack.c.l.b16 %v3398
        %v3431 = vunpack.c.l.b16 %v3399
        %v3432 = vpack.c.b16 %v3417, %v3416
        %v3433 = vpack.c.b16 %v3419, %v3418
        %v3434 = vpack.c.b16 %v3421, %v3420
        %v3435 = vpack.c.b16 %v3423, %v3422
        %v3436 = vpack.c.b16 %v3425, %v3424
        %v3437 = vpack.c.b16 %v3427, %v3426
        %v3438 = vpack.c.b16 %v3429, %v3428
        %v3439 = vpack.c.b16 %v3431, %v3430
        %3448 = vmatprep.subr.bf16.mxu0 0
        %3449 = vmatpush1.bf16.msra.mxu0 %v3432
        %3450 = vmatprep.subr.bf16.mxu0 0
        %3451 = vmatpush1.bf16.msra.mxu0 %v3433
        %3452 = vmatprep.subr.bf16.mxu0 0
        %3453 = vmatpush1.bf16.msra.mxu0 %v3434
        %3454 = vmatprep.subr.bf16.mxu0 0
        %3455 = vmatpush1.bf16.msra.mxu0 %v3435
        %3456 = vmatprep.subr.bf16.mxu0 0
        %3457 = vmatpush1.bf16.msra.mxu0 %v3436
        %3458 = vmatprep.subr.bf16.mxu0 0
        %3459 = vmatpush1.bf16.msra.mxu0 %v3437
        %3460 = vmatprep.subr.bf16.mxu0 0
        %3461 = vmatpush1.bf16.msra.mxu0 %v3438
        %3462 = vmatprep.subr.bf16.mxu0 0
        %3463 = vmatpush1.bf16.msra.mxu0 %v3439
        %3464 = vmatprep.subr.bf16.mxu0 0
        %3465 = vmatpush1.bf16.msra.mxu0 0
        %3466 = vmatprep.subr.bf16.mxu0 0
        %3467 = vmatpush1.bf16.msra.mxu0 0
        %3468 = vmatprep.subr.bf16.mxu0 0
        %3469 = vmatpush1.bf16.msra.mxu0 0
        %3470 = vmatprep.subr.bf16.mxu0 0
        %3471 = vmatpush1.bf16.msra.mxu0 0
        %3472 = vmatprep.subr.bf16.mxu0 0
        %3473 = vmatpush1.bf16.msra.mxu0 0
        %3474 = vmatprep.subr.bf16.mxu0 0
        %3475 = vmatpush1.bf16.msra.mxu0 0
        %3476 = vmatprep.subr.bf16.mxu0 0
        %3477 = vmatpush1.bf16.msra.mxu0 0
        %3478 = vmatprep.subr.bf16.mxu0 0
        %3479 = vmatpush1.bf16.msra.mxu0 0
        %3480 = vmatprep.mubr.bf16.mxu0 0
        %3481 = vmatmul.mubr.bf16.gmra.mrb[0].mxu0 %v3293
        %v3482 = vpop.f32.mrb[0].mxu0
        %v3483 = vadd.f32 %v1053, %v3482
        %v3484 = vpop.f32.mrb[0].mxu0
        %v3485 = vpop.f32.mrb[0].mxu0
        %v3486 = vadd.f32 %v1056, %v3485
        %v3487 = vpop.f32.mrb[0].mxu0
        %3488 = vmatprep.mubr.bf16.mxu0 0
        %3489 = vmatmul.mubr.bf16.gmra.mrb[0].mxu0 %v3294
        %v3490 = vpop.f32.mrb[0].mxu0
        %v3491 = vadd.f32 %v1061, %v3490
        %v3492 = vpop.f32.mrb[0].mxu0
        %v3493 = vpop.f32.mrb[0].mxu0
        %v3494 = vadd.f32 %v1064, %v3493
        %v3495 = vpop.f32.mrb[0].mxu0
        %3496 = vmatprep.mubr.bf16.mxu0 0
        %3497 = vmatmul.mubr.bf16.gmra.mrb[0].mxu0 %v3295
        %v3498 = vpop.f32.mrb[0].mxu0
        %v3499 = vadd.f32 %v1069, %v3498
        %v3500 = vpop.f32.mrb[0].mxu0
        %v3501 = vpop.f32.mrb[0].mxu0
        %v3502 = vadd.f32 %v1072, %v3501
        %v3503 = vpop.f32.mrb[0].mxu0
        %3504 = vmatprep.mubr.bf16.mxu0 0
        %3505 = vmatmul.mubr.bf16.gmra.mrb[0].mxu0 %v3296
        %v3506 = vpop.f32.mrb[0].mxu0
        %v3507 = vadd.f32 %v1077, %v3506
        %v3508 = vpop.f32.mrb[0].mxu0
        %v3509 = vpop.f32.mrb[0].mxu0
        %v3510 = vadd.f32 %v1080, %v3509
        %v3511 = vpop.f32.mrb[0].mxu0
        %3512 = vmatprep.mubr.bf16.mxu0 0
        %3513 = vmatmul.mubr.bf16.gmra.mrb[0].mxu0 %v3297
        %v3514 = vpop.f32.mrb[0].mxu0
        %v3515 = vadd.f32 %v1085, %v3514
        %v3516 = vpop.f32.mrb[0].mxu0
        %v3517 = vpop.f32.mrb[0].mxu0
        %v3518 = vadd.f32 %v1088, %v3517
        %v3519 = vpop.f32.mrb[0].mxu0
        %3520 = vmatprep.mubr.bf16.mxu0 0
        %3521 = vmatmul.mubr.bf16.gmra.mrb[0].mxu0 %v3298
        %v3522 = vpop.f32.mrb[0].mxu0
        %v3523 = vadd.f32 %v1093, %v3522
        %v3524 = vpop.f32.mrb[0].mxu0
        %v3525 = vpop.f32.mrb[0].mxu0
        %v3526 = vadd.f32 %v1096, %v3525
        %v3527 = vpop.f32.mrb[0].mxu0
        %3528 = vmatprep.mubr.bf16.mxu0 0
        %3529 = vmatmul.mubr.bf16.gmra.mrb[0].mxu0 %v3299
        %v3530 = vpop.f32.mrb[0].mxu0
        %v3531 = vadd.f32 %v1101, %v3530
        %v3532 = vpop.f32.mrb[0].mxu0
        %v3533 = vpop.f32.mrb[0].mxu0
        %v3534 = vadd.f32 %v1104, %v3533
        %v3535 = vpop.f32.mrb[0].mxu0
        %3536 = vmatprep.mubr.bf16.mxu0 0
        %3537 = vmatmul.mubr.bf16.gmra.mrb[0].mxu0 %v3300
        %v3538 = vpop.f32.mrb[0].mxu0
        %v3539 = vadd.f32 %v1109, %v3538
        %v3540 = vpop.f32.mrb[0].mxu0
        %v3541 = vpop.f32.mrb[0].mxu0
        %v3542 = vadd.f32 %v1112, %v3541
        %v3543 = vpop.f32.mrb[0].mxu0
        %3544 = vmatprep.mubr.bf16.mxu0 0
        %3545 = vmatmul.mubr.bf16.gmra.mrb[0].mxu0 %v3301
        %v3546 = vpop.f32.mrb[0].mxu0
        %v3547 = vadd.f32 %v1117, %v3546
        %v3548 = vpop.f32.mrb[0].mxu0
        %v3549 = vpop.f32.mrb[0].mxu0
        %v3550 = vadd.f32 %v1120, %v3549
        %v3551 = vpop.f32.mrb[0].mxu0
        %3552 = vmatprep.mubr.bf16.mxu0 0
        %3553 = vmatmul.mubr.bf16.gmra.mrb[0].mxu0 %v3302
        %v3554 = vpop.f32.mrb[0].mxu0
        %v3555 = vadd.f32 %v1125, %v3554
        %v3556 = vpop.f32.mrb[0].mxu0
        %v3557 = vpop.f32.mrb[0].mxu0
        %v3558 = vadd.f32 %v1128, %v3557
        %v3559 = vpop.f32.mrb[0].mxu0
        %3560 = vmatprep.mubr.bf16.mxu0 0
        %3561 = vmatmul.mubr.bf16.gmra.mrb[0].mxu0 %v3303
        %v3562 = vpop.f32.mrb[0].mxu0
        %v3563 = vadd.f32 %v1133, %v3562
        %v3564 = vpop.f32.mrb[0].mxu0
        %v3565 = vpop.f32.mrb[0].mxu0
        %v3566 = vadd.f32 %v1136, %v3565
        %v3567 = vpop.f32.mrb[0].mxu0
        %3568 = vmatprep.mubr.bf16.mxu0 0
        %3569 = vmatmul.mubr.bf16.gmra.mrb[0].mxu0 %v3304
        %v3570 = vpop.f32.mrb[0].mxu0
        %v3571 = vadd.f32 %v1141, %v3570
        %v3572 = vpop.f32.mrb[0].mxu0
        %v3573 = vpop.f32.mrb[0].mxu0
        %v3574 = vadd.f32 %v1144, %v3573
        %v3575 = vpop.f32.mrb[0].mxu0
        %3576 = vmatprep.mubr.bf16.mxu0 0
        %3577 = vmatmul.mubr.bf16.gmra.mrb[0].mxu0 %v3305
        %v3578 = vpop.f32.mrb[0].mxu0
        %v3579 = vadd.f32 %v1149, %v3578
        %v3580 = vpop.f32.mrb[0].mxu0
        %v3581 = vpop.f32.mrb[0].mxu0
        %v3582 = vadd.f32 %v1152, %v3581
        %v3583 = vpop.f32.mrb[0].mxu0
        %3584 = vmatprep.mubr.bf16.mxu0 0
        %3585 = vmatmul.mubr.bf16.gmra.mrb[0].mxu0 %v3306
        %v3586 = vpop.f32.mrb[0].mxu0
        %v3587 = vadd.f32 %v1157, %v3586
        %v3588 = vpop.f32.mrb[0].mxu0
        %v3589 = vpop.f32.mrb[0].mxu0
        %v3590 = vadd.f32 %v1160, %v3589
        %v3591 = vpop.f32.mrb[0].mxu0
        %3592 = vmatprep.mubr.bf16.mxu0 0
        %3593 = vmatmul.mubr.bf16.gmra.mrb[0].mxu0 %v3307
        %v3594 = vpop.f32.mrb[0].mxu0
        %v3595 = vadd.f32 %v1165, %v3594
        %v3596 = vpop.f32.mrb[0].mxu0
        %v3597 = vpop.f32.mrb[0].mxu0
        %v3598 = vadd.f32 %v1168, %v3597
        %v3599 = vpop.f32.mrb[0].mxu0
        %3600 = vmatprep.mubr.bf16.mxu0 0
        %3601 = vmatmul.mubr.bf16.gmra.mrb[0].mxu0 %v3308
        %v3602 = vpop.f32.mrb[0].mxu0
        %v3603 = vadd.f32 %v1173, %v3602
        %v3604 = vpop.f32.mrb[0].mxu0
        %v3605 = vpop.f32.mrb[0].mxu0
        %v3606 = vadd.f32 %v1176, %v3605
        %v3607 = vpop.f32.mrb[0].mxu0
        %3608 = vdwg.mxu0
        %v3609 = vld [vmem:[%s525] sm:$0x1]
        %v3611 = vlaneseq
        %v3612 = vshrl.u32 %v3611, 7
        %v3613 = vsub.s32 0, %v3612
        %v3614 = vrot.slane %v3609, %v3613
        %v3616 = vadd.f32 %v3483, %v3614
        %v3617 = vadd.f32 %v3486, %v3614
        %v3618 = vadd.f32 %v3491, %v3614
        %v3619 = vadd.f32 %v3494, %v3614
        %v3620 = vadd.f32 %v3499, %v3614
        %v3621 = vadd.f32 %v3502, %v3614
        %v3622 = vadd.f32 %v3507, %v3614
        %v3623 = vadd.f32 %v3510, %v3614
        %v3624 = vadd.f32 %v3515, %v3614
        %v3625 = vadd.f32 %v3518, %v3614
        %v3626 = vadd.f32 %v3523, %v3614
        %v3627 = vadd.f32 %v3526, %v3614
        %v3628 = vadd.f32 %v3531, %v3614
        %v3629 = vadd.f32 %v3534, %v3614
        %v3630 = vadd.f32 %v3539, %v3614
        %v3631 = vadd.f32 %v3542, %v3614
        %v3632 = vadd.f32 %v3547, %v3614
        %v3633 = vadd.f32 %v3550, %v3614
        %v3634 = vadd.f32 %v3555, %v3614
        %v3635 = vadd.f32 %v3558, %v3614
        %v3636 = vadd.f32 %v3563, %v3614
        %v3637 = vadd.f32 %v3566, %v3614
        %v3638 = vadd.f32 %v3571, %v3614
        %v3639 = vadd.f32 %v3574, %v3614
        %v3640 = vadd.f32 %v3579, %v3614
        %v3641 = vadd.f32 %v3582, %v3614
        %v3642 = vadd.f32 %v3587, %v3614
        %v3643 = vadd.f32 %v3590, %v3614
        %v3644 = vadd.f32 %v3595, %v3614
        %v3645 = vadd.f32 %v3598, %v3614
        %v3646 = vadd.f32 %v3603, %v3614
        %v3647 = vadd.f32 %v3606, %v3614
        %v3648 = vmax.f32 %v3616, 0.0
        %v3649 = vmax.f32 %v3617, 0.0
        %v3650 = vmax.f32 %v3618, 0.0
        %v3651 = vmax.f32 %v3619, 0.0
        %v3652 = vmax.f32 %v3620, 0.0
        %v3653 = vmax.f32 %v3621, 0.0
        %v3654 = vmax.f32 %v3622, 0.0
        %v3655 = vmax.f32 %v3623, 0.0
        %v3656 = vmax.f32 %v3624, 0.0
        %v3657 = vmax.f32 %v3625, 0.0
        %v3658 = vmax.f32 %v3626, 0.0
        %v3659 = vmax.f32 %v3627, 0.0
        %v3660 = vmax.f32 %v3628, 0.0
        %v3661 = vmax.f32 %v3629, 0.0
        %v3662 = vmax.f32 %v3630, 0.0
        %v3663 = vmax.f32 %v3631, 0.0
        %v3664 = vmax.f32 %v3632, 0.0
        %v3665 = vmax.f32 %v3633, 0.0
        %v3666 = vmax.f32 %v3634, 0.0
        %v3667 = vmax.f32 %v3635, 0.0
        %v3668 = vmax.f32 %v3636, 0.0
        %v3669 = vmax.f32 %v3637, 0.0
        %v3670 = vmax.f32 %v3638, 0.0
        %v3671 = vmax.f32 %v3639, 0.0
        %v3672 = vmax.f32 %v3640, 0.0
        %v3673 = vmax.f32 %v3641, 0.0
        %v3674 = vmax.f32 %v3642, 0.0
        %v3675 = vmax.f32 %v3643, 0.0
        %v3676 = vmax.f32 %v3644, 0.0
        %v3677 = vmax.f32 %v3645, 0.0
        %v3678 = vmax.f32 %v3646, 0.0
        %v3679 = vmax.f32 %v3647, 0.0
        %v3680 = vpack.c.bf16 %v3649, %v3648
        %v3681 = vpack.c.bf16 %v3651, %v3650
        %v3682 = vpack.c.bf16 %v3653, %v3652
        %v3683 = vpack.c.bf16 %v3655, %v3654
        %v3684 = vpack.c.bf16 %v3657, %v3656
        %v3685 = vpack.c.bf16 %v3659, %v3658
        %v3686 = vpack.c.bf16 %v3661, %v3660
        %v3687 = vpack.c.bf16 %v3663, %v3662
        %v3688 = vpack.c.bf16 %v3665, %v3664
        %v3689 = vpack.c.bf16 %v3667, %v3666
        %v3690 = vpack.c.bf16 %v3669, %v3668
        %v3691 = vpack.c.bf16 %v3671, %v3670
        %v3692 = vpack.c.bf16 %v3673, %v3672
        %v3693 = vpack.c.bf16 %v3675, %v3674
        %v3694 = vpack.c.bf16 %v3677, %v3676
        %v3695 = vpack.c.bf16 %v3679, %v3678
        %v3696 = vld [vmem:[%s10] sm:$0xf]
        %v3697 = vld [vmem:[%s10 + $0x4] sm:$0xf]
        %v3698 = vld [vmem:[%s10 + $0x8] sm:$0xf]
        %v3699 = vld [vmem:[%s10 + $0xc] sm:$0xf]
        %v3700 = vld [vmem:[%s10 + $0x10] sm:$0xf]
        %v3701 = vld [vmem:[%s10 + $0x14] sm:$0xf]
        %v3702 = vld [vmem:[%s10 + $0x18] sm:$0xf]
        %v3703 = vld [vmem:[%s10 + $0x1c] sm:$0xf]
        %v3704 = vld [vmem:[%s10 + $0x20] sm:$0xf]
        %v3705 = vld [vmem:[%s10 + $0x24] sm:$0xf]
        %v3706 = vld [vmem:[%s10 + $0x28] sm:$0xf]
        %v3707 = vld [vmem:[%s10 + $0x2c] sm:$0xf]
        %v3708 = vld [vmem:[%s10 + $0x30] sm:$0xf]
        %v3709 = vld [vmem:[%s10 + $0x34] sm:$0xf]
        %v3710 = vld [vmem:[%s10 + $0x38] sm:$0xf]
        %v3711 = vld [vmem:[%s10 + $0x3c] sm:$0xf]
        %v3712 = vld [vmem:[%s11] sm:$0x1]
        %v3714 = vlaneseq
        %v3715 = vshrl.u32 %v3714, 7
        %v3716 = vsub.s32 0, %v3715
        %v3717 = vrot.slane %v3712, %v3716
        %v3735 = vunpack.c.l.b16 %v3696
        %v3736 = vunpack.c.l.b16 %v3697
        %v3737 = vunpack.c.l.b16 %v3698
        %v3738 = vunpack.c.l.b16 %v3699
        %v3739 = vunpack.c.l.b16 %v3700
        %v3740 = vunpack.c.l.b16 %v3701
        %v3741 = vunpack.c.l.b16 %v3702
        %v3742 = vunpack.c.l.b16 %v3703
        %v3743 = vunpack.c.l.b16 %v3704
        %v3744 = vunpack.c.l.b16 %v3705
        %v3745 = vunpack.c.l.b16 %v3706
        %v3746 = vunpack.c.l.b16 %v3707
        %v3747 = vunpack.c.l.b16 %v3708
        %v3748 = vunpack.c.l.b16 %v3709
        %v3749 = vunpack.c.l.b16 %v3710
        %v3750 = vunpack.c.l.b16 %v3711
        %v3751 = vpack.c.b16 %v3736, %v3735
        %v3752 = vpack.c.b16 %v3738, %v3737
        %v3753 = vpack.c.b16 %v3740, %v3739
        %v3754 = vpack.c.b16 %v3742, %v3741
        %v3755 = vpack.c.b16 %v3744, %v3743
        %v3756 = vpack.c.b16 %v3746, %v3745
        %v3757 = vpack.c.b16 %v3748, %v3747
        %v3758 = vpack.c.b16 %v3750, %v3749
        %3767 = vmatprep.subr.bf16.mxu0 0
        %3768 = vmatpush1.bf16.msra.mxu0 %v3751
        %3769 = vmatprep.subr.bf16.mxu0 0
        %3770 = vmatpush1.bf16.msra.mxu0 %v3752
        %3771 = vmatprep.subr.bf16.mxu0 0
        %3772 = vmatpush1.bf16.msra.mxu0 %v3753
        %3773 = vmatprep.subr.bf16.mxu0 0
        %3774 = vmatpush1.bf16.msra.mxu0 %v3754
        %3775 = vmatprep.subr.bf16.mxu0 0
        %3776 = vmatpush1.bf16.msra.mxu0 %v3755
        %3777 = vmatprep.subr.bf16.mxu0 0
        %3778 = vmatpush1.bf16.msra.mxu0 %v3756
        %3779 = vmatprep.subr.bf16.mxu0 0
        %3780 = vmatpush1.bf16.msra.mxu0 %v3757
        %3781 = vmatprep.subr.bf16.mxu0 0
        %3782 = vmatpush1.bf16.msra.mxu0 %v3758
        %3783 = vmatprep.subr.bf16.mxu0 0
        %3784 = vmatpush1.bf16.msra.mxu0 0
        %3785 = vmatprep.subr.bf16.mxu0 0
        %3786 = vmatpush1.bf16.msra.mxu0 0
        %3787 = vmatprep.subr.bf16.mxu0 0
        %3788 = vmatpush1.bf16.msra.mxu0 0
        %3789 = vmatprep.subr.bf16.mxu0 0
        %3790 = vmatpush1.bf16.msra.mxu0 0
        %3791 = vmatprep.subr.bf16.mxu0 0
        %3792 = vmatpush1.bf16.msra.mxu0 0
        %3793 = vmatprep.subr.bf16.mxu0 0
        %3794 = vmatpush1.bf16.msra.mxu0 0
        %3795 = vmatprep.subr.bf16.mxu0 0
        %3796 = vmatpush1.bf16.msra.mxu0 0
        %3797 = vmatprep.subr.bf16.mxu0 0
        %3798 = vmatpush1.bf16.msra.mxu0 0
        %3799 = vmatprep.mubr.bf16.mxu0 0
        %3800 = vmatmul.mubr.bf16.gmra.mrb[0].mxu0 %v3680
        %v3801 = vpop.f32.mrb[0].mxu0
        %v3802 = vadd.f32 %v3717, %v3801
        %v3803 = vpop.f32.mrb[0].mxu0
        %v3804 = vpop.f32.mrb[0].mxu0
        %v3805 = vadd.f32 %v3717, %v3804
        %v3806 = vpop.f32.mrb[0].mxu0
        %3807 = vmatprep.mubr.bf16.mxu0 0
        %3808 = vmatmul.mubr.bf16.gmra.mrb[0].mxu0 %v3681
        %v3809 = vpop.f32.mrb[0].mxu0
        %v3810 = vadd.f32 %v3717, %v3809
        %v3811 = vpop.f32.mrb[0].mxu0
        %v3812 = vpop.f32.mrb[0].mxu0
        %v3813 = vadd.f32 %v3717, %v3812
        %v3814 = vpop.f32.mrb[0].mxu0
        %3815 = vmatprep.mubr.bf16.mxu0 0
        %3816 = vmatmul.mubr.bf16.gmra.mrb[0].mxu0 %v3682
        %v3817 = vpop.f32.mrb[0].mxu0
        %v3818 = vadd.f32 %v3717, %v3817
        %v3819 = vpop.f32.mrb[0].mxu0
        %v3820 = vpop.f32.mrb[0].mxu0
        %v3821 = vadd.f32 %v3717, %v3820
        %v3822 = vpop.f32.mrb[0].mxu0
        %3823 = vmatprep.mubr.bf16.mxu0 0
        %3824 = vmatmul.mubr.bf16.gmra.mrb[0].mxu0 %v3683
        %v3825 = vpop.f32.mrb[0].mxu0
        %v3826 = vadd.f32 %v3717, %v3825
        %v3827 = vpop.f32.mrb[0].mxu0
        %v3828 = vpop.f32.mrb[0].mxu0
        %v3829 = vadd.f32 %v3717, %v3828
        %v3830 = vpop.f32.mrb[0].mxu0
        %3831 = vmatprep.mubr.bf16.mxu0 0
        %3832 = vmatmul.mubr.bf16.gmra.mrb[0].mxu0 %v3684
        %v3833 = vpop.f32.mrb[0].mxu0
        %v3834 = vadd.f32 %v3717, %v3833
        %v3835 = vpop.f32.mrb[0].mxu0
        %v3836 = vpop.f32.mrb[0].mxu0
        %v3837 = vadd.f32 %v3717, %v3836
        %v3838 = vpop.f32.mrb[0].mxu0
        %3839 = vmatprep.mubr.bf16.mxu0 0
        %3840 = vmatmul.mubr.bf16.gmra.mrb[0].mxu0 %v3685
        %v3841 = vpop.f32.mrb[0].mxu0
        %v3842 = vadd.f32 %v3717, %v3841
        %v3843 = vpop.f32.mrb[0].mxu0
        %v3844 = vpop.f32.mrb[0].mxu0
        %v3845 = vadd.f32 %v3717, %v3844
        %v3846 = vpop.f32.mrb[0].mxu0
        %3847 = vmatprep.mubr.bf16.mxu0 0
        %3848 = vmatmul.mubr.bf16.gmra.mrb[0].mxu0 %v3686
        %v3849 = vpop.f32.mrb[0].mxu0
        %v3850 = vadd.f32 %v3717, %v3849
        %v3851 = vpop.f32.mrb[0].mxu0
        %v3852 = vpop.f32.mrb[0].mxu0
        %v3853 = vadd.f32 %v3717, %v3852
        %v3854 = vpop.f32.mrb[0].mxu0
        %3855 = vmatprep.mubr.bf16.mxu0 0
        %3856 = vmatmul.mubr.bf16.gmra.mrb[0].mxu0 %v3687
        %v3857 = vpop.f32.mrb[0].mxu0
        %v3858 = vadd.f32 %v3717, %v3857
        %v3859 = vpop.f32.mrb[0].mxu0
        %v3860 = vpop.f32.mrb[0].mxu0
        %v3861 = vadd.f32 %v3717, %v3860
        %v3862 = vpop.f32.mrb[0].mxu0
        %3863 = vmatprep.mubr.bf16.mxu0 0
        %3864 = vmatmul.mubr.bf16.gmra.mrb[0].mxu0 %v3688
        %v3865 = vpop.f32.mrb[0].mxu0
        %v3866 = vadd.f32 %v3717, %v3865
        %v3867 = vpop.f32.mrb[0].mxu0
        %v3868 = vpop.f32.mrb[0].mxu0
        %v3869 = vadd.f32 %v3717, %v3868
        %v3870 = vpop.f32.mrb[0].mxu0
        %3871 = vmatprep.mubr.bf16.mxu0 0
        %3872 = vmatmul.mubr.bf16.gmra.mrb[0].mxu0 %v3689
        %v3873 = vpop.f32.mrb[0].mxu0
        %v3874 = vadd.f32 %v3717, %v3873
        %v3875 = vpop.f32.mrb[0].mxu0
        %v3876 = vpop.f32.mrb[0].mxu0
        %v3877 = vadd.f32 %v3717, %v3876
        %v3878 = vpop.f32.mrb[0].mxu0
        %3879 = vmatprep.mubr.bf16.mxu0 0
        %3880 = vmatmul.mubr.bf16.gmra.mrb[0].mxu0 %v3690
        %v3881 = vpop.f32.mrb[0].mxu0
        %v3882 = vadd.f32 %v3717, %v3881
        %v3883 = vpop.f32.mrb[0].mxu0
        %v3884 = vpop.f32.mrb[0].mxu0
        %v3885 = vadd.f32 %v3717, %v3884
        %v3886 = vpop.f32.mrb[0].mxu0
        %3887 = vmatprep.mubr.bf16.mxu0 0
        %3888 = vmatmul.mubr.bf16.gmra.mrb[0].mxu0 %v3691
        %v3889 = vpop.f32.mrb[0].mxu0
        %v3890 = vadd.f32 %v3717, %v3889
        %v3891 = vpop.f32.mrb[0].mxu0
        %v3892 = vpop.f32.mrb[0].mxu0
        %v3893 = vadd.f32 %v3717, %v3892
        %v3894 = vpop.f32.mrb[0].mxu0
        %3895 = vmatprep.mubr.bf16.mxu0 0
        %3896 = vmatmul.mubr.bf16.gmra.mrb[0].mxu0 %v3692
        %v3897 = vpop.f32.mrb[0].mxu0
        %v3898 = vadd.f32 %v3717, %v3897
        %v3899 = vpop.f32.mrb[0].mxu0
        %v3900 = vpop.f32.mrb[0].mxu0
        %v3901 = vadd.f32 %v3717, %v3900
        %v3902 = vpop.f32.mrb[0].mxu0
        %3903 = vmatprep.mubr.bf16.mxu0 0
        %3904 = vmatmul.mubr.bf16.gmra.mrb[0].mxu0 %v3693
        %v3905 = vpop.f32.mrb[0].mxu0
        %v3906 = vadd.f32 %v3717, %v3905
        %v3907 = vpop.f32.mrb[0].mxu0
        %v3908 = vpop.f32.mrb[0].mxu0
        %v3909 = vadd.f32 %v3717, %v3908
        %v3910 = vpop.f32.mrb[0].mxu0
        %3911 = vmatprep.mubr.bf16.mxu0 0
        %3912 = vmatmul.mubr.bf16.gmra.mrb[0].mxu0 %v3694
        %v3913 = vpop.f32.mrb[0].mxu0
        %v3914 = vadd.f32 %v3717, %v3913
        %v3915 = vpop.f32.mrb[0].mxu0
        %v3916 = vpop.f32.mrb[0].mxu0
        %v3917 = vadd.f32 %v3717, %v3916
        %v3918 = vpop.f32.mrb[0].mxu0
        %3919 = vmatprep.mubr.bf16.mxu0 0
        %3920 = vmatmul.mubr.bf16.gmra.mrb[0].mxu0 %v3695
        %v3921 = vpop.f32.mrb[0].mxu0
        %v3922 = vadd.f32 %v3717, %v3921
        %v3923 = vpop.f32.mrb[0].mxu0
        %v3924 = vpop.f32.mrb[0].mxu0
        %v3925 = vadd.f32 %v3717, %v3924
        %v3926 = vpop.f32.mrb[0].mxu0
        %3927 = vdwg.mxu0
        %3928 = vst [vmem:[%s496] sm:$0xff] %v3802
        %3929 = vst [vmem:[%s496 + $0x8] sm:$0xff] %v3805
        %3930 = vst [vmem:[%s496 + $0x10] sm:$0xff] %v3810
        %3931 = vst [vmem:[%s496 + $0x18] sm:$0xff] %v3813
        %3932 = vst [vmem:[%s496 + $0x20] sm:$0xff] %v3818
        %3933 = vst [vmem:[%s496 + $0x28] sm:$0xff] %v3821
        %3934 = vst [vmem:[%s496 + $0x30] sm:$0xff] %v3826
        %3935 = vst [vmem:[%s496 + $0x38] sm:$0xff] %v3829
        %3936 = vst [vmem:[%s496 + $0x40] sm:$0xff] %v3834
        %3937 = vst [vmem:[%s496 + $0x48] sm:$0xff] %v3837
        %3938 = vst [vmem:[%s496 + $0x50] sm:$0xff] %v3842
        %3939 = vst [vmem:[%s496 + $0x58] sm:$0xff] %v3845
        %3940 = vst [vmem:[%s496 + $0x60] sm:$0xff] %v3850
        %3941 = vst [vmem:[%s496 + $0x68] sm:$0xff] %v3853
        %3942 = vst [vmem:[%s496 + $0x70] sm:$0xff] %v3858
        %3943 = vst [vmem:[%s496 + $0x78] sm:$0xff] %v3861
        %3944 = vst [vmem:[%s496 + $0x80] sm:$0xff] %v3866
        %3945 = vst [vmem:[%s496 + $0x88] sm:$0xff] %v3869
        %3946 = vst [vmem:[%s496 + $0x90] sm:$0xff] %v3874
        %3947 = vst [vmem:[%s496 + $0x98] sm:$0xff] %v3877
        %3948 = vst [vmem:[%s496 + $0xa0] sm:$0xff] %v3882
        %3949 = vst [vmem:[%s496 + $0xa8] sm:$0xff] %v3885
        %3950 = vst [vmem:[%s496 + $0xb0] sm:$0xff] %v3890
        %3951 = vst [vmem:[%s496 + $0xb8] sm:$0xff] %v3893
        %3952 = vst [vmem:[%s496 + $0xc0] sm:$0xff] %v3898
        %3953 = vst [vmem:[%s496 + $0xc8] sm:$0xff] %v3901
        %3954 = vst [vmem:[%s496 + $0xd0] sm:$0xff] %v3906
        %3955 = vst [vmem:[%s496 + $0xd8] sm:$0xff] %v3909
        %3956 = vst [vmem:[%s496 + $0xe0] sm:$0xff] %v3914
        %3957 = vst [vmem:[%s496 + $0xe8] sm:$0xff] %v3917
        %3958 = vst [vmem:[%s496 + $0xf0] sm:$0xff] %v3922
        %3959 = vst [vmem:[%s496 + $0xf8] sm:$0xff] %v3925
        %s3960 = sand.u32 %s326, 1
        %s3961 = scalar_lea.sflag [#allocation4], %s3960
        %s3962 = sand.u32 %s326, 1
        %s3963 = smul.addr %s3962, 256
        %s3964 = scalar_lea.vmem [#allocation3], %s3963
        %s3965 = smul.u32 2, %s35
        %p3966 = scmp.lt.s32.totalorder %s34, 1
        %s3967 = scalar_select %p3966, %s34, 1
        %p3968 = scmp.lt.s32.totalorder %s3965, 3
        %s3969 = scalar_select %p3968, %s3965, 3
        %s3970 = smul.addr %s3967, 4
        %s3971 = sadd.s32 %s3969, %s3970
        %s3972 = scalar_lea.vmem %s13, %s3971
        // Predicated region
        $region69: #{decoder_forward.1} parent=67 // pred_check
          %p3973 = pneg %p336
        $region70: #{decoder_forward.1} parent=67 // pred_check_branch
          %3975 = sbr.rel (%p3973) target = $region72
        $region71: #{decoder_forward.1} parent=67 // pred_region
          %s3976 = smul.u32 32, %s35
          %s3978 = ssub.s32 4096, 4096
          %3979 = vsyncadd %s3961, %s3978
          %s3980 = smul.addr %s34, 64
          %s3981 = sadd.s32 %s3976, %s3980
          %s3982 = smul.addr %s3981, 128
          %s3983 = scalar_lea.hbm %s12, %s3982
          %s3984 = sshll.u32 %s3964, 4
          %s3985 = int_to_ptr.vmem [resolvable:$true] %s3984
          %3990 = dma.vmem_to_hbm [thread:$0]  %s3985, 4096, %s3983, %s3961, 128, 128, 8
        $region72: #{decoder_forward.1} parent=67 // pred_fallthru
          _
        // Predicated region
        $region73: #{decoder_forward.1} parent=67 // pred_check
          %p3991 = pneg %p364
        $region74: #{decoder_forward.1} parent=67 // pred_check_branch
          %3993 = sbr.rel (%p3991) target = $region76
        $region75: #{decoder_forward.1} parent=67 // pred_region
          %s3994 = smul.u32 2, %s35
        $region76: #{decoder_forward.1} parent=67 // pred_fallthru
          _
      $region68: #{decoder_forward.1} parent=5 // pred_fallthru
        _
      %p3995 = scmp.le.s32.totalorder 2, %s25
      // Predicated region
      $region77: #{decoder_forward.1} parent=5 // pred_check
        %p3996 = pneg %p3995
      $region78: #{decoder_forward.1} parent=5 // pred_check_branch
        %3998 = sbr.rel (%p3996) target = $region80
      $region79: #{decoder_forward.1} parent=5 // pred_region
        %s3999 = ssub.s32 %s25, 2
        // Predicated region
        $region81: #{decoder_forward.1} parent=79 // pred_check
          %p4000 = pneg %p342
        $region82: #{decoder_forward.1} parent=79 // pred_check_branch
          %4002 = sbr.rel (%p4000) target = $region84
        $region83: #{decoder_forward.1} parent=79 // pred_region
          %s4003 = sand.u32 %s327, 1
          %s4004 = scalar_lea.sflag [#allocation4], %s4003
          %s4005 = sand.u32 %s327, 1
          %s4006 = smul.addr %s4005, 256
          %s4007 = scalar_lea.vmem [#allocation3], %s4006
          %4008 = dma.done %s4004, 4096
        $region84: #{decoder_forward.1} parent=79 // pred_fallthru
          _
        // Predicated region
        $region85: #{decoder_forward.1} parent=79 // pred_check
          %p4009 = pneg %p370
        $region86: #{decoder_forward.1} parent=79 // pred_check_branch
          %4011 = sbr.rel (%p4009) target = $region88
        $region87: #{decoder_forward.1} parent=79 // pred_region
          %s4012 = smul.u32 2, %s37
          %p4013 = scmp.lt.s32.totalorder %s36, 1
          %s4014 = scalar_select %p4013, %s36, 1
          %p4015 = scmp.lt.s32.totalorder %s4012, 3
          %s4016 = scalar_select %p4015, %s4012, 3
          %s4017 = smul.addr %s4014, 4
          %s4018 = sadd.s32 %s4016, %s4017
          %s4019 = scalar_lea.vmem %s13, %s4018
        $region88: #{decoder_forward.1} parent=79 // pred_fallthru
          _
      $region80: #{decoder_forward.1} parent=5 // pred_fallthru
        _
    $region6: #{decoder_forward.1} parent=1 // loop_footer
      %s29 = sadd.s32 1, %s25
    $region7: #{decoder_forward.1} parent=1 // loop_footer_branch
      %24 = sbr.rel target = $region3
    $region8: #{decoder_forward.1} parent=1 // loop_exit
      _
    %4020 = vsyncpa [#allocation4], 1
    %s4021 = scalar_lea.sflag [#allocation4], 1
    %4022 = vsyncpa %s4021, 1

</llo_original>
